<compile_context>
chip_gen: v7x
topology: tpu7x:2x2x1
jax: 0.10.0
libtpu: 0.0.40
codegen_flags: <defaults>
</compile_context>

<pallas_src>
import functools

import jax
import jax.numpy as jnp
from jax import lax
from jax.experimental import pallas as pl
from jax.experimental.pallas import tpu as pltpu


# ----------------------------- Pallas kernels ------------------------------


def _instance_norm_transpose_kernel(x_ref, o_ref):
    # x: (N, D, T); InstanceNorm1d over T per (sample, channel), eps=1e-5, no affine.
    # Output is written time-major (T, N, D) so no separate transpose pass is needed.
    x = x_ref[...].astype(jnp.float32)
    mean = jnp.mean(x, axis=-1, keepdims=True)
    var = jnp.mean((x - mean) ** 2, axis=-1, keepdims=True)
    xn = (x - mean) * lax.rsqrt(var + 1e-5)              # (N, D, T)
    n_batch = x_ref.shape[0]
    for n in range(n_batch):                             # static unroll; 2-D transposes only
        o_ref[:, n, :] = jnp.transpose(xn[n]).astype(o_ref.dtype)   # (T, D)


def instance_norm1d_time_major(x):
    n, d, t = x.shape
    return pl.pallas_call(
        _instance_norm_transpose_kernel,
        out_shape=jax.ShapeDtypeStruct((t, n, d), jnp.float32),
    )(x)


def _lstm_chunk_recurrence(x_ref, wih_ref, whh_ref, b_ref, h_sc, c_sc, xw_sc, hh_sc):
    """Run the LSTM recurrence over one time chunk.

    x_ref:   (Tc, N, Din)   streamed time-major input chunk
    wih_ref: (Din, 4H) bf16 resident input weights (gate order i, f, g, o)
    whh_ref: (H, 4H)   bf16 resident recurrent weights
    b_ref:   (1, 4H)   f32  combined bias (b_ih + b_hh)
    h_sc/c_sc: (N, H)  f32  persistent recurrent state (scratch, lives across grid steps)
    xw_sc:   (Tc, N, 4H) f32 scratch holding the hoisted x @ Wih + b for the chunk
    hh_sc:   (Tc, N, H)  f32 scratch collecting per-step h (None for the last layer)
    """
    tc, n, din = x_ref.shape
    hdim = whh_ref.shape[0]

    @pl.when(pl.program_id(0) == 0)
    def _init():
        h_sc[...] = jnp.zeros_like(h_sc)
        c_sc[...] = jnp.zeros_like(c_sc)

    # Hoisted input projection: one well-shaped bf16 MXU call per chunk, bias folded in
    # once (instead of Tc tiny matmuls + Tc bias broadcasts inside the loop).
    x_flat = x_ref[...].reshape(tc * n, din).astype(wih_ref.dtype)
    xw = jnp.dot(x_flat, wih_ref[...], preferred_element_type=jnp.float32)
    xw_sc[...] = (xw + b_ref[...]).reshape(tc, n, 4 * hdim)

    whh = whh_ref[...]

    def step(t, carry):
        h_prev = h_sc[...]
        c_prev = c_sc[...]
        gates = xw_sc[t] + jnp.dot(
            h_prev.astype(whh.dtype), whh, preferred_element_type=jnp.float32
        )                                                 # (N, 4H) f32
        i_g = jax.nn.sigmoid(gates[:, 0 * hdim:1 * hdim])
        f_g = jax.nn.sigmoid(gates[:, 1 * hdim:2 * hdim])
        g_g = jnp.tanh(gates[:, 2 * hdim:3 * hdim])
        o_g = jax.nn.sigmoid(gates[:, 3 * hdim:4 * hdim])
        c_new = f_g * c_prev + i_g * g_g                  # all f32
        h_new = o_g * jnp.tanh(c_new)
        h_sc[...] = h_new
        c_sc[...] = c_new
        if hh_sc is not None:
            hh_sc[t] = h_new
        return carry

    # Unrolled so the scheduler can overlap step t+1's h@Whh MXU push with step t's
    # VPU/EUP gate math.
    lax.fori_loop(0, tc, step, 0, unroll=True)


def _lstm_proj_seq_kernel(x_ref, wih_ref, whh_ref, b_ref, wp_ref, o_ref,
                          h_sc, c_sc, xw_sc, hh_sc):
    # Middle layers: emit the full projected sequence chunk (Tc, N, P).
    tc, n, _ = x_ref.shape
    hdim = whh_ref.shape[0]
    pdim = wp_ref.shape[1]
    _lstm_chunk_recurrence(x_ref, wih_ref, whh_ref, b_ref, h_sc, c_sc, xw_sc, hh_sc)
    # One chunk-wide projection matmul + one dense store (no per-step masked stores).
    hh = hh_sc[...].reshape(tc * n, hdim).astype(wp_ref.dtype)
    proj = jnp.dot(hh, wp_ref[...], preferred_element_type=jnp.float32)
    o_ref[...] = proj.reshape(tc, n, pdim).astype(o_ref.dtype)


def _lstm_proj_last_kernel(x_ref, wih_ref, whh_ref, b_ref, wp_ref, o_ref,
                           h_sc, c_sc, xw_sc, *, l2_norm):
    # Final layer: only the last timestep's projection is needed; fuse L2 norm.
    _lstm_chunk_recurrence(x_ref, wih_ref, whh_ref, b_ref, h_sc, c_sc, xw_sc, None)

    @pl.when(pl.program_id(0) == pl.num_programs(0) - 1)
    def _finalize():
        d = jnp.dot(h_sc[...].astype(wp_ref.dtype), wp_ref[...],
                    preferred_element_type=jnp.float32)          # (N, P)
        if l2_norm:
            ssq = jnp.sum(d * d, axis=-1, keepdims=True)
            # == d / max(||d||_2, 1e-12)  (torch.nn.functional.normalize)
            d = d * lax.rsqrt(jnp.maximum(ssq, 1e-24))
        o_ref[...] = d.astype(o_ref.dtype)


# ------------------------------ pallas_call wrappers ------------------------


def _lstm_compiler_params():
    # TODO(synk): for large batches add a leading "parallel" batch-block grid axis so
    # v7x's two TensorCores each run an independent slice of the batch.
    return pltpu.CompilerParams(
        dimension_semantics=("arbitrary",),   # recurrence carries state across T-chunks
        vmem_limit_bytes=48 * 1024 * 1024,
    )


def lstm_with_projection_seq(x_tnd, w_ih_t, w_hh_t, b, w_proj_t, *, chunk):
    t, n, din = x_tnd.shape
    hdim = w_hh_t.shape[0]
    pdim = w_proj_t.shape[1]
    assert t % chunk == 0, "sequence length must be a multiple of the T-chunk"
    return pl.pallas_call(
        _lstm_proj_seq_kernel,
        out_shape=jax.ShapeDtypeStruct((t, n, pdim), jnp.bfloat16),
        grid=(t // chunk,),
        in_specs=[
            pl.BlockSpec((chunk, n, din), lambda i: (i, 0, 0)),   # streamed input chunk
            pl.BlockSpec((din, 4 * hdim), lambda i: (0, 0)),      # resident weights
            pl.BlockSpec((hdim, 4 * hdim), lambda i: (0, 0)),
            pl.BlockSpec((1, 4 * hdim), lambda i: (0, 0)),
            pl.BlockSpec((hdim, pdim), lambda i: (0, 0)),
        ],
        out_specs=pl.BlockSpec((chunk, n, pdim), lambda i: (i, 0, 0)),
        scratch_shapes=[
            pltpu.VMEM((n, hdim), jnp.float32),             # h state (persists across chunks)
            pltpu.VMEM((n, hdim), jnp.float32),             # c state
            pltpu.VMEM((chunk, n, 4 * hdim), jnp.float32),  # x @ Wih + b for the chunk
            pltpu.VMEM((chunk, n, hdim), jnp.float32),      # h history for the chunk
        ],
        compiler_params=_lstm_compiler_params(),
    )(x_tnd, w_ih_t, w_hh_t, b, w_proj_t)


def lstm_with_projection_last(x_tnd, w_ih_t, w_hh_t, b, w_proj_t, *, chunk, l2_norm):
    t, n, din = x_tnd.shape
    hdim = w_hh_t.shape[0]
    pdim = w_proj_t.shape[1]
    assert t % chunk == 0, "sequence length must be a multiple of the T-chunk"
    kernel = functools.partial(_lstm_proj_last_kernel, l2_norm=l2_norm)
    return pl.pallas_call(
        kernel,
        out_shape=jax.ShapeDtypeStruct((n, pdim), jnp.float32),
        grid=(t // chunk,),
        in_specs=[
            pl.BlockSpec((chunk, n, din), lambda i: (i, 0, 0)),
            pl.BlockSpec((din, 4 * hdim), lambda i: (0, 0)),
            pl.BlockSpec((hdim, 4 * hdim), lambda i: (0, 0)),
            pl.BlockSpec((1, 4 * hdim), lambda i: (0, 0)),
            pl.BlockSpec((hdim, pdim), lambda i: (0, 0)),
        ],
        out_specs=pl.BlockSpec((n, pdim), lambda i: (0, 0)),      # resident, written once
        scratch_shapes=[
            pltpu.VMEM((n, hdim), jnp.float32),
            pltpu.VMEM((n, hdim), jnp.float32),
            pltpu.VMEM((chunk, n, 4 * hdim), jnp.float32),
        ],
        compiler_params=_lstm_compiler_params(),
    )(x_tnd, w_ih_t, w_hh_t, b, w_proj_t)


# --------------------------- parameter construction ------------------------


def xavier_normal(key, shape):
    fan_out, fan_in = shape
    std = jnp.sqrt(2.0 / (fan_in + fan_out))
    return std * jax.random.normal(key, shape, dtype=jnp.float32)


def init_speaker_encoder_params(key, input_dim, proj_dim, lstm_dim, num_lstm_layers):
    params = []
    in_dim = input_dim
    for _ in range(num_lstm_layers):
        key, k_ih, k_hh, k_p = jax.random.split(key, 4)
        w_ih = xavier_normal(k_ih, (4 * lstm_dim, in_dim))      # torch layout (4H, Din)
        w_hh = xavier_normal(k_hh, (4 * lstm_dim, lstm_dim))    # (4H, H)
        b = jnp.zeros((1, 4 * lstm_dim), jnp.float32)           # b_ih + b_hh = 0
        w_proj = xavier_normal(k_p, (proj_dim, lstm_dim))       # (P, H), no bias
        params.append(
            dict(
                w_ih_t=jnp.transpose(w_ih).astype(jnp.bfloat16),     # (Din, 4H) bf16 MXU operand
                w_hh_t=jnp.transpose(w_hh).astype(jnp.bfloat16),     # (H, 4H)
                b=b,                                                 # (1, 4H) f32
                w_proj_t=jnp.transpose(w_proj).astype(jnp.bfloat16), # (H, P)
            )
        )
        in_dim = proj_dim
    return params


# --------------------------------- forward ---------------------------------


@functools.partial(jax.jit, static_argnames=("l2_norm", "chunk"))
def lstm_speaker_encoder_forward(x_ndt, params, l2_norm=True, chunk=8):
    """x_ndt: (N, D_spec, T) spectrogram frames (float32)."""
    x = instance_norm1d_time_major(x_ndt)           # (T, N, D) f32, transpose fused
    n_layers = len(params)
    d = None
    for li, p in enumerate(params):
        if li < n_layers - 1:
            x = lstm_with_projection_seq(
                x, p["w_ih_t"], p["w_hh_t"], p["b"], p["w_proj_t"], chunk=chunk)
        else:
            d = lstm_with_projection_last(
                x, p["w_ih_t"], p["w_hh_t"], p["b"], p["w_proj_t"],
                chunk=chunk, l2_norm=l2_norm)
    return d


# ----------------------------------- main -----------------------------------

if __name__ == "__main__":
    # small shapes consistent with the module's forward
    N, input_dim, T = 2, 16, 16
    lstm_dim, proj_dim, num_lstm_layers = 32, 16, 3
    chunk = 8                                       # grid of 2 T-chunks per layer

    key = jax.random.PRNGKey(0)
    key, kx = jax.random.split(key)
    x = jax.random.normal(kx, (N, input_dim, T), dtype=jnp.float32)

    params = init_speaker_encoder_params(
        key, input_dim, proj_dim, lstm_dim, num_lstm_layers
    )

    d = lstm_speaker_encoder_forward(x, params, l2_norm=True, chunk=chunk)
    jax.block_until_ready(d)
    assert d.shape == (N, proj_dim)
    print("KERNEL_OK")
</pallas_src>

<mosaic_0001>
module attributes {stable_mosaic.version = 11 : i64} {
  func.func @_lstm_proj_seq_kernel(%arg0: i32, %arg1: memref<8x2x16xbf16, #tpu.memory_space<vmem>>, %arg2: memref<16x128xbf16, #tpu.memory_space<vmem>>, %arg3: memref<32x128xbf16, #tpu.memory_space<vmem>>, %arg4: memref<1x128xf32, #tpu.memory_space<vmem>>, %arg5: memref<32x16xbf16, #tpu.memory_space<vmem>>, %arg6: memref<8x2x16xbf16, #tpu.memory_space<vmem>>, %arg7: memref<2x32xf32, #tpu.memory_space<vmem>>, %arg8: memref<2x32xf32, #tpu.memory_space<vmem>>, %arg9: memref<8x2x128xf32, #tpu.memory_space<vmem>>, %arg10: memref<8x2x32xf32, #tpu.memory_space<vmem>>) attributes {dimension_semantics = [#tpu.dimension_semantics<arbitrary>], iteration_bounds = array<i64: 2>, scalar_prefetch = 0 : i64, scratch_operands = 4 : i64, tpu.core_type = #tpu.core_type<tc>, window_params = [{transform_indices = @transform_0, window_bounds = array<i64: 8, 2, 16>}, {pipeline_mode = #tpu.pipeline_mode<synchronous>, transform_indices = @transform_1, window_bounds = array<i64: 16, 128>}, {pipeline_mode = #tpu.pipeline_mode<synchronous>, transform_indices = @transform_2, window_bounds = array<i64: 32, 128>}, {pipeline_mode = #tpu.pipeline_mode<synchronous>, transform_indices = @transform_3, window_bounds = array<i64: 1, 128>}, {pipeline_mode = #tpu.pipeline_mode<synchronous>, transform_indices = @transform_4, window_bounds = array<i64: 32, 16>}, {transform_indices = @transform_5, window_bounds = array<i64: 8, 2, 16>}]} {
    %c0_i32 = arith.constant 0 : i32
    %0 = arith.cmpi eq, %arg0, %c0_i32 : i32
    %1 = arith.extui %0 : i1 to i32
    %c0_i32_0 = arith.constant 0 : i32
    %2 = arith.cmpi ne, %1, %c0_i32_0 : i32
    scf.if %2 {
      %cst_150 = arith.constant 0.000000e+00 : f32
      %333 = vector.broadcast %cst_150 : f32 to vector<2x32xf32>
      %c0_151 = arith.constant 0 : index
      %c0_152 = arith.constant 0 : index
      %334 = vector.load %arg7[%c0_151, %c0_152] : memref<2x32xf32, #tpu.memory_space<vmem>>, vector<2x32xf32>
      tpu.vector_store %arg7[%c0_151, %c0_152], %333 {strides = array<i32>} : memref<2x32xf32, #tpu.memory_space<vmem>>, vector<2x32xf32>,
      %cst_153 = arith.constant 0.000000e+00 : f32
      %335 = vector.broadcast %cst_153 : f32 to vector<2x32xf32>
      %c0_154 = arith.constant 0 : index
      %c0_155 = arith.constant 0 : index
      %336 = vector.load %arg8[%c0_154, %c0_155] : memref<2x32xf32, #tpu.memory_space<vmem>>, vector<2x32xf32>
      tpu.vector_store %arg8[%c0_154, %c0_155], %335 {strides = array<i32>} : memref<2x32xf32, #tpu.memory_space<vmem>>, vector<2x32xf32>,
    } else {
    }
    %c0 = arith.constant 0 : index
    %c0_1 = arith.constant 0 : index
    %c0_2 = arith.constant 0 : index
    %3 = vector.load %arg1[%c0, %c0_1, %c0_2] : memref<8x2x16xbf16, #tpu.memory_space<vmem>>, vector<8x2x16xbf16>
    %4 = vector.shape_cast %3 : vector<8x2x16xbf16> to vector<16x16xbf16>
    %c0_3 = arith.constant 0 : index
    %c0_4 = arith.constant 0 : index
    %5 = vector.load %arg2[%c0_3, %c0_4] : memref<16x128xbf16, #tpu.memory_space<vmem>>, vector<16x128xbf16>
    %cst = arith.constant dense<0.000000e+00> : vector<16x128xf32>
    %6 = tpu.matmul %4, %5, %cst {dimension_numbers = #tpu.dot_dimension_numbers<[1], [0], [0], [1], [0, 0, 1, 1], [], []>} : vector<16x16xbf16>, vector<16x128xbf16>, vector<16x128xf32> -> vector<16x128xf32>
    %c0_5 = arith.constant 0 : index
    %c0_6 = arith.constant 0 : index
    %7 = vector.load %arg4[%c0_5, %c0_6] : memref<1x128xf32, #tpu.memory_space<vmem>>, vector<1x128xf32>
    %8 = vector.broadcast %7 : vector<1x128xf32> to vector<16x128xf32>
    %9 = arith.addf %6, %8 : vector<16x128xf32>
    %10 = vector.shape_cast %9 : vector<16x128xf32> to vector<8x2x128xf32>
    %c0_7 = arith.constant 0 : index
    %c0_8 = arith.constant 0 : index
    %c0_9 = arith.constant 0 : index
    %11 = vector.load %arg9[%c0_7, %c0_8, %c0_9] : memref<8x2x128xf32, #tpu.memory_space<vmem>>, vector<8x2x128xf32>
    tpu.vector_store %arg9[%c0_7, %c0_8, %c0_9], %10 {strides = array<i32>} : memref<8x2x128xf32, #tpu.memory_space<vmem>>, vector<8x2x128xf32>,
    %c0_10 = arith.constant 0 : index
    %c0_11 = arith.constant 0 : index
    %12 = vector.load %arg3[%c0_10, %c0_11] : memref<32x128xbf16, #tpu.memory_space<vmem>>, vector<32x128xbf16>
    %c0_i32_12 = arith.constant 0 : i32
    %c0_13 = arith.constant 0 : index
    %c0_14 = arith.constant 0 : index
    %13 = vector.load %arg7[%c0_13, %c0_14] : memref<2x32xf32, #tpu.memory_space<vmem>>, vector<2x32xf32>
    %c0_15 = arith.constant 0 : index
    %c0_16 = arith.constant 0 : index
    %14 = vector.load %arg8[%c0_15, %c0_16] : memref<2x32xf32, #tpu.memory_space<vmem>>, vector<2x32xf32>
    %15 = arith.index_cast %c0_i32_12 : i32 to index
    %c0_17 = arith.constant 0 : index
    %c0_18 = arith.constant 0 : index
    %16 = vector.load %arg9[%15, %c0_17, %c0_18] : memref<8x2x128xf32, #tpu.memory_space<vmem>>, vector<1x2x128xf32>
    %17 = vector.shape_cast %16 : vector<1x2x128xf32> to vector<2x128xf32>
    %18 = arith.truncf %13 : vector<2x32xf32> to vector<2x32xbf16>
    %cst_19 = arith.constant dense<0.000000e+00> : vector<2x128xf32>
    %19 = tpu.matmul %18, %12, %cst_19 {dimension_numbers = #tpu.dot_dimension_numbers<[1], [0], [0], [1], [0, 0, 1, 1], [], []>} : vector<2x32xbf16>, vector<32x128xbf16>, vector<2x128xf32> -> vector<2x128xf32>
    %20 = arith.addf %17, %19 : vector<2x128xf32>
    %21 = vector.extract_strided_slice %20 {offsets = [0, 0], sizes = [2, 32], strides = [1, 1]} : vector<2x128xf32> to vector<2x32xf32>
    %22 = arith.negf %21 : vector<2x32xf32>
    %23 = math.exp %22 : vector<2x32xf32>
    %cst_20 = arith.constant 1.000000e+00 : f32
    %24 = vector.broadcast %cst_20 : f32 to vector<2x32xf32>
    %25 = arith.addf %24, %23 : vector<2x32xf32>
    %26 = arith.divf %24, %25 : vector<2x32xf32>
    %27 = vector.extract_strided_slice %20 {offsets = [0, 32], sizes = [2, 32], strides = [1, 1]} : vector<2x128xf32> to vector<2x32xf32>
    %28 = arith.negf %27 : vector<2x32xf32>
    %29 = math.exp %28 : vector<2x32xf32>
    %cst_21 = arith.constant 1.000000e+00 : f32
    %30 = vector.broadcast %cst_21 : f32 to vector<2x32xf32>
    %31 = arith.addf %30, %29 : vector<2x32xf32>
    %32 = arith.divf %30, %31 : vector<2x32xf32>
    %33 = vector.extract_strided_slice %20 {offsets = [0, 64], sizes = [2, 32], strides = [1, 1]} : vector<2x128xf32> to vector<2x32xf32>
    %34 = math.tanh %33 : vector<2x32xf32>
    %35 = vector.extract_strided_slice %20 {offsets = [0, 96], sizes = [2, 32], strides = [1, 1]} : vector<2x128xf32> to vector<2x32xf32>
    %36 = arith.negf %35 : vector<2x32xf32>
    %37 = math.exp %36 : vector<2x32xf32>
    %cst_22 = arith.constant 1.000000e+00 : f32
    %38 = vector.broadcast %cst_22 : f32 to vector<2x32xf32>
    %39 = arith.addf %38, %37 : vector<2x32xf32>
    %40 = arith.divf %38, %39 : vector<2x32xf32>
    %41 = arith.mulf %32, %14 : vector<2x32xf32>
    %42 = arith.mulf %26, %34 : vector<2x32xf32>
    %43 = arith.addf %41, %42 : vector<2x32xf32>
    %44 = math.tanh %43 : vector<2x32xf32>
    %45 = arith.mulf %40, %44 : vector<2x32xf32>
    %c0_23 = arith.constant 0 : index
    %c0_24 = arith.constant 0 : index
    %46 = vector.load %arg7[%c0_23, %c0_24] : memref<2x32xf32, #tpu.memory_space<vmem>>, vector<2x32xf32>
    tpu.vector_store %arg7[%c0_23, %c0_24], %45 {strides = array<i32>} : memref<2x32xf32, #tpu.memory_space<vmem>>, vector<2x32xf32>,
    %c0_25 = arith.constant 0 : index
    %c0_26 = arith.constant 0 : index
    %47 = vector.load %arg8[%c0_25, %c0_26] : memref<2x32xf32, #tpu.memory_space<vmem>>, vector<2x32xf32>
    tpu.vector_store %arg8[%c0_25, %c0_26], %43 {strides = array<i32>} : memref<2x32xf32, #tpu.memory_space<vmem>>, vector<2x32xf32>,
    %48 = arith.index_cast %c0_i32_12 : i32 to index
    %c0_27 = arith.constant 0 : index
    %c0_28 = arith.constant 0 : index
    %49 = vector.load %arg10[%48, %c0_27, %c0_28] : memref<8x2x32xf32, #tpu.memory_space<vmem>>, vector<1x2x32xf32>
    %50 = vector.shape_cast %49 : vector<1x2x32xf32> to vector<2x32xf32>
    %51 = vector.shape_cast %45 : vector<2x32xf32> to vector<1x2x32xf32>
    tpu.vector_store %arg10[%48, %c0_27, %c0_28], %51 {strides = array<i32>} : memref<8x2x32xf32, #tpu.memory_space<vmem>>, vector<1x2x32xf32>,
    %c1_i32 = arith.constant 1 : i32
    %c0_29 = arith.constant 0 : index
    %c0_30 = arith.constant 0 : index
    %52 = vector.load %arg7[%c0_29, %c0_30] : memref<2x32xf32, #tpu.memory_space<vmem>>, vector<2x32xf32>
    %c0_31 = arith.constant 0 : index
    %c0_32 = arith.constant 0 : index
    %53 = vector.load %arg8[%c0_31, %c0_32] : memref<2x32xf32, #tpu.memory_space<vmem>>, vector<2x32xf32>
    %54 = arith.index_cast %c1_i32 : i32 to index
    %c0_33 = arith.constant 0 : index
    %c0_34 = arith.constant 0 : index
    %55 = vector.load %arg9[%54, %c0_33, %c0_34] : memref<8x2x128xf32, #tpu.memory_space<vmem>>, vector<1x2x128xf32>
    %56 = vector.shape_cast %55 : vector<1x2x128xf32> to vector<2x128xf32>
    %57 = arith.truncf %52 : vector<2x32xf32> to vector<2x32xbf16>
    %cst_35 = arith.constant dense<0.000000e+00> : vector<2x128xf32>
    %58 = tpu.matmul %57, %12, %cst_35 {dimension_numbers = #tpu.dot_dimension_numbers<[1], [0], [0], [1], [0, 0, 1, 1], [], []>} : vector<2x32xbf16>, vector<32x128xbf16>, vector<2x128xf32> -> vector<2x128xf32>
    %59 = arith.addf %56, %58 : vector<2x128xf32>
    %60 = vector.extract_strided_slice %59 {offsets = [0, 0], sizes = [2, 32], strides = [1, 1]} : vector<2x128xf32> to vector<2x32xf32>
    %61 = arith.negf %60 : vector<2x32xf32>
    %62 = math.exp %61 : vector<2x32xf32>
    %cst_36 = arith.constant 1.000000e+00 : f32
    %63 = vector.broadcast %cst_36 : f32 to vector<2x32xf32>
    %64 = arith.addf %63, %62 : vector<2x32xf32>
    %65 = arith.divf %63, %64 : vector<2x32xf32>
    %66 = vector.extract_strided_slice %59 {offsets = [0, 32], sizes = [2, 32], strides = [1, 1]} : vector<2x128xf32> to vector<2x32xf32>
    %67 = arith.negf %66 : vector<2x32xf32>
    %68 = math.exp %67 : vector<2x32xf32>
    %cst_37 = arith.constant 1.000000e+00 : f32
    %69 = vector.broadcast %cst_37 : f32 to vector<2x32xf32>
    %70 = arith.addf %69, %68 : vector<2x32xf32>
    %71 = arith.divf %69, %70 : vector<2x32xf32>
    %72 = vector.extract_strided_slice %59 {offsets = [0, 64], sizes = [2, 32], strides = [1, 1]} : vector<2x128xf32> to vector<2x32xf32>
    %73 = math.tanh %72 : vector<2x32xf32>
    %74 = vector.extract_strided_slice %59 {offsets = [0, 96], sizes = [2, 32], strides = [1, 1]} : vector<2x128xf32> to vector<2x32xf32>
    %75 = arith.negf %74 : vector<2x32xf32>
    %76 = math.exp %75 : vector<2x32xf32>
    %cst_38 = arith.constant 1.000000e+00 : f32
    %77 = vector.broadcast %cst_38 : f32 to vector<2x32xf32>
    %78 = arith.addf %77, %76 : vector<2x32xf32>
    %79 = arith.divf %77, %78 : vector<2x32xf32>
    %80 = arith.mulf %71, %53 : vector<2x32xf32>
    %81 = arith.mulf %65, %73 : vector<2x32xf32>
    %82 = arith.addf %80, %81 : vector<2x32xf32>
    %83 = math.tanh %82 : vector<2x32xf32>
    %84 = arith.mulf %79, %83 : vector<2x32xf32>
    %c0_39 = arith.constant 0 : index
    %c0_40 = arith.constant 0 : index
    %85 = vector.load %arg7[%c0_39, %c0_40] : memref<2x32xf32, #tpu.memory_space<vmem>>, vector<2x32xf32>
    tpu.vector_store %arg7[%c0_39, %c0_40], %84 {strides = array<i32>} : memref<2x32xf32, #tpu.memory_space<vmem>>, vector<2x32xf32>,
    %c0_41 = arith.constant 0 : index
    %c0_42 = arith.constant 0 : index
    %86 = vector.load %arg8[%c0_41, %c0_42] : memref<2x32xf32, #tpu.memory_space<vmem>>, vector<2x32xf32>
    tpu.vector_store %arg8[%c0_41, %c0_42], %82 {strides = array<i32>} : memref<2x32xf32, #tpu.memory_space<vmem>>, vector<2x32xf32>,
    %87 = arith.index_cast %c1_i32 : i32 to index
    %c0_43 = arith.constant 0 : index
    %c0_44 = arith.constant 0 : index
    %88 = vector.load %arg10[%87, %c0_43, %c0_44] : memref<8x2x32xf32, #tpu.memory_space<vmem>>, vector<1x2x32xf32>
    %89 = vector.shape_cast %88 : vector<1x2x32xf32> to vector<2x32xf32>
    %90 = vector.shape_cast %84 : vector<2x32xf32> to vector<1x2x32xf32>
    tpu.vector_store %arg10[%87, %c0_43, %c0_44], %90 {strides = array<i32>} : memref<8x2x32xf32, #tpu.memory_space<vmem>>, vector<1x2x32xf32>,
    %c2_i32 = arith.constant 2 : i32
    %c0_45 = arith.constant 0 : index
    %c0_46 = arith.constant 0 : index
    %91 = vector.load %arg7[%c0_45, %c0_46] : memref<2x32xf32, #tpu.memory_space<vmem>>, vector<2x32xf32>
    %c0_47 = arith.constant 0 : index
    %c0_48 = arith.constant 0 : index
    %92 = vector.load %arg8[%c0_47, %c0_48] : memref<2x32xf32, #tpu.memory_space<vmem>>, vector<2x32xf32>
    %93 = arith.index_cast %c2_i32 : i32 to index
    %c0_49 = arith.constant 0 : index
    %c0_50 = arith.constant 0 : index
    %94 = vector.load %arg9[%93, %c0_49, %c0_50] : memref<8x2x128xf32, #tpu.memory_space<vmem>>, vector<1x2x128xf32>
    %95 = vector.shape_cast %94 : vector<1x2x128xf32> to vector<2x128xf32>
    %96 = arith.truncf %91 : vector<2x32xf32> to vector<2x32xbf16>
    %cst_51 = arith.constant dense<0.000000e+00> : vector<2x128xf32>
    %97 = tpu.matmul %96, %12, %cst_51 {dimension_numbers = #tpu.dot_dimension_numbers<[1], [0], [0], [1], [0, 0, 1, 1], [], []>} : vector<2x32xbf16>, vector<32x128xbf16>, vector<2x128xf32> -> vector<2x128xf32>
    %98 = arith.addf %95, %97 : vector<2x128xf32>
    %99 = vector.extract_strided_slice %98 {offsets = [0, 0], sizes = [2, 32], strides = [1, 1]} : vector<2x128xf32> to vector<2x32xf32>
    %100 = arith.negf %99 : vector<2x32xf32>
    %101 = math.exp %100 : vector<2x32xf32>
    %cst_52 = arith.constant 1.000000e+00 : f32
    %102 = vector.broadcast %cst_52 : f32 to vector<2x32xf32>
    %103 = arith.addf %102, %101 : vector<2x32xf32>
    %104 = arith.divf %102, %103 : vector<2x32xf32>
    %105 = vector.extract_strided_slice %98 {offsets = [0, 32], sizes = [2, 32], strides = [1, 1]} : vector<2x128xf32> to vector<2x32xf32>
    %106 = arith.negf %105 : vector<2x32xf32>
    %107 = math.exp %106 : vector<2x32xf32>
    %cst_53 = arith.constant 1.000000e+00 : f32
    %108 = vector.broadcast %cst_53 : f32 to vector<2x32xf32>
    %109 = arith.addf %108, %107 : vector<2x32xf32>
    %110 = arith.divf %108, %109 : vector<2x32xf32>
    %111 = vector.extract_strided_slice %98 {offsets = [0, 64], sizes = [2, 32], strides = [1, 1]} : vector<2x128xf32> to vector<2x32xf32>
    %112 = math.tanh %111 : vector<2x32xf32>
    %113 = vector.extract_strided_slice %98 {offsets = [0, 96], sizes = [2, 32], strides = [1, 1]} : vector<2x128xf32> to vector<2x32xf32>
    %114 = arith.negf %113 : vector<2x32xf32>
    %115 = math.exp %114 : vector<2x32xf32>
    %cst_54 = arith.constant 1.000000e+00 : f32
    %116 = vector.broadcast %cst_54 : f32 to vector<2x32xf32>
    %117 = arith.addf %116, %115 : vector<2x32xf32>
    %118 = arith.divf %116, %117 : vector<2x32xf32>
    %119 = arith.mulf %110, %92 : vector<2x32xf32>
    %120 = arith.mulf %104, %112 : vector<2x32xf32>
    %121 = arith.addf %119, %120 : vector<2x32xf32>
    %122 = math.tanh %121 : vector<2x32xf32>
    %123 = arith.mulf %118, %122 : vector<2x32xf32>
    %c0_55 = arith.constant 0 : index
    %c0_56 = arith.constant 0 : index
    %124 = vector.load %arg7[%c0_55, %c0_56] : memref<2x32xf32, #tpu.memory_space<vmem>>, vector<2x32xf32>
    tpu.vector_store %arg7[%c0_55, %c0_56], %123 {strides = array<i32>} : memref<2x32xf32, #tpu.memory_space<vmem>>, vector<2x32xf32>,
    %c0_57 = arith.constant 0 : index
    %c0_58 = arith.constant 0 : index
    %125 = vector.load %arg8[%c0_57, %c0_58] : memref<2x32xf32, #tpu.memory_space<vmem>>, vector<2x32xf32>
    tpu.vector_store %arg8[%c0_57, %c0_58], %121 {strides = array<i32>} : memref<2x32xf32, #tpu.memory_space<vmem>>, vector<2x32xf32>,
    %126 = arith.index_cast %c2_i32 : i32 to index
    %c0_59 = arith.constant 0 : index
    %c0_60 = arith.constant 0 : index
    %127 = vector.load %arg10[%126, %c0_59, %c0_60] : memref<8x2x32xf32, #tpu.memory_space<vmem>>, vector<1x2x32xf32>
    %128 = vector.shape_cast %127 : vector<1x2x32xf32> to vector<2x32xf32>
    %129 = vector.shape_cast %123 : vector<2x32xf32> to vector<1x2x32xf32>
    tpu.vector_store %arg10[%126, %c0_59, %c0_60], %129 {strides = array<i32>} : memref<8x2x32xf32, #tpu.memory_space<vmem>>, vector<1x2x32xf32>,
    %c3_i32 = arith.constant 3 : i32
    %c0_61 = arith.constant 0 : index
    %c0_62 = arith.constant 0 : index
    %130 = vector.load %arg7[%c0_61, %c0_62] : memref<2x32xf32, #tpu.memory_space<vmem>>, vector<2x32xf32>
    %c0_63 = arith.constant 0 : index
    %c0_64 = arith.constant 0 : index
    %131 = vector.load %arg8[%c0_63, %c0_64] : memref<2x32xf32, #tpu.memory_space<vmem>>, vector<2x32xf32>
    %132 = arith.index_cast %c3_i32 : i32 to index
    %c0_65 = arith.constant 0 : index
    %c0_66 = arith.constant 0 : index
    %133 = vector.load %arg9[%132, %c0_65, %c0_66] : memref<8x2x128xf32, #tpu.memory_space<vmem>>, vector<1x2x128xf32>
    %134 = vector.shape_cast %133 : vector<1x2x128xf32> to vector<2x128xf32>
    %135 = arith.truncf %130 : vector<2x32xf32> to vector<2x32xbf16>
    %cst_67 = arith.constant dense<0.000000e+00> : vector<2x128xf32>
    %136 = tpu.matmul %135, %12, %cst_67 {dimension_numbers = #tpu.dot_dimension_numbers<[1], [0], [0], [1], [0, 0, 1, 1], [], []>} : vector<2x32xbf16>, vector<32x128xbf16>, vector<2x128xf32> -> vector<2x128xf32>
    %137 = arith.addf %134, %136 : vector<2x128xf32>
    %138 = vector.extract_strided_slice %137 {offsets = [0, 0], sizes = [2, 32], strides = [1, 1]} : vector<2x128xf32> to vector<2x32xf32>
    %139 = arith.negf %138 : vector<2x32xf32>
    %140 = math.exp %139 : vector<2x32xf32>
    %cst_68 = arith.constant 1.000000e+00 : f32
    %141 = vector.broadcast %cst_68 : f32 to vector<2x32xf32>
    %142 = arith.addf %141, %140 : vector<2x32xf32>
    %143 = arith.divf %141, %142 : vector<2x32xf32>
    %144 = vector.extract_strided_slice %137 {offsets = [0, 32], sizes = [2, 32], strides = [1, 1]} : vector<2x128xf32> to vector<2x32xf32>
    %145 = arith.negf %144 : vector<2x32xf32>
    %146 = math.exp %145 : vector<2x32xf32>
    %cst_69 = arith.constant 1.000000e+00 : f32
    %147 = vector.broadcast %cst_69 : f32 to vector<2x32xf32>
    %148 = arith.addf %147, %146 : vector<2x32xf32>
    %149 = arith.divf %147, %148 : vector<2x32xf32>
    %150 = vector.extract_strided_slice %137 {offsets = [0, 64], sizes = [2, 32], strides = [1, 1]} : vector<2x128xf32> to vector<2x32xf32>
    %151 = math.tanh %150 : vector<2x32xf32>
    %152 = vector.extract_strided_slice %137 {offsets = [0, 96], sizes = [2, 32], strides = [1, 1]} : vector<2x128xf32> to vector<2x32xf32>
    %153 = arith.negf %152 : vector<2x32xf32>
    %154 = math.exp %153 : vector<2x32xf32>
    %cst_70 = arith.constant 1.000000e+00 : f32
    %155 = vector.broadcast %cst_70 : f32 to vector<2x32xf32>
    %156 = arith.addf %155, %154 : vector<2x32xf32>
    %157 = arith.divf %155, %156 : vector<2x32xf32>
    %158 = arith.mulf %149, %131 : vector<2x32xf32>
    %159 = arith.mulf %143, %151 : vector<2x32xf32>
    %160 = arith.addf %158, %159 : vector<2x32xf32>
    %161 = math.tanh %160 : vector<2x32xf32>
    %162 = arith.mulf %157, %161 : vector<2x32xf32>
    %c0_71 = arith.constant 0 : index
    %c0_72 = arith.constant 0 : index
    %163 = vector.load %arg7[%c0_71, %c0_72] : memref<2x32xf32, #tpu.memory_space<vmem>>, vector<2x32xf32>
    tpu.vector_store %arg7[%c0_71, %c0_72], %162 {strides = array<i32>} : memref<2x32xf32, #tpu.memory_space<vmem>>, vector<2x32xf32>,
    %c0_73 = arith.constant 0 : index
    %c0_74 = arith.constant 0 : index
    %164 = vector.load %arg8[%c0_73, %c0_74] : memref<2x32xf32, #tpu.memory_space<vmem>>, vector<2x32xf32>
    tpu.vector_store %arg8[%c0_73, %c0_74], %160 {strides = array<i32>} : memref<2x32xf32, #tpu.memory_space<vmem>>, vector<2x32xf32>,
    %165 = arith.index_cast %c3_i32 : i32 to index
    %c0_75 = arith.constant 0 : index
    %c0_76 = arith.constant 0 : index
    %166 = vector.load %arg10[%165, %c0_75, %c0_76] : memref<8x2x32xf32, #tpu.memory_space<vmem>>, vector<1x2x32xf32>
    %167 = vector.shape_cast %166 : vector<1x2x32xf32> to vector<2x32xf32>
    %168 = vector.shape_cast %162 : vector<2x32xf32> to vector<1x2x32xf32>
    tpu.vector_store %arg10[%165, %c0_75, %c0_76], %168 {strides = array<i32>} : memref<8x2x32xf32, #tpu.memory_space<vmem>>, vector<1x2x32xf32>,
    %c4_i32 = arith.constant 4 : i32
    %c0_77 = arith.constant 0 : index
    %c0_78 = arith.constant 0 : index
    %169 = vector.load %arg7[%c0_77, %c0_78] : memref<2x32xf32, #tpu.memory_space<vmem>>, vector<2x32xf32>
    %c0_79 = arith.constant 0 : index
    %c0_80 = arith.constant 0 : index
    %170 = vector.load %arg8[%c0_79, %c0_80] : memref<2x32xf32, #tpu.memory_space<vmem>>, vector<2x32xf32>
    %171 = arith.index_cast %c4_i32 : i32 to index
    %c0_81 = arith.constant 0 : index
    %c0_82 = arith.constant 0 : index
    %172 = vector.load %arg9[%171, %c0_81, %c0_82] : memref<8x2x128xf32, #tpu.memory_space<vmem>>, vector<1x2x128xf32>
    %173 = vector.shape_cast %172 : vector<1x2x128xf32> to vector<2x128xf32>
    %174 = arith.truncf %169 : vector<2x32xf32> to vector<2x32xbf16>
    %cst_83 = arith.constant dense<0.000000e+00> : vector<2x128xf32>
    %175 = tpu.matmul %174, %12, %cst_83 {dimension_numbers = #tpu.dot_dimension_numbers<[1], [0], [0], [1], [0, 0, 1, 1], [], []>} : vector<2x32xbf16>, vector<32x128xbf16>, vector<2x128xf32> -> vector<2x128xf32>
    %176 = arith.addf %173, %175 : vector<2x128xf32>
    %177 = vector.extract_strided_slice %176 {offsets = [0, 0], sizes = [2, 32], strides = [1, 1]} : vector<2x128xf32> to vector<2x32xf32>
    %178 = arith.negf %177 : vector<2x32xf32>
    %179 = math.exp %178 : vector<2x32xf32>
    %cst_84 = arith.constant 1.000000e+00 : f32
    %180 = vector.broadcast %cst_84 : f32 to vector<2x32xf32>
    %181 = arith.addf %180, %179 : vector<2x32xf32>
    %182 = arith.divf %180, %181 : vector<2x32xf32>
    %183 = vector.extract_strided_slice %176 {offsets = [0, 32], sizes = [2, 32], strides = [1, 1]} : vector<2x128xf32> to vector<2x32xf32>
    %184 = arith.negf %183 : vector<2x32xf32>
    %185 = math.exp %184 : vector<2x32xf32>
    %cst_85 = arith.constant 1.000000e+00 : f32
    %186 = vector.broadcast %cst_85 : f32 to vector<2x32xf32>
    %187 = arith.addf %186, %185 : vector<2x32xf32>
    %188 = arith.divf %186, %187 : vector<2x32xf32>
    %189 = vector.extract_strided_slice %176 {offsets = [0, 64], sizes = [2, 32], strides = [1, 1]} : vector<2x128xf32> to vector<2x32xf32>
    %190 = math.tanh %189 : vector<2x32xf32>
    %191 = vector.extract_strided_slice %176 {offsets = [0, 96], sizes = [2, 32], strides = [1, 1]} : vector<2x128xf32> to vector<2x32xf32>
    %192 = arith.negf %191 : vector<2x32xf32>
    %193 = math.exp %192 : vector<2x32xf32>
    %cst_86 = arith.constant 1.000000e+00 : f32
    %194 = vector.broadcast %cst_86 : f32 to vector<2x32xf32>
    %195 = arith.addf %194, %193 : vector<2x32xf32>
    %196 = arith.divf %194, %195 : vector<2x32xf32>
    %197 = arith.mulf %188, %170 : vector<2x32xf32>
    %198 = arith.mulf %182, %190 : vector<2x32xf32>
    %199 = arith.addf %197, %198 : vector<2x32xf32>
    %200 = math.tanh %199 : vector<2x32xf32>
    %201 = arith.mulf %196, %200 : vector<2x32xf32>
    %c0_87 = arith.constant 0 : index
    %c0_88 = arith.constant 0 : index
    %202 = vector.load %arg7[%c0_87, %c0_88] : memref<2x32xf32, #tpu.memory_space<vmem>>, vector<2x32xf32>
    tpu.vector_store %arg7[%c0_87, %c0_88], %201 {strides = array<i32>} : memref<2x32xf32, #tpu.memory_space<vmem>>, vector<2x32xf32>,
    %c0_89 = arith.constant 0 : index
    %c0_90 = arith.constant 0 : index
    %203 = vector.load %arg8[%c0_89, %c0_90] : memref<2x32xf32, #tpu.memory_space<vmem>>, vector<2x32xf32>
    tpu.vector_store %arg8[%c0_89, %c0_90], %199 {strides = array<i32>} : memref<2x32xf32, #tpu.memory_space<vmem>>, vector<2x32xf32>,
    %204 = arith.index_cast %c4_i32 : i32 to index
    %c0_91 = arith.constant 0 : index
    %c0_92 = arith.constant 0 : index
    %205 = vector.load %arg10[%204, %c0_91, %c0_92] : memref<8x2x32xf32, #tpu.memory_space<vmem>>, vector<1x2x32xf32>
    %206 = vector.shape_cast %205 : vector<1x2x32xf32> to vector<2x32xf32>
    %207 = vector.shape_cast %201 : vector<2x32xf32> to vector<1x2x32xf32>
    tpu.vector_store %arg10[%204, %c0_91, %c0_92], %207 {strides = array<i32>} : memref<8x2x32xf32, #tpu.memory_space<vmem>>, vector<1x2x32xf32>,
    %c5_i32 = arith.constant 5 : i32
    %c0_93 = arith.constant 0 : index
    %c0_94 = arith.constant 0 : index
    %208 = vector.load %arg7[%c0_93, %c0_94] : memref<2x32xf32, #tpu.memory_space<vmem>>, vector<2x32xf32>
    %c0_95 = arith.constant 0 : index
    %c0_96 = arith.constant 0 : index
    %209 = vector.load %arg8[%c0_95, %c0_96] : memref<2x32xf32, #tpu.memory_space<vmem>>, vector<2x32xf32>
    %210 = arith.index_cast %c5_i32 : i32 to index
    %c0_97 = arith.constant 0 : index
    %c0_98 = arith.constant 0 : index
    %211 = vector.load %arg9[%210, %c0_97, %c0_98] : memref<8x2x128xf32, #tpu.memory_space<vmem>>, vector<1x2x128xf32>
    %212 = vector.shape_cast %211 : vector<1x2x128xf32> to vector<2x128xf32>
    %213 = arith.truncf %208 : vector<2x32xf32> to vector<2x32xbf16>
    %cst_99 = arith.constant dense<0.000000e+00> : vector<2x128xf32>
    %214 = tpu.matmul %213, %12, %cst_99 {dimension_numbers = #tpu.dot_dimension_numbers<[1], [0], [0], [1], [0, 0, 1, 1], [], []>} : vector<2x32xbf16>, vector<32x128xbf16>, vector<2x128xf32> -> vector<2x128xf32>
    %215 = arith.addf %212, %214 : vector<2x128xf32>
    %216 = vector.extract_strided_slice %215 {offsets = [0, 0], sizes = [2, 32], strides = [1, 1]} : vector<2x128xf32> to vector<2x32xf32>
    %217 = arith.negf %216 : vector<2x32xf32>
    %218 = math.exp %217 : vector<2x32xf32>
    %cst_100 = arith.constant 1.000000e+00 : f32
    %219 = vector.broadcast %cst_100 : f32 to vector<2x32xf32>
    %220 = arith.addf %219, %218 : vector<2x32xf32>
    %221 = arith.divf %219, %220 : vector<2x32xf32>
    %222 = vector.extract_strided_slice %215 {offsets = [0, 32], sizes = [2, 32], strides = [1, 1]} : vector<2x128xf32> to vector<2x32xf32>
    %223 = arith.negf %222 : vector<2x32xf32>
    %224 = math.exp %223 : vector<2x32xf32>
    %cst_101 = arith.constant 1.000000e+00 : f32
    %225 = vector.broadcast %cst_101 : f32 to vector<2x32xf32>
    %226 = arith.addf %225, %224 : vector<2x32xf32>
    %227 = arith.divf %225, %226 : vector<2x32xf32>
    %228 = vector.extract_strided_slice %215 {offsets = [0, 64], sizes = [2, 32], strides = [1, 1]} : vector<2x128xf32> to vector<2x32xf32>
    %229 = math.tanh %228 : vector<2x32xf32>
    %230 = vector.extract_strided_slice %215 {offsets = [0, 96], sizes = [2, 32], strides = [1, 1]} : vector<2x128xf32> to vector<2x32xf32>
    %231 = arith.negf %230 : vector<2x32xf32>
    %232 = math.exp %231 : vector<2x32xf32>
    %cst_102 = arith.constant 1.000000e+00 : f32
    %233 = vector.broadcast %cst_102 : f32 to vector<2x32xf32>
    %234 = arith.addf %233, %232 : vector<2x32xf32>
    %235 = arith.divf %233, %234 : vector<2x32xf32>
    %236 = arith.mulf %227, %209 : vector<2x32xf32>
    %237 = arith.mulf %221, %229 : vector<2x32xf32>
    %238 = arith.addf %236, %237 : vector<2x32xf32>
    %239 = math.tanh %238 : vector<2x32xf32>
    %240 = arith.mulf %235, %239 : vector<2x32xf32>
    %c0_103 = arith.constant 0 : index
    %c0_104 = arith.constant 0 : index
    %241 = vector.load %arg7[%c0_103, %c0_104] : memref<2x32xf32, #tpu.memory_space<vmem>>, vector<2x32xf32>
    tpu.vector_store %arg7[%c0_103, %c0_104], %240 {strides = array<i32>} : memref<2x32xf32, #tpu.memory_space<vmem>>, vector<2x32xf32>,
    %c0_105 = arith.constant 0 : index
    %c0_106 = arith.constant 0 : index
    %242 = vector.load %arg8[%c0_105, %c0_106] : memref<2x32xf32, #tpu.memory_space<vmem>>, vector<2x32xf32>
    tpu.vector_store %arg8[%c0_105, %c0_106], %238 {strides = array<i32>} : memref<2x32xf32, #tpu.memory_space<vmem>>, vector<2x32xf32>,
    %243 = arith.index_cast %c5_i32 : i32 to index
    %c0_107 = arith.constant 0 : index
    %c0_108 = arith.constant 0 : index
    %244 = vector.load %arg10[%243, %c0_107, %c0_108] : memref<8x2x32xf32, #tpu.memory_space<vmem>>, vector<1x2x32xf32>
    %245 = vector.shape_cast %244 : vector<1x2x32xf32> to vector<2x32xf32>
    %246 = vector.shape_cast %240 : vector<2x32xf32> to vector<1x2x32xf32>
    tpu.vector_store %arg10[%243, %c0_107, %c0_108], %246 {strides = array<i32>} : memref<8x2x32xf32, #tpu.memory_space<vmem>>, vector<1x2x32xf32>,
    %c6_i32 = arith.constant 6 : i32
    %c0_109 = arith.constant 0 : index
    %c0_110 = arith.constant 0 : index
    %247 = vector.load %arg7[%c0_109, %c0_110] : memref<2x32xf32, #tpu.memory_space<vmem>>, vector<2x32xf32>
    %c0_111 = arith.constant 0 : index
    %c0_112 = arith.constant 0 : index
    %248 = vector.load %arg8[%c0_111, %c0_112] : memref<2x32xf32, #tpu.memory_space<vmem>>, vector<2x32xf32>
    %249 = arith.index_cast %c6_i32 : i32 to index
    %c0_113 = arith.constant 0 : index
    %c0_114 = arith.constant 0 : index
    %250 = vector.load %arg9[%249, %c0_113, %c0_114] : memref<8x2x128xf32, #tpu.memory_space<vmem>>, vector<1x2x128xf32>
    %251 = vector.shape_cast %250 : vector<1x2x128xf32> to vector<2x128xf32>
    %252 = arith.truncf %247 : vector<2x32xf32> to vector<2x32xbf16>
    %cst_115 = arith.constant dense<0.000000e+00> : vector<2x128xf32>
    %253 = tpu.matmul %252, %12, %cst_115 {dimension_numbers = #tpu.dot_dimension_numbers<[1], [0], [0], [1], [0, 0, 1, 1], [], []>} : vector<2x32xbf16>, vector<32x128xbf16>, vector<2x128xf32> -> vector<2x128xf32>
    %254 = arith.addf %251, %253 : vector<2x128xf32>
    %255 = vector.extract_strided_slice %254 {offsets = [0, 0], sizes = [2, 32], strides = [1, 1]} : vector<2x128xf32> to vector<2x32xf32>
    %256 = arith.negf %255 : vector<2x32xf32>
    %257 = math.exp %256 : vector<2x32xf32>
    %cst_116 = arith.constant 1.000000e+00 : f32
    %258 = vector.broadcast %cst_116 : f32 to vector<2x32xf32>
    %259 = arith.addf %258, %257 : vector<2x32xf32>
    %260 = arith.divf %258, %259 : vector<2x32xf32>
    %261 = vector.extract_strided_slice %254 {offsets = [0, 32], sizes = [2, 32], strides = [1, 1]} : vector<2x128xf32> to vector<2x32xf32>
    %262 = arith.negf %261 : vector<2x32xf32>
    %263 = math.exp %262 : vector<2x32xf32>
    %cst_117 = arith.constant 1.000000e+00 : f32
    %264 = vector.broadcast %cst_117 : f32 to vector<2x32xf32>
    %265 = arith.addf %264, %263 : vector<2x32xf32>
    %266 = arith.divf %264, %265 : vector<2x32xf32>
    %267 = vector.extract_strided_slice %254 {offsets = [0, 64], sizes = [2, 32], strides = [1, 1]} : vector<2x128xf32> to vector<2x32xf32>
    %268 = math.tanh %267 : vector<2x32xf32>
    %269 = vector.extract_strided_slice %254 {offsets = [0, 96], sizes = [2, 32], strides = [1, 1]} : vector<2x128xf32> to vector<2x32xf32>
    %270 = arith.negf %269 : vector<2x32xf32>
    %271 = math.exp %270 : vector<2x32xf32>
    %cst_118 = arith.constant 1.000000e+00 : f32
    %272 = vector.broadcast %cst_118 : f32 to vector<2x32xf32>
    %273 = arith.addf %272, %271 : vector<2x32xf32>
    %274 = arith.divf %272, %273 : vector<2x32xf32>
    %275 = arith.mulf %266, %248 : vector<2x32xf32>
    %276 = arith.mulf %260, %268 : vector<2x32xf32>
    %277 = arith.addf %275, %276 : vector<2x32xf32>
    %278 = math.tanh %277 : vector<2x32xf32>
    %279 = arith.mulf %274, %278 : vector<2x32xf32>
    %c0_119 = arith.constant 0 : index
    %c0_120 = arith.constant 0 : index
    %280 = vector.load %arg7[%c0_119, %c0_120] : memref<2x32xf32, #tpu.memory_space<vmem>>, vector<2x32xf32>
    tpu.vector_store %arg7[%c0_119, %c0_120], %279 {strides = array<i32>} : memref<2x32xf32, #tpu.memory_space<vmem>>, vector<2x32xf32>,
    %c0_121 = arith.constant 0 : index
    %c0_122 = arith.constant 0 : index
    %281 = vector.load %arg8[%c0_121, %c0_122] : memref<2x32xf32, #tpu.memory_space<vmem>>, vector<2x32xf32>
    tpu.vector_store %arg8[%c0_121, %c0_122], %277 {strides = array<i32>} : memref<2x32xf32, #tpu.memory_space<vmem>>, vector<2x32xf32>,
    %282 = arith.index_cast %c6_i32 : i32 to index
    %c0_123 = arith.constant 0 : index
    %c0_124 = arith.constant 0 : index
    %283 = vector.load %arg10[%282, %c0_123, %c0_124] : memref<8x2x32xf32, #tpu.memory_space<vmem>>, vector<1x2x32xf32>
    %284 = vector.shape_cast %283 : vector<1x2x32xf32> to vector<2x32xf32>
    %285 = vector.shape_cast %279 : vector<2x32xf32> to vector<1x2x32xf32>
    tpu.vector_store %arg10[%282, %c0_123, %c0_124], %285 {strides = array<i32>} : memref<8x2x32xf32, #tpu.memory_space<vmem>>, vector<1x2x32xf32>,
    %c7_i32 = arith.constant 7 : i32
    %c0_125 = arith.constant 0 : index
    %c0_126 = arith.constant 0 : index
    %286 = vector.load %arg7[%c0_125, %c0_126] : memref<2x32xf32, #tpu.memory_space<vmem>>, vector<2x32xf32>
    %c0_127 = arith.constant 0 : index
    %c0_128 = arith.constant 0 : index
    %287 = vector.load %arg8[%c0_127, %c0_128] : memref<2x32xf32, #tpu.memory_space<vmem>>, vector<2x32xf32>
    %288 = arith.index_cast %c7_i32 : i32 to index
    %c0_129 = arith.constant 0 : index
    %c0_130 = arith.constant 0 : index
    %289 = vector.load %arg9[%288, %c0_129, %c0_130] : memref<8x2x128xf32, #tpu.memory_space<vmem>>, vector<1x2x128xf32>
    %290 = vector.shape_cast %289 : vector<1x2x128xf32> to vector<2x128xf32>
    %291 = arith.truncf %286 : vector<2x32xf32> to vector<2x32xbf16>
    %cst_131 = arith.constant dense<0.000000e+00> : vector<2x128xf32>
    %292 = tpu.matmul %291, %12, %cst_131 {dimension_numbers = #tpu.dot_dimension_numbers<[1], [0], [0], [1], [0, 0, 1, 1], [], []>} : vector<2x32xbf16>, vector<32x128xbf16>, vector<2x128xf32> -> vector<2x128xf32>
    %293 = arith.addf %290, %292 : vector<2x128xf32>
    %294 = vector.extract_strided_slice %293 {offsets = [0, 0], sizes = [2, 32], strides = [1, 1]} : vector<2x128xf32> to vector<2x32xf32>
    %295 = arith.negf %294 : vector<2x32xf32>
    %296 = math.exp %295 : vector<2x32xf32>
    %cst_132 = arith.constant 1.000000e+00 : f32
    %297 = vector.broadcast %cst_132 : f32 to vector<2x32xf32>
    %298 = arith.addf %297, %296 : vector<2x32xf32>
    %299 = arith.divf %297, %298 : vector<2x32xf32>
    %300 = vector.extract_strided_slice %293 {offsets = [0, 32], sizes = [2, 32], strides = [1, 1]} : vector<2x128xf32> to vector<2x32xf32>
    %301 = arith.negf %300 : vector<2x32xf32>
    %302 = math.exp %301 : vector<2x32xf32>
    %cst_133 = arith.constant 1.000000e+00 : f32
    %303 = vector.broadcast %cst_133 : f32 to vector<2x32xf32>
    %304 = arith.addf %303, %302 : vector<2x32xf32>
    %305 = arith.divf %303, %304 : vector<2x32xf32>
    %306 = vector.extract_strided_slice %293 {offsets = [0, 64], sizes = [2, 32], strides = [1, 1]} : vector<2x128xf32> to vector<2x32xf32>
    %307 = math.tanh %306 : vector<2x32xf32>
    %308 = vector.extract_strided_slice %293 {offsets = [0, 96], sizes = [2, 32], strides = [1, 1]} : vector<2x128xf32> to vector<2x32xf32>
    %309 = arith.negf %308 : vector<2x32xf32>
    %310 = math.exp %309 : vector<2x32xf32>
    %cst_134 = arith.constant 1.000000e+00 : f32
    %311 = vector.broadcast %cst_134 : f32 to vector<2x32xf32>
    %312 = arith.addf %311, %310 : vector<2x32xf32>
    %313 = arith.divf %311, %312 : vector<2x32xf32>
    %314 = arith.mulf %305, %287 : vector<2x32xf32>
    %315 = arith.mulf %299, %307 : vector<2x32xf32>
    %316 = arith.addf %314, %315 : vector<2x32xf32>
    %317 = math.tanh %316 : vector<2x32xf32>
    %318 = arith.mulf %313, %317 : vector<2x32xf32>
    %c0_135 = arith.constant 0 : index
    %c0_136 = arith.constant 0 : index
    %319 = vector.load %arg7[%c0_135, %c0_136] : memref<2x32xf32, #tpu.memory_space<vmem>>, vector<2x32xf32>
    tpu.vector_store %arg7[%c0_135, %c0_136], %318 {strides = array<i32>} : memref<2x32xf32, #tpu.memory_space<vmem>>, vector<2x32xf32>,
    %c0_137 = arith.constant 0 : index
    %c0_138 = arith.constant 0 : index
    %320 = vector.load %arg8[%c0_137, %c0_138] : memref<2x32xf32, #tpu.memory_space<vmem>>, vector<2x32xf32>
    tpu.vector_store %arg8[%c0_137, %c0_138], %316 {strides = array<i32>} : memref<2x32xf32, #tpu.memory_space<vmem>>, vector<2x32xf32>,
    %321 = arith.index_cast %c7_i32 : i32 to index
    %c0_139 = arith.constant 0 : index
    %c0_140 = arith.constant 0 : index
    %322 = vector.load %arg10[%321, %c0_139, %c0_140] : memref<8x2x32xf32, #tpu.memory_space<vmem>>, vector<1x2x32xf32>
    %323 = vector.shape_cast %322 : vector<1x2x32xf32> to vector<2x32xf32>
    %324 = vector.shape_cast %318 : vector<2x32xf32> to vector<1x2x32xf32>
    tpu.vector_store %arg10[%321, %c0_139, %c0_140], %324 {strides = array<i32>} : memref<8x2x32xf32, #tpu.memory_space<vmem>>, vector<1x2x32xf32>,
    %c8_i32 = arith.constant 8 : i32
    %c0_141 = arith.constant 0 : index
    %c0_142 = arith.constant 0 : index
    %c0_143 = arith.constant 0 : index
    %325 = vector.load %arg10[%c0_141, %c0_142, %c0_143] : memref<8x2x32xf32, #tpu.memory_space<vmem>>, vector<8x2x32xf32>
    %326 = vector.shape_cast %325 : vector<8x2x32xf32> to vector<16x32xf32>
    %327 = arith.truncf %326 : vector<16x32xf32> to vector<16x32xbf16>
    %c0_144 = arith.constant 0 : index
    %c0_145 = arith.constant 0 : index
    %328 = vector.load %arg5[%c0_144, %c0_145] : memref<32x16xbf16, #tpu.memory_space<vmem>>, vector<32x16xbf16>
    %cst_146 = arith.constant dense<0.000000e+00> : vector<16x16xf32>
    %329 = tpu.matmul %327, %328, %cst_146 {dimension_numbers = #tpu.dot_dimension_numbers<[1], [0], [0], [1], [0, 0, 1, 1], [], []>} : vector<16x32xbf16>, vector<32x16xbf16>, vector<16x16xf32> -> vector<16x16xf32>
    %330 = vector.shape_cast %329 : vector<16x16xf32> to vector<8x2x16xf32>
    %331 = arith.truncf %330 : vector<8x2x16xf32> to vector<8x2x16xbf16>
    %c0_147 = arith.constant 0 : index
    %c0_148 = arith.constant 0 : index
    %c0_149 = arith.constant 0 : index
    %332 = vector.load %arg6[%c0_147, %c0_148, %c0_149] : memref<8x2x16xbf16, #tpu.memory_space<vmem>>, vector<8x2x16xbf16>
    tpu.vector_store %arg6[%c0_147, %c0_148, %c0_149], %331 {strides = array<i32>} : memref<8x2x16xbf16, #tpu.memory_space<vmem>>, vector<8x2x16xbf16>,
    return
  }
  func.func @transform_0(%arg0: i32) -> (i32, i32, i32) {
    %c0_i32 = arith.constant 0 : i32
    %c0_i32_0 = arith.constant 0 : i32
    %c0_i32_1 = arith.constant 0 : i32
    return %arg0, %c0_i32, %c0_i32_0 : i32, i32, i32
  }
  func.func @transform_1(%arg0: i32) -> (i32, i32) {
    %c0_i32 = arith.constant 0 : i32
    %c0_i32_0 = arith.constant 0 : i32
    %c0_i32_1 = arith.constant 0 : i32
    return %c0_i32, %c0_i32_0 : i32, i32
  }
  func.func @transform_2(%arg0: i32) -> (i32, i32) {
    %c0_i32 = arith.constant 0 : i32
    %c0_i32_0 = arith.constant 0 : i32
    %c0_i32_1 = arith.constant 0 : i32
    return %c0_i32, %c0_i32_0 : i32, i32
  }
  func.func @transform_3(%arg0: i32) -> (i32, i32) {
    %c0_i32 = arith.constant 0 : i32
    %c0_i32_0 = arith.constant 0 : i32
    %c0_i32_1 = arith.constant 0 : i32
    return %c0_i32, %c0_i32_0 : i32, i32
  }
  func.func @transform_4(%arg0: i32) -> (i32, i32) {
    %c0_i32 = arith.constant 0 : i32
    %c0_i32_0 = arith.constant 0 : i32
    %c0_i32_1 = arith.constant 0 : i32
    return %c0_i32, %c0_i32_0 : i32, i32
  }
  func.func @transform_5(%arg0: i32) -> (i32, i32, i32) {
    %c0_i32 = arith.constant 0 : i32
    %c0_i32_0 = arith.constant 0 : i32
    %c0_i32_1 = arith.constant 0 : i32
    return %arg0, %c0_i32, %c0_i32_0 : i32, i32, i32
  }
}

module attributes {stable_mosaic.version = 11 : i64} {
  func.func @_instance_norm_transpose_kernel(%arg0: memref<2x16x16xf32, #tpu.memory_space<vmem>>, %arg1: memref<16x2x16xf32, #tpu.memory_space<vmem>>) attributes {dimension_semantics = [], scalar_prefetch = 0 : i64, scratch_operands = 0 : i64, tpu.core_type = #tpu.core_type<tc>} {
    %c0 = arith.constant 0 : index
    %c0_0 = arith.constant 0 : index
    %c0_1 = arith.constant 0 : index
    %0 = vector.load %arg0[%c0, %c0_0, %c0_1] : memref<2x16x16xf32, #tpu.memory_space<vmem>>, vector<2x16x16xf32>
    %cst = arith.constant dense<0.000000e+00> : vector<2x16xf32>
    %1 = vector.multi_reduction <add>, %0, %cst [2] : vector<2x16x16xf32> to vector<2x16xf32>
    %2 = vector.shape_cast %1 : vector<2x16xf32> to vector<2x16x1xf32>
    %cst_2 = arith.constant 1.600000e+01 : f32
    %3 = vector.broadcast %cst_2 : f32 to vector<2x16x1xf32>
    %4 = arith.divf %2, %3 : vector<2x16x1xf32>
    %5 = vector.broadcast %4 : vector<2x16x1xf32> to vector<2x16x16xf32>
    %6 = arith.subf %0, %5 : vector<2x16x16xf32>
    %7 = arith.mulf %6, %6 : vector<2x16x16xf32>
    %cst_3 = arith.constant dense<0.000000e+00> : vector<2x16xf32>
    %8 = vector.multi_reduction <add>, %7, %cst_3 [2] : vector<2x16x16xf32> to vector<2x16xf32>
    %9 = vector.shape_cast %8 : vector<2x16xf32> to vector<2x16x1xf32>
    %cst_4 = arith.constant 1.600000e+01 : f32
    %10 = vector.broadcast %cst_4 : f32 to vector<2x16x1xf32>
    %11 = arith.divf %9, %10 : vector<2x16x1xf32>
    %12 = vector.broadcast %4 : vector<2x16x1xf32> to vector<2x16x16xf32>
    %13 = arith.subf %0, %12 : vector<2x16x16xf32>
    %cst_5 = arith.constant 9.99999974E-6 : f32
    %14 = vector.broadcast %cst_5 : f32 to vector<2x16x1xf32>
    %15 = arith.addf %11, %14 : vector<2x16x1xf32>
    %16 = math.rsqrt %15 : vector<2x16x1xf32>
    %17 = vector.broadcast %16 : vector<2x16x1xf32> to vector<2x16x16xf32>
    %18 = arith.mulf %13, %17 : vector<2x16x16xf32>
    %19 = vector.extract_strided_slice %18 {offsets = [0, 0, 0], sizes = [1, 16, 16], strides = [1, 1, 1]} : vector<2x16x16xf32> to vector<1x16x16xf32>
    %20 = vector.shape_cast %19 : vector<1x16x16xf32> to vector<16x16xf32>
    %21 = tpu.transpose %20, [1, 0] : vector<16x16xf32> -> vector<16x16xf32>
    %c0_6 = arith.constant 0 : index
    %c0_7 = arith.constant 0 : index
    %c0_8 = arith.constant 0 : index
    %22 = vector.load %arg1[%c0_6, %c0_7, %c0_8] : memref<16x2x16xf32, #tpu.memory_space<vmem>>, vector<16x1x16xf32>
    %23 = vector.shape_cast %22 : vector<16x1x16xf32> to vector<16x16xf32>
    %24 = vector.shape_cast %21 : vector<16x16xf32> to vector<16x1x16xf32>
    tpu.vector_store %arg1[%c0_6, %c0_7, %c0_8], %24 {strides = array<i32>} : memref<16x2x16xf32, #tpu.memory_space<vmem>>, vector<16x1x16xf32>,
    %25 = vector.extract_strided_slice %18 {offsets = [1, 0, 0], sizes = [1, 16, 16], strides = [1, 1, 1]} : vector<2x16x16xf32> to vector<1x16x16xf32>
    %26 = vector.shape_cast %25 : vector<1x16x16xf32> to vector<16x16xf32>
    %27 = tpu.transpose %26, [1, 0] : vector<16x16xf32> -> vector<16x16xf32>
    %c0_9 = arith.constant 0 : index
    %c1 = arith.constant 1 : index
    %c0_10 = arith.constant 0 : index
    %28 = vector.load %arg1[%c0_9, %c1, %c0_10] : memref<16x2x16xf32, #tpu.memory_space<vmem>>, vector<16x1x16xf32>
    %29 = vector.shape_cast %28 : vector<16x1x16xf32> to vector<16x16xf32>
    %30 = vector.shape_cast %27 : vector<16x16xf32> to vector<16x1x16xf32>
    tpu.vector_store %arg1[%c0_9, %c1, %c0_10], %30 {strides = array<i32>} : memref<16x2x16xf32, #tpu.memory_space<vmem>>, vector<16x1x16xf32>,
    return
  }
}

module attributes {stable_mosaic.version = 11 : i64} {
  func.func @_lstm_proj_seq_kernel(%arg0: i32, %arg1: memref<8x2x16xf32, #tpu.memory_space<vmem>>, %arg2: memref<16x128xbf16, #tpu.memory_space<vmem>>, %arg3: memref<32x128xbf16, #tpu.memory_space<vmem>>, %arg4: memref<1x128xf32, #tpu.memory_space<vmem>>, %arg5: memref<32x16xbf16, #tpu.memory_space<vmem>>, %arg6: memref<8x2x16xbf16, #tpu.memory_space<vmem>>, %arg7: memref<2x32xf32, #tpu.memory_space<vmem>>, %arg8: memref<2x32xf32, #tpu.memory_space<vmem>>, %arg9: memref<8x2x128xf32, #tpu.memory_space<vmem>>, %arg10: memref<8x2x32xf32, #tpu.memory_space<vmem>>) attributes {dimension_semantics = [#tpu.dimension_semantics<arbitrary>], iteration_bounds = array<i64: 2>, scalar_prefetch = 0 : i64, scratch_operands = 4 : i64, tpu.core_type = #tpu.core_type<tc>, window_params = [{transform_indices = @transform_0, window_bounds = array<i64: 8, 2, 16>}, {pipeline_mode = #tpu.pipeline_mode<synchronous>, transform_indices = @transform_1, window_bounds = array<i64: 16, 128>}, {pipeline_mode = #tpu.pipeline_mode<synchronous>, transform_indices = @transform_2, window_bounds = array<i64: 32, 128>}, {pipeline_mode = #tpu.pipeline_mode<synchronous>, transform_indices = @transform_3, window_bounds = array<i64: 1, 128>}, {pipeline_mode = #tpu.pipeline_mode<synchronous>, transform_indices = @transform_4, window_bounds = array<i64: 32, 16>}, {transform_indices = @transform_5, window_bounds = array<i64: 8, 2, 16>}]} {
    %c0_i32 = arith.constant 0 : i32
    %0 = arith.cmpi eq, %arg0, %c0_i32 : i32
    %1 = arith.extui %0 : i1 to i32
    %c0_i32_0 = arith.constant 0 : i32
    %2 = arith.cmpi ne, %1, %c0_i32_0 : i32
    scf.if %2 {
      %cst_150 = arith.constant 0.000000e+00 : f32
      %334 = vector.broadcast %cst_150 : f32 to vector<2x32xf32>
      %c0_151 = arith.constant 0 : index
      %c0_152 = arith.constant 0 : index
      %335 = vector.load %arg7[%c0_151, %c0_152] : memref<2x32xf32, #tpu.memory_space<vmem>>, vector<2x32xf32>
      tpu.vector_store %arg7[%c0_151, %c0_152], %334 {strides = array<i32>} : memref<2x32xf32, #tpu.memory_space<vmem>>, vector<2x32xf32>,
      %cst_153 = arith.constant 0.000000e+00 : f32
      %336 = vector.broadcast %cst_153 : f32 to vector<2x32xf32>
      %c0_154 = arith.constant 0 : index
      %c0_155 = arith.constant 0 : index
      %337 = vector.load %arg8[%c0_154, %c0_155] : memref<2x32xf32, #tpu.memory_space<vmem>>, vector<2x32xf32>
      tpu.vector_store %arg8[%c0_154, %c0_155], %336 {strides = array<i32>} : memref<2x32xf32, #tpu.memory_space<vmem>>, vector<2x32xf32>,
    } else {
    }
    %c0 = arith.constant 0 : index
    %c0_1 = arith.constant 0 : index
    %c0_2 = arith.constant 0 : index
    %3 = vector.load %arg1[%c0, %c0_1, %c0_2] : memref<8x2x16xf32, #tpu.memory_space<vmem>>, vector<8x2x16xf32>
    %4 = vector.shape_cast %3 : vector<8x2x16xf32> to vector<16x16xf32>
    %5 = arith.truncf %4 : vector<16x16xf32> to vector<16x16xbf16>
    %c0_3 = arith.constant 0 : index
    %c0_4 = arith.constant 0 : index
    %6 = vector.load %arg2[%c0_3, %c0_4] : memref<16x128xbf16, #tpu.memory_space<vmem>>, vector<16x128xbf16>
    %cst = arith.constant dense<0.000000e+00> : vector<16x128xf32>
    %7 = tpu.matmul %5, %6, %cst {dimension_numbers = #tpu.dot_dimension_numbers<[1], [0], [0], [1], [0, 0, 1, 1], [], []>} : vector<16x16xbf16>, vector<16x128xbf16>, vector<16x128xf32> -> vector<16x128xf32>
    %c0_5 = arith.constant 0 : index
    %c0_6 = arith.constant 0 : index
    %8 = vector.load %arg4[%c0_5, %c0_6] : memref<1x128xf32, #tpu.memory_space<vmem>>, vector<1x128xf32>
    %9 = vector.broadcast %8 : vector<1x128xf32> to vector<16x128xf32>
    %10 = arith.addf %7, %9 : vector<16x128xf32>
    %11 = vector.shape_cast %10 : vector<16x128xf32> to vector<8x2x128xf32>
    %c0_7 = arith.constant 0 : index
    %c0_8 = arith.constant 0 : index
    %c0_9 = arith.constant 0 : index
    %12 = vector.load %arg9[%c0_7, %c0_8, %c0_9] : memref<8x2x128xf32, #tpu.memory_space<vmem>>, vector<8x2x128xf32>
    tpu.vector_store %arg9[%c0_7, %c0_8, %c0_9], %11 {strides = array<i32>} : memref<8x2x128xf32, #tpu.memory_space<vmem>>, vector<8x2x128xf32>,
    %c0_10 = arith.constant 0 : index
    %c0_11 = arith.constant 0 : index
    %13 = vector.load %arg3[%c0_10, %c0_11] : memref<32x128xbf16, #tpu.memory_space<vmem>>, vector<32x128xbf16>
    %c0_i32_12 = arith.constant 0 : i32
    %c0_13 = arith.constant 0 : index
    %c0_14 = arith.constant 0 : index
    %14 = vector.load %arg7[%c0_13, %c0_14] : memref<2x32xf32, #tpu.memory_space<vmem>>, vector<2x32xf32>
    %c0_15 = arith.constant 0 : index
    %c0_16 = arith.constant 0 : index
    %15 = vector.load %arg8[%c0_15, %c0_16] : memref<2x32xf32, #tpu.memory_space<vmem>>, vector<2x32xf32>
    %16 = arith.index_cast %c0_i32_12 : i32 to index
    %c0_17 = arith.constant 0 : index
    %c0_18 = arith.constant 0 : index
    %17 = vector.load %arg9[%16, %c0_17, %c0_18] : memref<8x2x128xf32, #tpu.memory_space<vmem>>, vector<1x2x128xf32>
    %18 = vector.shape_cast %17 : vector<1x2x128xf32> to vector<2x128xf32>
    %19 = arith.truncf %14 : vector<2x32xf32> to vector<2x32xbf16>
    %cst_19 = arith.constant dense<0.000000e+00> : vector<2x128xf32>
    %20 = tpu.matmul %19, %13, %cst_19 {dimension_numbers = #tpu.dot_dimension_numbers<[1], [0], [0], [1], [0, 0, 1, 1], [], []>} : vector<2x32xbf16>, vector<32x128xbf16>, vector<2x128xf32> -> vector<2x128xf32>
    %21 = arith.addf %18, %20 : vector<2x128xf32>
    %22 = vector.extract_strided_slice %21 {offsets = [0, 0], sizes = [2, 32], strides = [1, 1]} : vector<2x128xf32> to vector<2x32xf32>
    %23 = arith.negf %22 : vector<2x32xf32>
    %24 = math.exp %23 : vector<2x32xf32>
    %cst_20 = arith.constant 1.000000e+00 : f32
    %25 = vector.broadcast %cst_20 : f32 to vector<2x32xf32>
    %26 = arith.addf %25, %24 : vector<2x32xf32>
    %27 = arith.divf %25, %26 : vector<2x32xf32>
    %28 = vector.extract_strided_slice %21 {offsets = [0, 32], sizes = [2, 32], strides = [1, 1]} : vector<2x128xf32> to vector<2x32xf32>
    %29 = arith.negf %28 : vector<2x32xf32>
    %30 = math.exp %29 : vector<2x32xf32>
    %cst_21 = arith.constant 1.000000e+00 : f32
    %31 = vector.broadcast %cst_21 : f32 to vector<2x32xf32>
    %32 = arith.addf %31, %30 : vector<2x32xf32>
    %33 = arith.divf %31, %32 : vector<2x32xf32>
    %34 = vector.extract_strided_slice %21 {offsets = [0, 64], sizes = [2, 32], strides = [1, 1]} : vector<2x128xf32> to vector<2x32xf32>
    %35 = math.tanh %34 : vector<2x32xf32>
    %36 = vector.extract_strided_slice %21 {offsets = [0, 96], sizes = [2, 32], strides = [1, 1]} : vector<2x128xf32> to vector<2x32xf32>
    %37 = arith.negf %36 : vector<2x32xf32>
    %38 = math.exp %37 : vector<2x32xf32>
    %cst_22 = arith.constant 1.000000e+00 : f32
    %39 = vector.broadcast %cst_22 : f32 to vector<2x32xf32>
    %40 = arith.addf %39, %38 : vector<2x32xf32>
    %41 = arith.divf %39, %40 : vector<2x32xf32>
    %42 = arith.mulf %33, %15 : vector<2x32xf32>
    %43 = arith.mulf %27, %35 : vector<2x32xf32>
    %44 = arith.addf %42, %43 : vector<2x32xf32>
    %45 = math.tanh %44 : vector<2x32xf32>
    %46 = arith.mulf %41, %45 : vector<2x32xf32>
    %c0_23 = arith.constant 0 : index
    %c0_24 = arith.constant 0 : index
    %47 = vector.load %arg7[%c0_23, %c0_24] : memref<2x32xf32, #tpu.memory_space<vmem>>, vector<2x32xf32>
    tpu.vector_store %arg7[%c0_23, %c0_24], %46 {strides = array<i32>} : memref<2x32xf32, #tpu.memory_space<vmem>>, vector<2x32xf32>,
    %c0_25 = arith.constant 0 : index
    %c0_26 = arith.constant 0 : index
    %48 = vector.load %arg8[%c0_25, %c0_26] : memref<2x32xf32, #tpu.memory_space<vmem>>, vector<2x32xf32>
    tpu.vector_store %arg8[%c0_25, %c0_26], %44 {strides = array<i32>} : memref<2x32xf32, #tpu.memory_space<vmem>>, vector<2x32xf32>,
    %49 = arith.index_cast %c0_i32_12 : i32 to index
    %c0_27 = arith.constant 0 : index
    %c0_28 = arith.constant 0 : index
    %50 = vector.load %arg10[%49, %c0_27, %c0_28] : memref<8x2x32xf32, #tpu.memory_space<vmem>>, vector<1x2x32xf32>
    %51 = vector.shape_cast %50 : vector<1x2x32xf32> to vector<2x32xf32>
    %52 = vector.shape_cast %46 : vector<2x32xf32> to vector<1x2x32xf32>
    tpu.vector_store %arg10[%49, %c0_27, %c0_28], %52 {strides = array<i32>} : memref<8x2x32xf32, #tpu.memory_space<vmem>>, vector<1x2x32xf32>,
    %c1_i32 = arith.constant 1 : i32
    %c0_29 = arith.constant 0 : index
    %c0_30 = arith.constant 0 : index
    %53 = vector.load %arg7[%c0_29, %c0_30] : memref<2x32xf32, #tpu.memory_space<vmem>>, vector<2x32xf32>
    %c0_31 = arith.constant 0 : index
    %c0_32 = arith.constant 0 : index
    %54 = vector.load %arg8[%c0_31, %c0_32] : memref<2x32xf32, #tpu.memory_space<vmem>>, vector<2x32xf32>
    %55 = arith.index_cast %c1_i32 : i32 to index
    %c0_33 = arith.constant 0 : index
    %c0_34 = arith.constant 0 : index
    %56 = vector.load %arg9[%55, %c0_33, %c0_34] : memref<8x2x128xf32, #tpu.memory_space<vmem>>, vector<1x2x128xf32>
    %57 = vector.shape_cast %56 : vector<1x2x128xf32> to vector<2x128xf32>
    %58 = arith.truncf %53 : vector<2x32xf32> to vector<2x32xbf16>
    %cst_35 = arith.constant dense<0.000000e+00> : vector<2x128xf32>
    %59 = tpu.matmul %58, %13, %cst_35 {dimension_numbers = #tpu.dot_dimension_numbers<[1], [0], [0], [1], [0, 0, 1, 1], [], []>} : vector<2x32xbf16>, vector<32x128xbf16>, vector<2x128xf32> -> vector<2x128xf32>
    %60 = arith.addf %57, %59 : vector<2x128xf32>
    %61 = vector.extract_strided_slice %60 {offsets = [0, 0], sizes = [2, 32], strides = [1, 1]} : vector<2x128xf32> to vector<2x32xf32>
    %62 = arith.negf %61 : vector<2x32xf32>
    %63 = math.exp %62 : vector<2x32xf32>
    %cst_36 = arith.constant 1.000000e+00 : f32
    %64 = vector.broadcast %cst_36 : f32 to vector<2x32xf32>
    %65 = arith.addf %64, %63 : vector<2x32xf32>
    %66 = arith.divf %64, %65 : vector<2x32xf32>
    %67 = vector.extract_strided_slice %60 {offsets = [0, 32], sizes = [2, 32], strides = [1, 1]} : vector<2x128xf32> to vector<2x32xf32>
    %68 = arith.negf %67 : vector<2x32xf32>
    %69 = math.exp %68 : vector<2x32xf32>
    %cst_37 = arith.constant 1.000000e+00 : f32
    %70 = vector.broadcast %cst_37 : f32 to vector<2x32xf32>
    %71 = arith.addf %70, %69 : vector<2x32xf32>
    %72 = arith.divf %70, %71 : vector<2x32xf32>
    %73 = vector.extract_strided_slice %60 {offsets = [0, 64], sizes = [2, 32], strides = [1, 1]} : vector<2x128xf32> to vector<2x32xf32>
    %74 = math.tanh %73 : vector<2x32xf32>
    %75 = vector.extract_strided_slice %60 {offsets = [0, 96], sizes = [2, 32], strides = [1, 1]} : vector<2x128xf32> to vector<2x32xf32>
    %76 = arith.negf %75 : vector<2x32xf32>
    %77 = math.exp %76 : vector<2x32xf32>
    %cst_38 = arith.constant 1.000000e+00 : f32
    %78 = vector.broadcast %cst_38 : f32 to vector<2x32xf32>
    %79 = arith.addf %78, %77 : vector<2x32xf32>
    %80 = arith.divf %78, %79 : vector<2x32xf32>
    %81 = arith.mulf %72, %54 : vector<2x32xf32>
    %82 = arith.mulf %66, %74 : vector<2x32xf32>
    %83 = arith.addf %81, %82 : vector<2x32xf32>
    %84 = math.tanh %83 : vector<2x32xf32>
    %85 = arith.mulf %80, %84 : vector<2x32xf32>
    %c0_39 = arith.constant 0 : index
    %c0_40 = arith.constant 0 : index
    %86 = vector.load %arg7[%c0_39, %c0_40] : memref<2x32xf32, #tpu.memory_space<vmem>>, vector<2x32xf32>
    tpu.vector_store %arg7[%c0_39, %c0_40], %85 {strides = array<i32>} : memref<2x32xf32, #tpu.memory_space<vmem>>, vector<2x32xf32>,
    %c0_41 = arith.constant 0 : index
    %c0_42 = arith.constant 0 : index
    %87 = vector.load %arg8[%c0_41, %c0_42] : memref<2x32xf32, #tpu.memory_space<vmem>>, vector<2x32xf32>
    tpu.vector_store %arg8[%c0_41, %c0_42], %83 {strides = array<i32>} : memref<2x32xf32, #tpu.memory_space<vmem>>, vector<2x32xf32>,
    %88 = arith.index_cast %c1_i32 : i32 to index
    %c0_43 = arith.constant 0 : index
    %c0_44 = arith.constant 0 : index
    %89 = vector.load %arg10[%88, %c0_43, %c0_44] : memref<8x2x32xf32, #tpu.memory_space<vmem>>, vector<1x2x32xf32>
    %90 = vector.shape_cast %89 : vector<1x2x32xf32> to vector<2x32xf32>
    %91 = vector.shape_cast %85 : vector<2x32xf32> to vector<1x2x32xf32>
    tpu.vector_store %arg10[%88, %c0_43, %c0_44], %91 {strides = array<i32>} : memref<8x2x32xf32, #tpu.memory_space<vmem>>, vector<1x2x32xf32>,
    %c2_i32 = arith.constant 2 : i32
    %c0_45 = arith.constant 0 : index
    %c0_46 = arith.constant 0 : index
    %92 = vector.load %arg7[%c0_45, %c0_46] : memref<2x32xf32, #tpu.memory_space<vmem>>, vector<2x32xf32>
    %c0_47 = arith.constant 0 : index
    %c0_48 = arith.constant 0 : index
    %93 = vector.load %arg8[%c0_47, %c0_48] : memref<2x32xf32, #tpu.memory_space<vmem>>, vector<2x32xf32>
    %94 = arith.index_cast %c2_i32 : i32 to index
    %c0_49 = arith.constant 0 : index
    %c0_50 = arith.constant 0 : index
    %95 = vector.load %arg9[%94, %c0_49, %c0_50] : memref<8x2x128xf32, #tpu.memory_space<vmem>>, vector<1x2x128xf32>
    %96 = vector.shape_cast %95 : vector<1x2x128xf32> to vector<2x128xf32>
    %97 = arith.truncf %92 : vector<2x32xf32> to vector<2x32xbf16>
    %cst_51 = arith.constant dense<0.000000e+00> : vector<2x128xf32>
    %98 = tpu.matmul %97, %13, %cst_51 {dimension_numbers = #tpu.dot_dimension_numbers<[1], [0], [0], [1], [0, 0, 1, 1], [], []>} : vector<2x32xbf16>, vector<32x128xbf16>, vector<2x128xf32> -> vector<2x128xf32>
    %99 = arith.addf %96, %98 : vector<2x128xf32>
    %100 = vector.extract_strided_slice %99 {offsets = [0, 0], sizes = [2, 32], strides = [1, 1]} : vector<2x128xf32> to vector<2x32xf32>
    %101 = arith.negf %100 : vector<2x32xf32>
    %102 = math.exp %101 : vector<2x32xf32>
    %cst_52 = arith.constant 1.000000e+00 : f32
    %103 = vector.broadcast %cst_52 : f32 to vector<2x32xf32>
    %104 = arith.addf %103, %102 : vector<2x32xf32>
    %105 = arith.divf %103, %104 : vector<2x32xf32>
    %106 = vector.extract_strided_slice %99 {offsets = [0, 32], sizes = [2, 32], strides = [1, 1]} : vector<2x128xf32> to vector<2x32xf32>
    %107 = arith.negf %106 : vector<2x32xf32>
    %108 = math.exp %107 : vector<2x32xf32>
    %cst_53 = arith.constant 1.000000e+00 : f32
    %109 = vector.broadcast %cst_53 : f32 to vector<2x32xf32>
    %110 = arith.addf %109, %108 : vector<2x32xf32>
    %111 = arith.divf %109, %110 : vector<2x32xf32>
    %112 = vector.extract_strided_slice %99 {offsets = [0, 64], sizes = [2, 32], strides = [1, 1]} : vector<2x128xf32> to vector<2x32xf32>
    %113 = math.tanh %112 : vector<2x32xf32>
    %114 = vector.extract_strided_slice %99 {offsets = [0, 96], sizes = [2, 32], strides = [1, 1]} : vector<2x128xf32> to vector<2x32xf32>
    %115 = arith.negf %114 : vector<2x32xf32>
    %116 = math.exp %115 : vector<2x32xf32>
    %cst_54 = arith.constant 1.000000e+00 : f32
    %117 = vector.broadcast %cst_54 : f32 to vector<2x32xf32>
    %118 = arith.addf %117, %116 : vector<2x32xf32>
    %119 = arith.divf %117, %118 : vector<2x32xf32>
    %120 = arith.mulf %111, %93 : vector<2x32xf32>
    %121 = arith.mulf %105, %113 : vector<2x32xf32>
    %122 = arith.addf %120, %121 : vector<2x32xf32>
    %123 = math.tanh %122 : vector<2x32xf32>
    %124 = arith.mulf %119, %123 : vector<2x32xf32>
    %c0_55 = arith.constant 0 : index
    %c0_56 = arith.constant 0 : index
    %125 = vector.load %arg7[%c0_55, %c0_56] : memref<2x32xf32, #tpu.memory_space<vmem>>, vector<2x32xf32>
    tpu.vector_store %arg7[%c0_55, %c0_56], %124 {strides = array<i32>} : memref<2x32xf32, #tpu.memory_space<vmem>>, vector<2x32xf32>,
    %c0_57 = arith.constant 0 : index
    %c0_58 = arith.constant 0 : index
    %126 = vector.load %arg8[%c0_57, %c0_58] : memref<2x32xf32, #tpu.memory_space<vmem>>, vector<2x32xf32>
    tpu.vector_store %arg8[%c0_57, %c0_58], %122 {strides = array<i32>} : memref<2x32xf32, #tpu.memory_space<vmem>>, vector<2x32xf32>,
    %127 = arith.index_cast %c2_i32 : i32 to index
    %c0_59 = arith.constant 0 : index
    %c0_60 = arith.constant 0 : index
    %128 = vector.load %arg10[%127, %c0_59, %c0_60] : memref<8x2x32xf32, #tpu.memory_space<vmem>>, vector<1x2x32xf32>
    %129 = vector.shape_cast %128 : vector<1x2x32xf32> to vector<2x32xf32>
    %130 = vector.shape_cast %124 : vector<2x32xf32> to vector<1x2x32xf32>
    tpu.vector_store %arg10[%127, %c0_59, %c0_60], %130 {strides = array<i32>} : memref<8x2x32xf32, #tpu.memory_space<vmem>>, vector<1x2x32xf32>,
    %c3_i32 = arith.constant 3 : i32
    %c0_61 = arith.constant 0 : index
    %c0_62 = arith.constant 0 : index
    %131 = vector.load %arg7[%c0_61, %c0_62] : memref<2x32xf32, #tpu.memory_space<vmem>>, vector<2x32xf32>
    %c0_63 = arith.constant 0 : index
    %c0_64 = arith.constant 0 : index
    %132 = vector.load %arg8[%c0_63, %c0_64] : memref<2x32xf32, #tpu.memory_space<vmem>>, vector<2x32xf32>
    %133 = arith.index_cast %c3_i32 : i32 to index
    %c0_65 = arith.constant 0 : index
    %c0_66 = arith.constant 0 : index
    %134 = vector.load %arg9[%133, %c0_65, %c0_66] : memref<8x2x128xf32, #tpu.memory_space<vmem>>, vector<1x2x128xf32>
    %135 = vector.shape_cast %134 : vector<1x2x128xf32> to vector<2x128xf32>
    %136 = arith.truncf %131 : vector<2x32xf32> to vector<2x32xbf16>
    %cst_67 = arith.constant dense<0.000000e+00> : vector<2x128xf32>
    %137 = tpu.matmul %136, %13, %cst_67 {dimension_numbers = #tpu.dot_dimension_numbers<[1], [0], [0], [1], [0, 0, 1, 1], [], []>} : vector<2x32xbf16>, vector<32x128xbf16>, vector<2x128xf32> -> vector<2x128xf32>
    %138 = arith.addf %135, %137 : vector<2x128xf32>
    %139 = vector.extract_strided_slice %138 {offsets = [0, 0], sizes = [2, 32], strides = [1, 1]} : vector<2x128xf32> to vector<2x32xf32>
    %140 = arith.negf %139 : vector<2x32xf32>
    %141 = math.exp %140 : vector<2x32xf32>
    %cst_68 = arith.constant 1.000000e+00 : f32
    %142 = vector.broadcast %cst_68 : f32 to vector<2x32xf32>
    %143 = arith.addf %142, %141 : vector<2x32xf32>
    %144 = arith.divf %142, %143 : vector<2x32xf32>
    %145 = vector.extract_strided_slice %138 {offsets = [0, 32], sizes = [2, 32], strides = [1, 1]} : vector<2x128xf32> to vector<2x32xf32>
    %146 = arith.negf %145 : vector<2x32xf32>
    %147 = math.exp %146 : vector<2x32xf32>
    %cst_69 = arith.constant 1.000000e+00 : f32
    %148 = vector.broadcast %cst_69 : f32 to vector<2x32xf32>
    %149 = arith.addf %148, %147 : vector<2x32xf32>
    %150 = arith.divf %148, %149 : vector<2x32xf32>
    %151 = vector.extract_strided_slice %138 {offsets = [0, 64], sizes = [2, 32], strides = [1, 1]} : vector<2x128xf32> to vector<2x32xf32>
    %152 = math.tanh %151 : vector<2x32xf32>
    %153 = vector.extract_strided_slice %138 {offsets = [0, 96], sizes = [2, 32], strides = [1, 1]} : vector<2x128xf32> to vector<2x32xf32>
    %154 = arith.negf %153 : vector<2x32xf32>
    %155 = math.exp %154 : vector<2x32xf32>
    %cst_70 = arith.constant 1.000000e+00 : f32
    %156 = vector.broadcast %cst_70 : f32 to vector<2x32xf32>
    %157 = arith.addf %156, %155 : vector<2x32xf32>
    %158 = arith.divf %156, %157 : vector<2x32xf32>
    %159 = arith.mulf %150, %132 : vector<2x32xf32>
    %160 = arith.mulf %144, %152 : vector<2x32xf32>
    %161 = arith.addf %159, %160 : vector<2x32xf32>
    %162 = math.tanh %161 : vector<2x32xf32>
    %163 = arith.mulf %158, %162 : vector<2x32xf32>
    %c0_71 = arith.constant 0 : index
    %c0_72 = arith.constant 0 : index
    %164 = vector.load %arg7[%c0_71, %c0_72] : memref<2x32xf32, #tpu.memory_space<vmem>>, vector<2x32xf32>
    tpu.vector_store %arg7[%c0_71, %c0_72], %163 {strides = array<i32>} : memref<2x32xf32, #tpu.memory_space<vmem>>, vector<2x32xf32>,
    %c0_73 = arith.constant 0 : index
    %c0_74 = arith.constant 0 : index
    %165 = vector.load %arg8[%c0_73, %c0_74] : memref<2x32xf32, #tpu.memory_space<vmem>>, vector<2x32xf32>
    tpu.vector_store %arg8[%c0_73, %c0_74], %161 {strides = array<i32>} : memref<2x32xf32, #tpu.memory_space<vmem>>, vector<2x32xf32>,
    %166 = arith.index_cast %c3_i32 : i32 to index
    %c0_75 = arith.constant 0 : index
    %c0_76 = arith.constant 0 : index
    %167 = vector.load %arg10[%166, %c0_75, %c0_76] : memref<8x2x32xf32, #tpu.memory_space<vmem>>, vector<1x2x32xf32>
    %168 = vector.shape_cast %167 : vector<1x2x32xf32> to vector<2x32xf32>
    %169 = vector.shape_cast %163 : vector<2x32xf32> to vector<1x2x32xf32>
    tpu.vector_store %arg10[%166, %c0_75, %c0_76], %169 {strides = array<i32>} : memref<8x2x32xf32, #tpu.memory_space<vmem>>, vector<1x2x32xf32>,
    %c4_i32 = arith.constant 4 : i32
    %c0_77 = arith.constant 0 : index
    %c0_78 = arith.constant 0 : index
    %170 = vector.load %arg7[%c0_77, %c0_78] : memref<2x32xf32, #tpu.memory_space<vmem>>, vector<2x32xf32>
    %c0_79 = arith.constant 0 : index
    %c0_80 = arith.constant 0 : index
    %171 = vector.load %arg8[%c0_79, %c0_80] : memref<2x32xf32, #tpu.memory_space<vmem>>, vector<2x32xf32>
    %172 = arith.index_cast %c4_i32 : i32 to index
    %c0_81 = arith.constant 0 : index
    %c0_82 = arith.constant 0 : index
    %173 = vector.load %arg9[%172, %c0_81, %c0_82] : memref<8x2x128xf32, #tpu.memory_space<vmem>>, vector<1x2x128xf32>
    %174 = vector.shape_cast %173 : vector<1x2x128xf32> to vector<2x128xf32>
    %175 = arith.truncf %170 : vector<2x32xf32> to vector<2x32xbf16>
    %cst_83 = arith.constant dense<0.000000e+00> : vector<2x128xf32>
    %176 = tpu.matmul %175, %13, %cst_83 {dimension_numbers = #tpu.dot_dimension_numbers<[1], [0], [0], [1], [0, 0, 1, 1], [], []>} : vector<2x32xbf16>, vector<32x128xbf16>, vector<2x128xf32> -> vector<2x128xf32>
    %177 = arith.addf %174, %176 : vector<2x128xf32>
    %178 = vector.extract_strided_slice %177 {offsets = [0, 0], sizes = [2, 32], strides = [1, 1]} : vector<2x128xf32> to vector<2x32xf32>
    %179 = arith.negf %178 : vector<2x32xf32>
    %180 = math.exp %179 : vector<2x32xf32>
    %cst_84 = arith.constant 1.000000e+00 : f32
    %181 = vector.broadcast %cst_84 : f32 to vector<2x32xf32>
    %182 = arith.addf %181, %180 : vector<2x32xf32>
    %183 = arith.divf %181, %182 : vector<2x32xf32>
    %184 = vector.extract_strided_slice %177 {offsets = [0, 32], sizes = [2, 32], strides = [1, 1]} : vector<2x128xf32> to vector<2x32xf32>
    %185 = arith.negf %184 : vector<2x32xf32>
    %186 = math.exp %185 : vector<2x32xf32>
    %cst_85 = arith.constant 1.000000e+00 : f32
    %187 = vector.broadcast %cst_85 : f32 to vector<2x32xf32>
    %188 = arith.addf %187, %186 : vector<2x32xf32>
    %189 = arith.divf %187, %188 : vector<2x32xf32>
    %190 = vector.extract_strided_slice %177 {offsets = [0, 64], sizes = [2, 32], strides = [1, 1]} : vector<2x128xf32> to vector<2x32xf32>
    %191 = math.tanh %190 : vector<2x32xf32>
    %192 = vector.extract_strided_slice %177 {offsets = [0, 96], sizes = [2, 32], strides = [1, 1]} : vector<2x128xf32> to vector<2x32xf32>
    %193 = arith.negf %192 : vector<2x32xf32>
    %194 = math.exp %193 : vector<2x32xf32>
    %cst_86 = arith.constant 1.000000e+00 : f32
    %195 = vector.broadcast %cst_86 : f32 to vector<2x32xf32>
    %196 = arith.addf %195, %194 : vector<2x32xf32>
    %197 = arith.divf %195, %196 : vector<2x32xf32>
    %198 = arith.mulf %189, %171 : vector<2x32xf32>
    %199 = arith.mulf %183, %191 : vector<2x32xf32>
    %200 = arith.addf %198, %199 : vector<2x32xf32>
    %201 = math.tanh %200 : vector<2x32xf32>
    %202 = arith.mulf %197, %201 : vector<2x32xf32>
    %c0_87 = arith.constant 0 : index
    %c0_88 = arith.constant 0 : index
    %203 = vector.load %arg7[%c0_87, %c0_88] : memref<2x32xf32, #tpu.memory_space<vmem>>, vector<2x32xf32>
    tpu.vector_store %arg7[%c0_87, %c0_88], %202 {strides = array<i32>} : memref<2x32xf32, #tpu.memory_space<vmem>>, vector<2x32xf32>,
    %c0_89 = arith.constant 0 : index
    %c0_90 = arith.constant 0 : index
    %204 = vector.load %arg8[%c0_89, %c0_90] : memref<2x32xf32, #tpu.memory_space<vmem>>, vector<2x32xf32>
    tpu.vector_store %arg8[%c0_89, %c0_90], %200 {strides = array<i32>} : memref<2x32xf32, #tpu.memory_space<vmem>>, vector<2x32xf32>,
    %205 = arith.index_cast %c4_i32 : i32 to index
    %c0_91 = arith.constant 0 : index
    %c0_92 = arith.constant 0 : index
    %206 = vector.load %arg10[%205, %c0_91, %c0_92] : memref<8x2x32xf32, #tpu.memory_space<vmem>>, vector<1x2x32xf32>
    %207 = vector.shape_cast %206 : vector<1x2x32xf32> to vector<2x32xf32>
    %208 = vector.shape_cast %202 : vector<2x32xf32> to vector<1x2x32xf32>
    tpu.vector_store %arg10[%205, %c0_91, %c0_92], %208 {strides = array<i32>} : memref<8x2x32xf32, #tpu.memory_space<vmem>>, vector<1x2x32xf32>,
    %c5_i32 = arith.constant 5 : i32
    %c0_93 = arith.constant 0 : index
    %c0_94 = arith.constant 0 : index
    %209 = vector.load %arg7[%c0_93, %c0_94] : memref<2x32xf32, #tpu.memory_space<vmem>>, vector<2x32xf32>
    %c0_95 = arith.constant 0 : index
    %c0_96 = arith.constant 0 : index
    %210 = vector.load %arg8[%c0_95, %c0_96] : memref<2x32xf32, #tpu.memory_space<vmem>>, vector<2x32xf32>
    %211 = arith.index_cast %c5_i32 : i32 to index
    %c0_97 = arith.constant 0 : index
    %c0_98 = arith.constant 0 : index
    %212 = vector.load %arg9[%211, %c0_97, %c0_98] : memref<8x2x128xf32, #tpu.memory_space<vmem>>, vector<1x2x128xf32>
    %213 = vector.shape_cast %212 : vector<1x2x128xf32> to vector<2x128xf32>
    %214 = arith.truncf %209 : vector<2x32xf32> to vector<2x32xbf16>
    %cst_99 = arith.constant dense<0.000000e+00> : vector<2x128xf32>
    %215 = tpu.matmul %214, %13, %cst_99 {dimension_numbers = #tpu.dot_dimension_numbers<[1], [0], [0], [1], [0, 0, 1, 1], [], []>} : vector<2x32xbf16>, vector<32x128xbf16>, vector<2x128xf32> -> vector<2x128xf32>
    %216 = arith.addf %213, %215 : vector<2x128xf32>
    %217 = vector.extract_strided_slice %216 {offsets = [0, 0], sizes = [2, 32], strides = [1, 1]} : vector<2x128xf32> to vector<2x32xf32>
    %218 = arith.negf %217 : vector<2x32xf32>
    %219 = math.exp %218 : vector<2x32xf32>
    %cst_100 = arith.constant 1.000000e+00 : f32
    %220 = vector.broadcast %cst_100 : f32 to vector<2x32xf32>
    %221 = arith.addf %220, %219 : vector<2x32xf32>
    %222 = arith.divf %220, %221 : vector<2x32xf32>
    %223 = vector.extract_strided_slice %216 {offsets = [0, 32], sizes = [2, 32], strides = [1, 1]} : vector<2x128xf32> to vector<2x32xf32>
    %224 = arith.negf %223 : vector<2x32xf32>
    %225 = math.exp %224 : vector<2x32xf32>
    %cst_101 = arith.constant 1.000000e+00 : f32
    %226 = vector.broadcast %cst_101 : f32 to vector<2x32xf32>
    %227 = arith.addf %226, %225 : vector<2x32xf32>
    %228 = arith.divf %226, %227 : vector<2x32xf32>
    %229 = vector.extract_strided_slice %216 {offsets = [0, 64], sizes = [2, 32], strides = [1, 1]} : vector<2x128xf32> to vector<2x32xf32>
    %230 = math.tanh %229 : vector<2x32xf32>
    %231 = vector.extract_strided_slice %216 {offsets = [0, 96], sizes = [2, 32], strides = [1, 1]} : vector<2x128xf32> to vector<2x32xf32>
    %232 = arith.negf %231 : vector<2x32xf32>
    %233 = math.exp %232 : vector<2x32xf32>
    %cst_102 = arith.constant 1.000000e+00 : f32
    %234 = vector.broadcast %cst_102 : f32 to vector<2x32xf32>
    %235 = arith.addf %234, %233 : vector<2x32xf32>
    %236 = arith.divf %234, %235 : vector<2x32xf32>
    %237 = arith.mulf %228, %210 : vector<2x32xf32>
    %238 = arith.mulf %222, %230 : vector<2x32xf32>
    %239 = arith.addf %237, %238 : vector<2x32xf32>
    %240 = math.tanh %239 : vector<2x32xf32>
    %241 = arith.mulf %236, %240 : vector<2x32xf32>
    %c0_103 = arith.constant 0 : index
    %c0_104 = arith.constant 0 : index
    %242 = vector.load %arg7[%c0_103, %c0_104] : memref<2x32xf32, #tpu.memory_space<vmem>>, vector<2x32xf32>
    tpu.vector_store %arg7[%c0_103, %c0_104], %241 {strides = array<i32>} : memref<2x32xf32, #tpu.memory_space<vmem>>, vector<2x32xf32>,
    %c0_105 = arith.constant 0 : index
    %c0_106 = arith.constant 0 : index
    %243 = vector.load %arg8[%c0_105, %c0_106] : memref<2x32xf32, #tpu.memory_space<vmem>>, vector<2x32xf32>
    tpu.vector_store %arg8[%c0_105, %c0_106], %239 {strides = array<i32>} : memref<2x32xf32, #tpu.memory_space<vmem>>, vector<2x32xf32>,
    %244 = arith.index_cast %c5_i32 : i32 to index
    %c0_107 = arith.constant 0 : index
    %c0_108 = arith.constant 0 : index
    %245 = vector.load %arg10[%244, %c0_107, %c0_108] : memref<8x2x32xf32, #tpu.memory_space<vmem>>, vector<1x2x32xf32>
    %246 = vector.shape_cast %245 : vector<1x2x32xf32> to vector<2x32xf32>
    %247 = vector.shape_cast %241 : vector<2x32xf32> to vector<1x2x32xf32>
    tpu.vector_store %arg10[%244, %c0_107, %c0_108], %247 {strides = array<i32>} : memref<8x2x32xf32, #tpu.memory_space<vmem>>, vector<1x2x32xf32>,
    %c6_i32 = arith.constant 6 : i32
    %c0_109 = arith.constant 0 : index
    %c0_110 = arith.constant 0 : index
    %248 = vector.load %arg7[%c0_109, %c0_110] : memref<2x32xf32, #tpu.memory_space<vmem>>, vector<2x32xf32>
    %c0_111 = arith.constant 0 : index
    %c0_112 = arith.constant 0 : index
    %249 = vector.load %arg8[%c0_111, %c0_112] : memref<2x32xf32, #tpu.memory_space<vmem>>, vector<2x32xf32>
    %250 = arith.index_cast %c6_i32 : i32 to index
    %c0_113 = arith.constant 0 : index
    %c0_114 = arith.constant 0 : index
    %251 = vector.load %arg9[%250, %c0_113, %c0_114] : memref<8x2x128xf32, #tpu.memory_space<vmem>>, vector<1x2x128xf32>
    %252 = vector.shape_cast %251 : vector<1x2x128xf32> to vector<2x128xf32>
    %253 = arith.truncf %248 : vector<2x32xf32> to vector<2x32xbf16>
    %cst_115 = arith.constant dense<0.000000e+00> : vector<2x128xf32>
    %254 = tpu.matmul %253, %13, %cst_115 {dimension_numbers = #tpu.dot_dimension_numbers<[1], [0], [0], [1], [0, 0, 1, 1], [], []>} : vector<2x32xbf16>, vector<32x128xbf16>, vector<2x128xf32> -> vector<2x128xf32>
    %255 = arith.addf %252, %254 : vector<2x128xf32>
    %256 = vector.extract_strided_slice %255 {offsets = [0, 0], sizes = [2, 32], strides = [1, 1]} : vector<2x128xf32> to vector<2x32xf32>
    %257 = arith.negf %256 : vector<2x32xf32>
    %258 = math.exp %257 : vector<2x32xf32>
    %cst_116 = arith.constant 1.000000e+00 : f32
    %259 = vector.broadcast %cst_116 : f32 to vector<2x32xf32>
    %260 = arith.addf %259, %258 : vector<2x32xf32>
    %261 = arith.divf %259, %260 : vector<2x32xf32>
    %262 = vector.extract_strided_slice %255 {offsets = [0, 32], sizes = [2, 32], strides = [1, 1]} : vector<2x128xf32> to vector<2x32xf32>
    %263 = arith.negf %262 : vector<2x32xf32>
    %264 = math.exp %263 : vector<2x32xf32>
    %cst_117 = arith.constant 1.000000e+00 : f32
    %265 = vector.broadcast %cst_117 : f32 to vector<2x32xf32>
    %266 = arith.addf %265, %264 : vector<2x32xf32>
    %267 = arith.divf %265, %266 : vector<2x32xf32>
    %268 = vector.extract_strided_slice %255 {offsets = [0, 64], sizes = [2, 32], strides = [1, 1]} : vector<2x128xf32> to vector<2x32xf32>
    %269 = math.tanh %268 : vector<2x32xf32>
    %270 = vector.extract_strided_slice %255 {offsets = [0, 96], sizes = [2, 32], strides = [1, 1]} : vector<2x128xf32> to vector<2x32xf32>
    %271 = arith.negf %270 : vector<2x32xf32>
    %272 = math.exp %271 : vector<2x32xf32>
    %cst_118 = arith.constant 1.000000e+00 : f32
    %273 = vector.broadcast %cst_118 : f32 to vector<2x32xf32>
    %274 = arith.addf %273, %272 : vector<2x32xf32>
    %275 = arith.divf %273, %274 : vector<2x32xf32>
    %276 = arith.mulf %267, %249 : vector<2x32xf32>
    %277 = arith.mulf %261, %269 : vector<2x32xf32>
    %278 = arith.addf %276, %277 : vector<2x32xf32>
    %279 = math.tanh %278 : vector<2x32xf32>
    %280 = arith.mulf %275, %279 : vector<2x32xf32>
    %c0_119 = arith.constant 0 : index
    %c0_120 = arith.constant 0 : index
    %281 = vector.load %arg7[%c0_119, %c0_120] : memref<2x32xf32, #tpu.memory_space<vmem>>, vector<2x32xf32>
    tpu.vector_store %arg7[%c0_119, %c0_120], %280 {strides = array<i32>} : memref<2x32xf32, #tpu.memory_space<vmem>>, vector<2x32xf32>,
    %c0_121 = arith.constant 0 : index
    %c0_122 = arith.constant 0 : index
    %282 = vector.load %arg8[%c0_121, %c0_122] : memref<2x32xf32, #tpu.memory_space<vmem>>, vector<2x32xf32>
    tpu.vector_store %arg8[%c0_121, %c0_122], %278 {strides = array<i32>} : memref<2x32xf32, #tpu.memory_space<vmem>>, vector<2x32xf32>,
    %283 = arith.index_cast %c6_i32 : i32 to index
    %c0_123 = arith.constant 0 : index
    %c0_124 = arith.constant 0 : index
    %284 = vector.load %arg10[%283, %c0_123, %c0_124] : memref<8x2x32xf32, #tpu.memory_space<vmem>>, vector<1x2x32xf32>
    %285 = vector.shape_cast %284 : vector<1x2x32xf32> to vector<2x32xf32>
    %286 = vector.shape_cast %280 : vector<2x32xf32> to vector<1x2x32xf32>
    tpu.vector_store %arg10[%283, %c0_123, %c0_124], %286 {strides = array<i32>} : memref<8x2x32xf32, #tpu.memory_space<vmem>>, vector<1x2x32xf32>,
    %c7_i32 = arith.constant 7 : i32
    %c0_125 = arith.constant 0 : index
    %c0_126 = arith.constant 0 : index
    %287 = vector.load %arg7[%c0_125, %c0_126] : memref<2x32xf32, #tpu.memory_space<vmem>>, vector<2x32xf32>
    %c0_127 = arith.constant 0 : index
    %c0_128 = arith.constant 0 : index
    %288 = vector.load %arg8[%c0_127, %c0_128] : memref<2x32xf32, #tpu.memory_space<vmem>>, vector<2x32xf32>
    %289 = arith.index_cast %c7_i32 : i32 to index
    %c0_129 = arith.constant 0 : index
    %c0_130 = arith.constant 0 : index
    %290 = vector.load %arg9[%289, %c0_129, %c0_130] : memref<8x2x128xf32, #tpu.memory_space<vmem>>, vector<1x2x128xf32>
    %291 = vector.shape_cast %290 : vector<1x2x128xf32> to vector<2x128xf32>
    %292 = arith.truncf %287 : vector<2x32xf32> to vector<2x32xbf16>
    %cst_131 = arith.constant dense<0.000000e+00> : vector<2x128xf32>
    %293 = tpu.matmul %292, %13, %cst_131 {dimension_numbers = #tpu.dot_dimension_numbers<[1], [0], [0], [1], [0, 0, 1, 1], [], []>} : vector<2x32xbf16>, vector<32x128xbf16>, vector<2x128xf32> -> vector<2x128xf32>
    %294 = arith.addf %291, %293 : vector<2x128xf32>
    %295 = vector.extract_strided_slice %294 {offsets = [0, 0], sizes = [2, 32], strides = [1, 1]} : vector<2x128xf32> to vector<2x32xf32>
    %296 = arith.negf %295 : vector<2x32xf32>
    %297 = math.exp %296 : vector<2x32xf32>
    %cst_132 = arith.constant 1.000000e+00 : f32
    %298 = vector.broadcast %cst_132 : f32 to vector<2x32xf32>
    %299 = arith.addf %298, %297 : vector<2x32xf32>
    %300 = arith.divf %298, %299 : vector<2x32xf32>
    %301 = vector.extract_strided_slice %294 {offsets = [0, 32], sizes = [2, 32], strides = [1, 1]} : vector<2x128xf32> to vector<2x32xf32>
    %302 = arith.negf %301 : vector<2x32xf32>
    %303 = math.exp %302 : vector<2x32xf32>
    %cst_133 = arith.constant 1.000000e+00 : f32
    %304 = vector.broadcast %cst_133 : f32 to vector<2x32xf32>
    %305 = arith.addf %304, %303 : vector<2x32xf32>
    %306 = arith.divf %304, %305 : vector<2x32xf32>
    %307 = vector.extract_strided_slice %294 {offsets = [0, 64], sizes = [2, 32], strides = [1, 1]} : vector<2x128xf32> to vector<2x32xf32>
    %308 = math.tanh %307 : vector<2x32xf32>
    %309 = vector.extract_strided_slice %294 {offsets = [0, 96], sizes = [2, 32], strides = [1, 1]} : vector<2x128xf32> to vector<2x32xf32>
    %310 = arith.negf %309 : vector<2x32xf32>
    %311 = math.exp %310 : vector<2x32xf32>
    %cst_134 = arith.constant 1.000000e+00 : f32
    %312 = vector.broadcast %cst_134 : f32 to vector<2x32xf32>
    %313 = arith.addf %312, %311 : vector<2x32xf32>
    %314 = arith.divf %312, %313 : vector<2x32xf32>
    %315 = arith.mulf %306, %288 : vector<2x32xf32>
    %316 = arith.mulf %300, %308 : vector<2x32xf32>
    %317 = arith.addf %315, %316 : vector<2x32xf32>
    %318 = math.tanh %317 : vector<2x32xf32>
    %319 = arith.mulf %314, %318 : vector<2x32xf32>
    %c0_135 = arith.constant 0 : index
    %c0_136 = arith.constant 0 : index
    %320 = vector.load %arg7[%c0_135, %c0_136] : memref<2x32xf32, #tpu.memory_space<vmem>>, vector<2x32xf32>
    tpu.vector_store %arg7[%c0_135, %c0_136], %319 {strides = array<i32>} : memref<2x32xf32, #tpu.memory_space<vmem>>, vector<2x32xf32>,
    %c0_137 = arith.constant 0 : index
    %c0_138 = arith.constant 0 : index
    %321 = vector.load %arg8[%c0_137, %c0_138] : memref<2x32xf32, #tpu.memory_space<vmem>>, vector<2x32xf32>
    tpu.vector_store %arg8[%c0_137, %c0_138], %317 {strides = array<i32>} : memref<2x32xf32, #tpu.memory_space<vmem>>, vector<2x32xf32>,
    %322 = arith.index_cast %c7_i32 : i32 to index
    %c0_139 = arith.constant 0 : index
    %c0_140 = arith.constant 0 : index
    %323 = vector.load %arg10[%322, %c0_139, %c0_140] : memref<8x2x32xf32, #tpu.memory_space<vmem>>, vector<1x2x32xf32>
    %324 = vector.shape_cast %323 : vector<1x2x32xf32> to vector<2x32xf32>
    %325 = vector.shape_cast %319 : vector<2x32xf32> to vector<1x2x32xf32>
    tpu.vector_store %arg10[%322, %c0_139, %c0_140], %325 {strides = array<i32>} : memref<8x2x32xf32, #tpu.memory_space<vmem>>, vector<1x2x32xf32>,
    %c8_i32 = arith.constant 8 : i32
    %c0_141 = arith.constant 0 : index
    %c0_142 = arith.constant 0 : index
    %c0_143 = arith.constant 0 : index
    %326 = vector.load %arg10[%c0_141, %c0_142, %c0_143] : memref<8x2x32xf32, #tpu.memory_space<vmem>>, vector<8x2x32xf32>
    %327 = vector.shape_cast %326 : vector<8x2x32xf32> to vector<16x32xf32>
    %328 = arith.truncf %327 : vector<16x32xf32> to vector<16x32xbf16>
    %c0_144 = arith.constant 0 : index
    %c0_145 = arith.constant 0 : index
    %329 = vector.load %arg5[%c0_144, %c0_145] : memref<32x16xbf16, #tpu.memory_space<vmem>>, vector<32x16xbf16>
    %cst_146 = arith.constant dense<0.000000e+00> : vector<16x16xf32>
    %330 = tpu.matmul %328, %329, %cst_146 {dimension_numbers = #tpu.dot_dimension_numbers<[1], [0], [0], [1], [0, 0, 1, 1], [], []>} : vector<16x32xbf16>, vector<32x16xbf16>, vector<16x16xf32> -> vector<16x16xf32>
    %331 = vector.shape_cast %330 : vector<16x16xf32> to vector<8x2x16xf32>
    %332 = arith.truncf %331 : vector<8x2x16xf32> to vector<8x2x16xbf16>
    %c0_147 = arith.constant 0 : index
    %c0_148 = arith.constant 0 : index
    %c0_149 = arith.constant 0 : index
    %333 = vector.load %arg6[%c0_147, %c0_148, %c0_149] : memref<8x2x16xbf16, #tpu.memory_space<vmem>>, vector<8x2x16xbf16>
    tpu.vector_store %arg6[%c0_147, %c0_148, %c0_149], %332 {strides = array<i32>} : memref<8x2x16xbf16, #tpu.memory_space<vmem>>, vector<8x2x16xbf16>,
    return
  }
  func.func @transform_0(%arg0: i32) -> (i32, i32, i32) {
    %c0_i32 = arith.constant 0 : i32
    %c0_i32_0 = arith.constant 0 : i32
    %c0_i32_1 = arith.constant 0 : i32
    return %arg0, %c0_i32, %c0_i32_0 : i32, i32, i32
  }
  func.func @transform_1(%arg0: i32) -> (i32, i32) {
    %c0_i32 = arith.constant 0 : i32
    %c0_i32_0 = arith.constant 0 : i32
    %c0_i32_1 = arith.constant 0 : i32
    return %c0_i32, %c0_i32_0 : i32, i32
  }
  func.func @transform_2(%arg0: i32) -> (i32, i32) {
    %c0_i32 = arith.constant 0 : i32
    %c0_i32_0 = arith.constant 0 : i32
    %c0_i32_1 = arith.constant 0 : i32
    return %c0_i32, %c0_i32_0 : i32, i32
  }
  func.func @transform_3(%arg0: i32) -> (i32, i32) {
    %c0_i32 = arith.constant 0 : i32
    %c0_i32_0 = arith.constant 0 : i32
    %c0_i32_1 = arith.constant 0 : i32
    return %c0_i32, %c0_i32_0 : i32, i32
  }
  func.func @transform_4(%arg0: i32) -> (i32, i32) {
    %c0_i32 = arith.constant 0 : i32
    %c0_i32_0 = arith.constant 0 : i32
    %c0_i32_1 = arith.constant 0 : i32
    return %c0_i32, %c0_i32_0 : i32, i32
  }
  func.func @transform_5(%arg0: i32) -> (i32, i32, i32) {
    %c0_i32 = arith.constant 0 : i32
    %c0_i32_0 = arith.constant 0 : i32
    %c0_i32_1 = arith.constant 0 : i32
    return %arg0, %c0_i32, %c0_i32_0 : i32, i32, i32
  }
}

module attributes {stable_mosaic.version = 11 : i64} {
  func.func @_lstm_proj_last_kernel(%arg0: i32, %arg1: memref<8x2x16xbf16, #tpu.memory_space<vmem>>, %arg2: memref<16x128xbf16, #tpu.memory_space<vmem>>, %arg3: memref<32x128xbf16, #tpu.memory_space<vmem>>, %arg4: memref<1x128xf32, #tpu.memory_space<vmem>>, %arg5: memref<32x16xbf16, #tpu.memory_space<vmem>>, %arg6: memref<2x16xf32, #tpu.memory_space<vmem>>, %arg7: memref<2x32xf32, #tpu.memory_space<vmem>>, %arg8: memref<2x32xf32, #tpu.memory_space<vmem>>, %arg9: memref<8x2x128xf32, #tpu.memory_space<vmem>>) attributes {dimension_semantics = [#tpu.dimension_semantics<arbitrary>], iteration_bounds = array<i64: 2>, scalar_prefetch = 0 : i64, scratch_operands = 3 : i64, tpu.core_type = #tpu.core_type<tc>, window_params = [{transform_indices = @transform_0, window_bounds = array<i64: 8, 2, 16>}, {pipeline_mode = #tpu.pipeline_mode<synchronous>, transform_indices = @transform_1, window_bounds = array<i64: 16, 128>}, {pipeline_mode = #tpu.pipeline_mode<synchronous>, transform_indices = @transform_2, window_bounds = array<i64: 32, 128>}, {pipeline_mode = #tpu.pipeline_mode<synchronous>, transform_indices = @transform_3, window_bounds = array<i64: 1, 128>}, {pipeline_mode = #tpu.pipeline_mode<synchronous>, transform_indices = @transform_4, window_bounds = array<i64: 32, 16>}, {pipeline_mode = #tpu.pipeline_mode<synchronous>, transform_indices = @transform_5, window_bounds = array<i64: 2, 16>}]} {
    %c0_i32 = arith.constant 0 : i32
    %0 = arith.cmpi eq, %arg0, %c0_i32 : i32
    %1 = arith.extui %0 : i1 to i32
    %c0_i32_0 = arith.constant 0 : i32
    %2 = arith.cmpi ne, %1, %c0_i32_0 : i32
    scf.if %2 {
      %cst_127 = arith.constant 0.000000e+00 : f32
      %296 = vector.broadcast %cst_127 : f32 to vector<2x32xf32>
      %c0_128 = arith.constant 0 : index
      %c0_129 = arith.constant 0 : index
      %297 = vector.load %arg7[%c0_128, %c0_129] : memref<2x32xf32, #tpu.memory_space<vmem>>, vector<2x32xf32>
      tpu.vector_store %arg7[%c0_128, %c0_129], %296 {strides = array<i32>} : memref<2x32xf32, #tpu.memory_space<vmem>>, vector<2x32xf32>,
      %cst_130 = arith.constant 0.000000e+00 : f32
      %298 = vector.broadcast %cst_130 : f32 to vector<2x32xf32>
      %c0_131 = arith.constant 0 : index
      %c0_132 = arith.constant 0 : index
      %299 = vector.load %arg8[%c0_131, %c0_132] : memref<2x32xf32, #tpu.memory_space<vmem>>, vector<2x32xf32>
      tpu.vector_store %arg8[%c0_131, %c0_132], %298 {strides = array<i32>} : memref<2x32xf32, #tpu.memory_space<vmem>>, vector<2x32xf32>,
    } else {
    }
    %c0 = arith.constant 0 : index
    %c0_1 = arith.constant 0 : index
    %c0_2 = arith.constant 0 : index
    %3 = vector.load %arg1[%c0, %c0_1, %c0_2] : memref<8x2x16xbf16, #tpu.memory_space<vmem>>, vector<8x2x16xbf16>
    %4 = vector.shape_cast %3 : vector<8x2x16xbf16> to vector<16x16xbf16>
    %c0_3 = arith.constant 0 : index
    %c0_4 = arith.constant 0 : index
    %5 = vector.load %arg2[%c0_3, %c0_4] : memref<16x128xbf16, #tpu.memory_space<vmem>>, vector<16x128xbf16>
    %cst = arith.constant dense<0.000000e+00> : vector<16x128xf32>
    %6 = tpu.matmul %4, %5, %cst {dimension_numbers = #tpu.dot_dimension_numbers<[1], [0], [0], [1], [0, 0, 1, 1], [], []>} : vector<16x16xbf16>, vector<16x128xbf16>, vector<16x128xf32> -> vector<16x128xf32>
    %c0_5 = arith.constant 0 : index
    %c0_6 = arith.constant 0 : index
    %7 = vector.load %arg4[%c0_5, %c0_6] : memref<1x128xf32, #tpu.memory_space<vmem>>, vector<1x128xf32>
    %8 = vector.broadcast %7 : vector<1x128xf32> to vector<16x128xf32>
    %9 = arith.addf %6, %8 : vector<16x128xf32>
    %10 = vector.shape_cast %9 : vector<16x128xf32> to vector<8x2x128xf32>
    %c0_7 = arith.constant 0 : index
    %c0_8 = arith.constant 0 : index
    %c0_9 = arith.constant 0 : index
    %11 = vector.load %arg9[%c0_7, %c0_8, %c0_9] : memref<8x2x128xf32, #tpu.memory_space<vmem>>, vector<8x2x128xf32>
    tpu.vector_store %arg9[%c0_7, %c0_8, %c0_9], %10 {strides = array<i32>} : memref<8x2x128xf32, #tpu.memory_space<vmem>>, vector<8x2x128xf32>,
    %c0_10 = arith.constant 0 : index
    %c0_11 = arith.constant 0 : index
    %12 = vector.load %arg3[%c0_10, %c0_11] : memref<32x128xbf16, #tpu.memory_space<vmem>>, vector<32x128xbf16>
    %c0_i32_12 = arith.constant 0 : i32
    %c0_13 = arith.constant 0 : index
    %c0_14 = arith.constant 0 : index
    %13 = vector.load %arg7[%c0_13, %c0_14] : memref<2x32xf32, #tpu.memory_space<vmem>>, vector<2x32xf32>
    %c0_15 = arith.constant 0 : index
    %c0_16 = arith.constant 0 : index
    %14 = vector.load %arg8[%c0_15, %c0_16] : memref<2x32xf32, #tpu.memory_space<vmem>>, vector<2x32xf32>
    %15 = arith.index_cast %c0_i32_12 : i32 to index
    %c0_17 = arith.constant 0 : index
    %c0_18 = arith.constant 0 : index
    %16 = vector.load %arg9[%15, %c0_17, %c0_18] : memref<8x2x128xf32, #tpu.memory_space<vmem>>, vector<1x2x128xf32>
    %17 = vector.shape_cast %16 : vector<1x2x128xf32> to vector<2x128xf32>
    %18 = arith.truncf %13 : vector<2x32xf32> to vector<2x32xbf16>
    %cst_19 = arith.constant dense<0.000000e+00> : vector<2x128xf32>
    %19 = tpu.matmul %18, %12, %cst_19 {dimension_numbers = #tpu.dot_dimension_numbers<[1], [0], [0], [1], [0, 0, 1, 1], [], []>} : vector<2x32xbf16>, vector<32x128xbf16>, vector<2x128xf32> -> vector<2x128xf32>
    %20 = arith.addf %17, %19 : vector<2x128xf32>
    %21 = vector.extract_strided_slice %20 {offsets = [0, 0], sizes = [2, 32], strides = [1, 1]} : vector<2x128xf32> to vector<2x32xf32>
    %22 = arith.negf %21 : vector<2x32xf32>
    %23 = math.exp %22 : vector<2x32xf32>
    %cst_20 = arith.constant 1.000000e+00 : f32
    %24 = vector.broadcast %cst_20 : f32 to vector<2x32xf32>
    %25 = arith.addf %24, %23 : vector<2x32xf32>
    %26 = arith.divf %24, %25 : vector<2x32xf32>
    %27 = vector.extract_strided_slice %20 {offsets = [0, 32], sizes = [2, 32], strides = [1, 1]} : vector<2x128xf32> to vector<2x32xf32>
    %28 = arith.negf %27 : vector<2x32xf32>
    %29 = math.exp %28 : vector<2x32xf32>
    %cst_21 = arith.constant 1.000000e+00 : f32
    %30 = vector.broadcast %cst_21 : f32 to vector<2x32xf32>
    %31 = arith.addf %30, %29 : vector<2x32xf32>
    %32 = arith.divf %30, %31 : vector<2x32xf32>
    %33 = vector.extract_strided_slice %20 {offsets = [0, 64], sizes = [2, 32], strides = [1, 1]} : vector<2x128xf32> to vector<2x32xf32>
    %34 = math.tanh %33 : vector<2x32xf32>
    %35 = vector.extract_strided_slice %20 {offsets = [0, 96], sizes = [2, 32], strides = [1, 1]} : vector<2x128xf32> to vector<2x32xf32>
    %36 = arith.negf %35 : vector<2x32xf32>
    %37 = math.exp %36 : vector<2x32xf32>
    %cst_22 = arith.constant 1.000000e+00 : f32
    %38 = vector.broadcast %cst_22 : f32 to vector<2x32xf32>
    %39 = arith.addf %38, %37 : vector<2x32xf32>
    %40 = arith.divf %38, %39 : vector<2x32xf32>
    %41 = arith.mulf %32, %14 : vector<2x32xf32>
    %42 = arith.mulf %26, %34 : vector<2x32xf32>
    %43 = arith.addf %41, %42 : vector<2x32xf32>
    %44 = math.tanh %43 : vector<2x32xf32>
    %45 = arith.mulf %40, %44 : vector<2x32xf32>
    %c0_23 = arith.constant 0 : index
    %c0_24 = arith.constant 0 : index
    %46 = vector.load %arg7[%c0_23, %c0_24] : memref<2x32xf32, #tpu.memory_space<vmem>>, vector<2x32xf32>
    tpu.vector_store %arg7[%c0_23, %c0_24], %45 {strides = array<i32>} : memref<2x32xf32, #tpu.memory_space<vmem>>, vector<2x32xf32>,
    %c0_25 = arith.constant 0 : index
    %c0_26 = arith.constant 0 : index
    %47 = vector.load %arg8[%c0_25, %c0_26] : memref<2x32xf32, #tpu.memory_space<vmem>>, vector<2x32xf32>
    tpu.vector_store %arg8[%c0_25, %c0_26], %43 {strides = array<i32>} : memref<2x32xf32, #tpu.memory_space<vmem>>, vector<2x32xf32>,
    %c1_i32 = arith.constant 1 : i32
    %c0_27 = arith.constant 0 : index
    %c0_28 = arith.constant 0 : index
    %48 = vector.load %arg7[%c0_27, %c0_28] : memref<2x32xf32, #tpu.memory_space<vmem>>, vector<2x32xf32>
    %c0_29 = arith.constant 0 : index
    %c0_30 = arith.constant 0 : index
    %49 = vector.load %arg8[%c0_29, %c0_30] : memref<2x32xf32, #tpu.memory_space<vmem>>, vector<2x32xf32>
    %50 = arith.index_cast %c1_i32 : i32 to index
    %c0_31 = arith.constant 0 : index
    %c0_32 = arith.constant 0 : index
    %51 = vector.load %arg9[%50, %c0_31, %c0_32] : memref<8x2x128xf32, #tpu.memory_space<vmem>>, vector<1x2x128xf32>
    %52 = vector.shape_cast %51 : vector<1x2x128xf32> to vector<2x128xf32>
    %53 = arith.truncf %48 : vector<2x32xf32> to vector<2x32xbf16>
    %cst_33 = arith.constant dense<0.000000e+00> : vector<2x128xf32>
    %54 = tpu.matmul %53, %12, %cst_33 {dimension_numbers = #tpu.dot_dimension_numbers<[1], [0], [0], [1], [0, 0, 1, 1], [], []>} : vector<2x32xbf16>, vector<32x128xbf16>, vector<2x128xf32> -> vector<2x128xf32>
    %55 = arith.addf %52, %54 : vector<2x128xf32>
    %56 = vector.extract_strided_slice %55 {offsets = [0, 0], sizes = [2, 32], strides = [1, 1]} : vector<2x128xf32> to vector<2x32xf32>
    %57 = arith.negf %56 : vector<2x32xf32>
    %58 = math.exp %57 : vector<2x32xf32>
    %cst_34 = arith.constant 1.000000e+00 : f32
    %59 = vector.broadcast %cst_34 : f32 to vector<2x32xf32>
    %60 = arith.addf %59, %58 : vector<2x32xf32>
    %61 = arith.divf %59, %60 : vector<2x32xf32>
    %62 = vector.extract_strided_slice %55 {offsets = [0, 32], sizes = [2, 32], strides = [1, 1]} : vector<2x128xf32> to vector<2x32xf32>
    %63 = arith.negf %62 : vector<2x32xf32>
    %64 = math.exp %63 : vector<2x32xf32>
    %cst_35 = arith.constant 1.000000e+00 : f32
    %65 = vector.broadcast %cst_35 : f32 to vector<2x32xf32>
    %66 = arith.addf %65, %64 : vector<2x32xf32>
    %67 = arith.divf %65, %66 : vector<2x32xf32>
    %68 = vector.extract_strided_slice %55 {offsets = [0, 64], sizes = [2, 32], strides = [1, 1]} : vector<2x128xf32> to vector<2x32xf32>
    %69 = math.tanh %68 : vector<2x32xf32>
    %70 = vector.extract_strided_slice %55 {offsets = [0, 96], sizes = [2, 32], strides = [1, 1]} : vector<2x128xf32> to vector<2x32xf32>
    %71 = arith.negf %70 : vector<2x32xf32>
    %72 = math.exp %71 : vector<2x32xf32>
    %cst_36 = arith.constant 1.000000e+00 : f32
    %73 = vector.broadcast %cst_36 : f32 to vector<2x32xf32>
    %74 = arith.addf %73, %72 : vector<2x32xf32>
    %75 = arith.divf %73, %74 : vector<2x32xf32>
    %76 = arith.mulf %67, %49 : vector<2x32xf32>
    %77 = arith.mulf %61, %69 : vector<2x32xf32>
    %78 = arith.addf %76, %77 : vector<2x32xf32>
    %79 = math.tanh %78 : vector<2x32xf32>
    %80 = arith.mulf %75, %79 : vector<2x32xf32>
    %c0_37 = arith.constant 0 : index
    %c0_38 = arith.constant 0 : index
    %81 = vector.load %arg7[%c0_37, %c0_38] : memref<2x32xf32, #tpu.memory_space<vmem>>, vector<2x32xf32>
    tpu.vector_store %arg7[%c0_37, %c0_38], %80 {strides = array<i32>} : memref<2x32xf32, #tpu.memory_space<vmem>>, vector<2x32xf32>,
    %c0_39 = arith.constant 0 : index
    %c0_40 = arith.constant 0 : index
    %82 = vector.load %arg8[%c0_39, %c0_40] : memref<2x32xf32, #tpu.memory_space<vmem>>, vector<2x32xf32>
    tpu.vector_store %arg8[%c0_39, %c0_40], %78 {strides = array<i32>} : memref<2x32xf32, #tpu.memory_space<vmem>>, vector<2x32xf32>,
    %c2_i32 = arith.constant 2 : i32
    %c0_41 = arith.constant 0 : index
    %c0_42 = arith.constant 0 : index
    %83 = vector.load %arg7[%c0_41, %c0_42] : memref<2x32xf32, #tpu.memory_space<vmem>>, vector<2x32xf32>
    %c0_43 = arith.constant 0 : index
    %c0_44 = arith.constant 0 : index
    %84 = vector.load %arg8[%c0_43, %c0_44] : memref<2x32xf32, #tpu.memory_space<vmem>>, vector<2x32xf32>
    %85 = arith.index_cast %c2_i32 : i32 to index
    %c0_45 = arith.constant 0 : index
    %c0_46 = arith.constant 0 : index
    %86 = vector.load %arg9[%85, %c0_45, %c0_46] : memref<8x2x128xf32, #tpu.memory_space<vmem>>, vector<1x2x128xf32>
    %87 = vector.shape_cast %86 : vector<1x2x128xf32> to vector<2x128xf32>
    %88 = arith.truncf %83 : vector<2x32xf32> to vector<2x32xbf16>
    %cst_47 = arith.constant dense<0.000000e+00> : vector<2x128xf32>
    %89 = tpu.matmul %88, %12, %cst_47 {dimension_numbers = #tpu.dot_dimension_numbers<[1], [0], [0], [1], [0, 0, 1, 1], [], []>} : vector<2x32xbf16>, vector<32x128xbf16>, vector<2x128xf32> -> vector<2x128xf32>
    %90 = arith.addf %87, %89 : vector<2x128xf32>
    %91 = vector.extract_strided_slice %90 {offsets = [0, 0], sizes = [2, 32], strides = [1, 1]} : vector<2x128xf32> to vector<2x32xf32>
    %92 = arith.negf %91 : vector<2x32xf32>
    %93 = math.exp %92 : vector<2x32xf32>
    %cst_48 = arith.constant 1.000000e+00 : f32
    %94 = vector.broadcast %cst_48 : f32 to vector<2x32xf32>
    %95 = arith.addf %94, %93 : vector<2x32xf32>
    %96 = arith.divf %94, %95 : vector<2x32xf32>
    %97 = vector.extract_strided_slice %90 {offsets = [0, 32], sizes = [2, 32], strides = [1, 1]} : vector<2x128xf32> to vector<2x32xf32>
    %98 = arith.negf %97 : vector<2x32xf32>
    %99 = math.exp %98 : vector<2x32xf32>
    %cst_49 = arith.constant 1.000000e+00 : f32
    %100 = vector.broadcast %cst_49 : f32 to vector<2x32xf32>
    %101 = arith.addf %100, %99 : vector<2x32xf32>
    %102 = arith.divf %100, %101 : vector<2x32xf32>
    %103 = vector.extract_strided_slice %90 {offsets = [0, 64], sizes = [2, 32], strides = [1, 1]} : vector<2x128xf32> to vector<2x32xf32>
    %104 = math.tanh %103 : vector<2x32xf32>
    %105 = vector.extract_strided_slice %90 {offsets = [0, 96], sizes = [2, 32], strides = [1, 1]} : vector<2x128xf32> to vector<2x32xf32>
    %106 = arith.negf %105 : vector<2x32xf32>
    %107 = math.exp %106 : vector<2x32xf32>
    %cst_50 = arith.constant 1.000000e+00 : f32
    %108 = vector.broadcast %cst_50 : f32 to vector<2x32xf32>
    %109 = arith.addf %108, %107 : vector<2x32xf32>
    %110 = arith.divf %108, %109 : vector<2x32xf32>
    %111 = arith.mulf %102, %84 : vector<2x32xf32>
    %112 = arith.mulf %96, %104 : vector<2x32xf32>
    %113 = arith.addf %111, %112 : vector<2x32xf32>
    %114 = math.tanh %113 : vector<2x32xf32>
    %115 = arith.mulf %110, %114 : vector<2x32xf32>
    %c0_51 = arith.constant 0 : index
    %c0_52 = arith.constant 0 : index
    %116 = vector.load %arg7[%c0_51, %c0_52] : memref<2x32xf32, #tpu.memory_space<vmem>>, vector<2x32xf32>
    tpu.vector_store %arg7[%c0_51, %c0_52], %115 {strides = array<i32>} : memref<2x32xf32, #tpu.memory_space<vmem>>, vector<2x32xf32>,
    %c0_53 = arith.constant 0 : index
    %c0_54 = arith.constant 0 : index
    %117 = vector.load %arg8[%c0_53, %c0_54] : memref<2x32xf32, #tpu.memory_space<vmem>>, vector<2x32xf32>
    tpu.vector_store %arg8[%c0_53, %c0_54], %113 {strides = array<i32>} : memref<2x32xf32, #tpu.memory_space<vmem>>, vector<2x32xf32>,
    %c3_i32 = arith.constant 3 : i32
    %c0_55 = arith.constant 0 : index
    %c0_56 = arith.constant 0 : index
    %118 = vector.load %arg7[%c0_55, %c0_56] : memref<2x32xf32, #tpu.memory_space<vmem>>, vector<2x32xf32>
    %c0_57 = arith.constant 0 : index
    %c0_58 = arith.constant 0 : index
    %119 = vector.load %arg8[%c0_57, %c0_58] : memref<2x32xf32, #tpu.memory_space<vmem>>, vector<2x32xf32>
    %120 = arith.index_cast %c3_i32 : i32 to index
    %c0_59 = arith.constant 0 : index
    %c0_60 = arith.constant 0 : index
    %121 = vector.load %arg9[%120, %c0_59, %c0_60] : memref<8x2x128xf32, #tpu.memory_space<vmem>>, vector<1x2x128xf32>
    %122 = vector.shape_cast %121 : vector<1x2x128xf32> to vector<2x128xf32>
    %123 = arith.truncf %118 : vector<2x32xf32> to vector<2x32xbf16>
    %cst_61 = arith.constant dense<0.000000e+00> : vector<2x128xf32>
    %124 = tpu.matmul %123, %12, %cst_61 {dimension_numbers = #tpu.dot_dimension_numbers<[1], [0], [0], [1], [0, 0, 1, 1], [], []>} : vector<2x32xbf16>, vector<32x128xbf16>, vector<2x128xf32> -> vector<2x128xf32>
    %125 = arith.addf %122, %124 : vector<2x128xf32>
    %126 = vector.extract_strided_slice %125 {offsets = [0, 0], sizes = [2, 32], strides = [1, 1]} : vector<2x128xf32> to vector<2x32xf32>
    %127 = arith.negf %126 : vector<2x32xf32>
    %128 = math.exp %127 : vector<2x32xf32>
    %cst_62 = arith.constant 1.000000e+00 : f32
    %129 = vector.broadcast %cst_62 : f32 to vector<2x32xf32>
    %130 = arith.addf %129, %128 : vector<2x32xf32>
    %131 = arith.divf %129, %130 : vector<2x32xf32>
    %132 = vector.extract_strided_slice %125 {offsets = [0, 32], sizes = [2, 32], strides = [1, 1]} : vector<2x128xf32> to vector<2x32xf32>
    %133 = arith.negf %132 : vector<2x32xf32>
    %134 = math.exp %133 : vector<2x32xf32>
    %cst_63 = arith.constant 1.000000e+00 : f32
    %135 = vector.broadcast %cst_63 : f32 to vector<2x32xf32>
    %136 = arith.addf %135, %134 : vector<2x32xf32>
    %137 = arith.divf %135, %136 : vector<2x32xf32>
    %138 = vector.extract_strided_slice %125 {offsets = [0, 64], sizes = [2, 32], strides = [1, 1]} : vector<2x128xf32> to vector<2x32xf32>
    %139 = math.tanh %138 : vector<2x32xf32>
    %140 = vector.extract_strided_slice %125 {offsets = [0, 96], sizes = [2, 32], strides = [1, 1]} : vector<2x128xf32> to vector<2x32xf32>
    %141 = arith.negf %140 : vector<2x32xf32>
    %142 = math.exp %141 : vector<2x32xf32>
    %cst_64 = arith.constant 1.000000e+00 : f32
    %143 = vector.broadcast %cst_64 : f32 to vector<2x32xf32>
    %144 = arith.addf %143, %142 : vector<2x32xf32>
    %145 = arith.divf %143, %144 : vector<2x32xf32>
    %146 = arith.mulf %137, %119 : vector<2x32xf32>
    %147 = arith.mulf %131, %139 : vector<2x32xf32>
    %148 = arith.addf %146, %147 : vector<2x32xf32>
    %149 = math.tanh %148 : vector<2x32xf32>
    %150 = arith.mulf %145, %149 : vector<2x32xf32>
    %c0_65 = arith.constant 0 : index
    %c0_66 = arith.constant 0 : index
    %151 = vector.load %arg7[%c0_65, %c0_66] : memref<2x32xf32, #tpu.memory_space<vmem>>, vector<2x32xf32>
    tpu.vector_store %arg7[%c0_65, %c0_66], %150 {strides = array<i32>} : memref<2x32xf32, #tpu.memory_space<vmem>>, vector<2x32xf32>,
    %c0_67 = arith.constant 0 : index
    %c0_68 = arith.constant 0 : index
    %152 = vector.load %arg8[%c0_67, %c0_68] : memref<2x32xf32, #tpu.memory_space<vmem>>, vector<2x32xf32>
    tpu.vector_store %arg8[%c0_67, %c0_68], %148 {strides = array<i32>} : memref<2x32xf32, #tpu.memory_space<vmem>>, vector<2x32xf32>,
    %c4_i32 = arith.constant 4 : i32
    %c0_69 = arith.constant 0 : index
    %c0_70 = arith.constant 0 : index
    %153 = vector.load %arg7[%c0_69, %c0_70] : memref<2x32xf32, #tpu.memory_space<vmem>>, vector<2x32xf32>
    %c0_71 = arith.constant 0 : index
    %c0_72 = arith.constant 0 : index
    %154 = vector.load %arg8[%c0_71, %c0_72] : memref<2x32xf32, #tpu.memory_space<vmem>>, vector<2x32xf32>
    %155 = arith.index_cast %c4_i32 : i32 to index
    %c0_73 = arith.constant 0 : index
    %c0_74 = arith.constant 0 : index
    %156 = vector.load %arg9[%155, %c0_73, %c0_74] : memref<8x2x128xf32, #tpu.memory_space<vmem>>, vector<1x2x128xf32>
    %157 = vector.shape_cast %156 : vector<1x2x128xf32> to vector<2x128xf32>
    %158 = arith.truncf %153 : vector<2x32xf32> to vector<2x32xbf16>
    %cst_75 = arith.constant dense<0.000000e+00> : vector<2x128xf32>
    %159 = tpu.matmul %158, %12, %cst_75 {dimension_numbers = #tpu.dot_dimension_numbers<[1], [0], [0], [1], [0, 0, 1, 1], [], []>} : vector<2x32xbf16>, vector<32x128xbf16>, vector<2x128xf32> -> vector<2x128xf32>
    %160 = arith.addf %157, %159 : vector<2x128xf32>
    %161 = vector.extract_strided_slice %160 {offsets = [0, 0], sizes = [2, 32], strides = [1, 1]} : vector<2x128xf32> to vector<2x32xf32>
    %162 = arith.negf %161 : vector<2x32xf32>
    %163 = math.exp %162 : vector<2x32xf32>
    %cst_76 = arith.constant 1.000000e+00 : f32
    %164 = vector.broadcast %cst_76 : f32 to vector<2x32xf32>
    %165 = arith.addf %164, %163 : vector<2x32xf32>
    %166 = arith.divf %164, %165 : vector<2x32xf32>
    %167 = vector.extract_strided_slice %160 {offsets = [0, 32], sizes = [2, 32], strides = [1, 1]} : vector<2x128xf32> to vector<2x32xf32>
    %168 = arith.negf %167 : vector<2x32xf32>
    %169 = math.exp %168 : vector<2x32xf32>
    %cst_77 = arith.constant 1.000000e+00 : f32
    %170 = vector.broadcast %cst_77 : f32 to vector<2x32xf32>
    %171 = arith.addf %170, %169 : vector<2x32xf32>
    %172 = arith.divf %170, %171 : vector<2x32xf32>
    %173 = vector.extract_strided_slice %160 {offsets = [0, 64], sizes = [2, 32], strides = [1, 1]} : vector<2x128xf32> to vector<2x32xf32>
    %174 = math.tanh %173 : vector<2x32xf32>
    %175 = vector.extract_strided_slice %160 {offsets = [0, 96], sizes = [2, 32], strides = [1, 1]} : vector<2x128xf32> to vector<2x32xf32>
    %176 = arith.negf %175 : vector<2x32xf32>
    %177 = math.exp %176 : vector<2x32xf32>
    %cst_78 = arith.constant 1.000000e+00 : f32
    %178 = vector.broadcast %cst_78 : f32 to vector<2x32xf32>
    %179 = arith.addf %178, %177 : vector<2x32xf32>
    %180 = arith.divf %178, %179 : vector<2x32xf32>
    %181 = arith.mulf %172, %154 : vector<2x32xf32>
    %182 = arith.mulf %166, %174 : vector<2x32xf32>
    %183 = arith.addf %181, %182 : vector<2x32xf32>
    %184 = math.tanh %183 : vector<2x32xf32>
    %185 = arith.mulf %180, %184 : vector<2x32xf32>
    %c0_79 = arith.constant 0 : index
    %c0_80 = arith.constant 0 : index
    %186 = vector.load %arg7[%c0_79, %c0_80] : memref<2x32xf32, #tpu.memory_space<vmem>>, vector<2x32xf32>
    tpu.vector_store %arg7[%c0_79, %c0_80], %185 {strides = array<i32>} : memref<2x32xf32, #tpu.memory_space<vmem>>, vector<2x32xf32>,
    %c0_81 = arith.constant 0 : index
    %c0_82 = arith.constant 0 : index
    %187 = vector.load %arg8[%c0_81, %c0_82] : memref<2x32xf32, #tpu.memory_space<vmem>>, vector<2x32xf32>
    tpu.vector_store %arg8[%c0_81, %c0_82], %183 {strides = array<i32>} : memref<2x32xf32, #tpu.memory_space<vmem>>, vector<2x32xf32>,
    %c5_i32 = arith.constant 5 : i32
    %c0_83 = arith.constant 0 : index
    %c0_84 = arith.constant 0 : index
    %188 = vector.load %arg7[%c0_83, %c0_84] : memref<2x32xf32, #tpu.memory_space<vmem>>, vector<2x32xf32>
    %c0_85 = arith.constant 0 : index
    %c0_86 = arith.constant 0 : index
    %189 = vector.load %arg8[%c0_85, %c0_86] : memref<2x32xf32, #tpu.memory_space<vmem>>, vector<2x32xf32>
    %190 = arith.index_cast %c5_i32 : i32 to index
    %c0_87 = arith.constant 0 : index
    %c0_88 = arith.constant 0 : index
    %191 = vector.load %arg9[%190, %c0_87, %c0_88] : memref<8x2x128xf32, #tpu.memory_space<vmem>>, vector<1x2x128xf32>
    %192 = vector.shape_cast %191 : vector<1x2x128xf32> to vector<2x128xf32>
    %193 = arith.truncf %188 : vector<2x32xf32> to vector<2x32xbf16>
    %cst_89 = arith.constant dense<0.000000e+00> : vector<2x128xf32>
    %194 = tpu.matmul %193, %12, %cst_89 {dimension_numbers = #tpu.dot_dimension_numbers<[1], [0], [0], [1], [0, 0, 1, 1], [], []>} : vector<2x32xbf16>, vector<32x128xbf16>, vector<2x128xf32> -> vector<2x128xf32>
    %195 = arith.addf %192, %194 : vector<2x128xf32>
    %196 = vector.extract_strided_slice %195 {offsets = [0, 0], sizes = [2, 32], strides = [1, 1]} : vector<2x128xf32> to vector<2x32xf32>
    %197 = arith.negf %196 : vector<2x32xf32>
    %198 = math.exp %197 : vector<2x32xf32>
    %cst_90 = arith.constant 1.000000e+00 : f32
    %199 = vector.broadcast %cst_90 : f32 to vector<2x32xf32>
    %200 = arith.addf %199, %198 : vector<2x32xf32>
    %201 = arith.divf %199, %200 : vector<2x32xf32>
    %202 = vector.extract_strided_slice %195 {offsets = [0, 32], sizes = [2, 32], strides = [1, 1]} : vector<2x128xf32> to vector<2x32xf32>
    %203 = arith.negf %202 : vector<2x32xf32>
    %204 = math.exp %203 : vector<2x32xf32>
    %cst_91 = arith.constant 1.000000e+00 : f32
    %205 = vector.broadcast %cst_91 : f32 to vector<2x32xf32>
    %206 = arith.addf %205, %204 : vector<2x32xf32>
    %207 = arith.divf %205, %206 : vector<2x32xf32>
    %208 = vector.extract_strided_slice %195 {offsets = [0, 64], sizes = [2, 32], strides = [1, 1]} : vector<2x128xf32> to vector<2x32xf32>
    %209 = math.tanh %208 : vector<2x32xf32>
    %210 = vector.extract_strided_slice %195 {offsets = [0, 96], sizes = [2, 32], strides = [1, 1]} : vector<2x128xf32> to vector<2x32xf32>
    %211 = arith.negf %210 : vector<2x32xf32>
    %212 = math.exp %211 : vector<2x32xf32>
    %cst_92 = arith.constant 1.000000e+00 : f32
    %213 = vector.broadcast %cst_92 : f32 to vector<2x32xf32>
    %214 = arith.addf %213, %212 : vector<2x32xf32>
    %215 = arith.divf %213, %214 : vector<2x32xf32>
    %216 = arith.mulf %207, %189 : vector<2x32xf32>
    %217 = arith.mulf %201, %209 : vector<2x32xf32>
    %218 = arith.addf %216, %217 : vector<2x32xf32>
    %219 = math.tanh %218 : vector<2x32xf32>
    %220 = arith.mulf %215, %219 : vector<2x32xf32>
    %c0_93 = arith.constant 0 : index
    %c0_94 = arith.constant 0 : index
    %221 = vector.load %arg7[%c0_93, %c0_94] : memref<2x32xf32, #tpu.memory_space<vmem>>, vector<2x32xf32>
    tpu.vector_store %arg7[%c0_93, %c0_94], %220 {strides = array<i32>} : memref<2x32xf32, #tpu.memory_space<vmem>>, vector<2x32xf32>,
    %c0_95 = arith.constant 0 : index
    %c0_96 = arith.constant 0 : index
    %222 = vector.load %arg8[%c0_95, %c0_96] : memref<2x32xf32, #tpu.memory_space<vmem>>, vector<2x32xf32>
    tpu.vector_store %arg8[%c0_95, %c0_96], %218 {strides = array<i32>} : memref<2x32xf32, #tpu.memory_space<vmem>>, vector<2x32xf32>,
    %c6_i32 = arith.constant 6 : i32
    %c0_97 = arith.constant 0 : index
    %c0_98 = arith.constant 0 : index
    %223 = vector.load %arg7[%c0_97, %c0_98] : memref<2x32xf32, #tpu.memory_space<vmem>>, vector<2x32xf32>
    %c0_99 = arith.constant 0 : index
    %c0_100 = arith.constant 0 : index
    %224 = vector.load %arg8[%c0_99, %c0_100] : memref<2x32xf32, #tpu.memory_space<vmem>>, vector<2x32xf32>
    %225 = arith.index_cast %c6_i32 : i32 to index
    %c0_101 = arith.constant 0 : index
    %c0_102 = arith.constant 0 : index
    %226 = vector.load %arg9[%225, %c0_101, %c0_102] : memref<8x2x128xf32, #tpu.memory_space<vmem>>, vector<1x2x128xf32>
    %227 = vector.shape_cast %226 : vector<1x2x128xf32> to vector<2x128xf32>
    %228 = arith.truncf %223 : vector<2x32xf32> to vector<2x32xbf16>
    %cst_103 = arith.constant dense<0.000000e+00> : vector<2x128xf32>
    %229 = tpu.matmul %228, %12, %cst_103 {dimension_numbers = #tpu.dot_dimension_numbers<[1], [0], [0], [1], [0, 0, 1, 1], [], []>} : vector<2x32xbf16>, vector<32x128xbf16>, vector<2x128xf32> -> vector<2x128xf32>
    %230 = arith.addf %227, %229 : vector<2x128xf32>
    %231 = vector.extract_strided_slice %230 {offsets = [0, 0], sizes = [2, 32], strides = [1, 1]} : vector<2x128xf32> to vector<2x32xf32>
    %232 = arith.negf %231 : vector<2x32xf32>
    %233 = math.exp %232 : vector<2x32xf32>
    %cst_104 = arith.constant 1.000000e+00 : f32
    %234 = vector.broadcast %cst_104 : f32 to vector<2x32xf32>
    %235 = arith.addf %234, %233 : vector<2x32xf32>
    %236 = arith.divf %234, %235 : vector<2x32xf32>
    %237 = vector.extract_strided_slice %230 {offsets = [0, 32], sizes = [2, 32], strides = [1, 1]} : vector<2x128xf32> to vector<2x32xf32>
    %238 = arith.negf %237 : vector<2x32xf32>
    %239 = math.exp %238 : vector<2x32xf32>
    %cst_105 = arith.constant 1.000000e+00 : f32
    %240 = vector.broadcast %cst_105 : f32 to vector<2x32xf32>
    %241 = arith.addf %240, %239 : vector<2x32xf32>
    %242 = arith.divf %240, %241 : vector<2x32xf32>
    %243 = vector.extract_strided_slice %230 {offsets = [0, 64], sizes = [2, 32], strides = [1, 1]} : vector<2x128xf32> to vector<2x32xf32>
    %244 = math.tanh %243 : vector<2x32xf32>
    %245 = vector.extract_strided_slice %230 {offsets = [0, 96], sizes = [2, 32], strides = [1, 1]} : vector<2x128xf32> to vector<2x32xf32>
    %246 = arith.negf %245 : vector<2x32xf32>
    %247 = math.exp %246 : vector<2x32xf32>
    %cst_106 = arith.constant 1.000000e+00 : f32
    %248 = vector.broadcast %cst_106 : f32 to vector<2x32xf32>
    %249 = arith.addf %248, %247 : vector<2x32xf32>
    %250 = arith.divf %248, %249 : vector<2x32xf32>
    %251 = arith.mulf %242, %224 : vector<2x32xf32>
    %252 = arith.mulf %236, %244 : vector<2x32xf32>
    %253 = arith.addf %251, %252 : vector<2x32xf32>
    %254 = math.tanh %253 : vector<2x32xf32>
    %255 = arith.mulf %250, %254 : vector<2x32xf32>
    %c0_107 = arith.constant 0 : index
    %c0_108 = arith.constant 0 : index
    %256 = vector.load %arg7[%c0_107, %c0_108] : memref<2x32xf32, #tpu.memory_space<vmem>>, vector<2x32xf32>
    tpu.vector_store %arg7[%c0_107, %c0_108], %255 {strides = array<i32>} : memref<2x32xf32, #tpu.memory_space<vmem>>, vector<2x32xf32>,
    %c0_109 = arith.constant 0 : index
    %c0_110 = arith.constant 0 : index
    %257 = vector.load %arg8[%c0_109, %c0_110] : memref<2x32xf32, #tpu.memory_space<vmem>>, vector<2x32xf32>
    tpu.vector_store %arg8[%c0_109, %c0_110], %253 {strides = array<i32>} : memref<2x32xf32, #tpu.memory_space<vmem>>, vector<2x32xf32>,
    %c7_i32 = arith.constant 7 : i32
    %c0_111 = arith.constant 0 : index
    %c0_112 = arith.constant 0 : index
    %258 = vector.load %arg7[%c0_111, %c0_112] : memref<2x32xf32, #tpu.memory_space<vmem>>, vector<2x32xf32>
    %c0_113 = arith.constant 0 : index
    %c0_114 = arith.constant 0 : index
    %259 = vector.load %arg8[%c0_113, %c0_114] : memref<2x32xf32, #tpu.memory_space<vmem>>, vector<2x32xf32>
    %260 = arith.index_cast %c7_i32 : i32 to index
    %c0_115 = arith.constant 0 : index
    %c0_116 = arith.constant 0 : index
    %261 = vector.load %arg9[%260, %c0_115, %c0_116] : memref<8x2x128xf32, #tpu.memory_space<vmem>>, vector<1x2x128xf32>
    %262 = vector.shape_cast %261 : vector<1x2x128xf32> to vector<2x128xf32>
    %263 = arith.truncf %258 : vector<2x32xf32> to vector<2x32xbf16>
    %cst_117 = arith.constant dense<0.000000e+00> : vector<2x128xf32>
    %264 = tpu.matmul %263, %12, %cst_117 {dimension_numbers = #tpu.dot_dimension_numbers<[1], [0], [0], [1], [0, 0, 1, 1], [], []>} : vector<2x32xbf16>, vector<32x128xbf16>, vector<2x128xf32> -> vector<2x128xf32>
    %265 = arith.addf %262, %264 : vector<2x128xf32>
    %266 = vector.extract_strided_slice %265 {offsets = [0, 0], sizes = [2, 32], strides = [1, 1]} : vector<2x128xf32> to vector<2x32xf32>
    %267 = arith.negf %266 : vector<2x32xf32>
    %268 = math.exp %267 : vector<2x32xf32>
    %cst_118 = arith.constant 1.000000e+00 : f32
    %269 = vector.broadcast %cst_118 : f32 to vector<2x32xf32>
    %270 = arith.addf %269, %268 : vector<2x32xf32>
    %271 = arith.divf %269, %270 : vector<2x32xf32>
    %272 = vector.extract_strided_slice %265 {offsets = [0, 32], sizes = [2, 32], strides = [1, 1]} : vector<2x128xf32> to vector<2x32xf32>
    %273 = arith.negf %272 : vector<2x32xf32>
    %274 = math.exp %273 : vector<2x32xf32>
    %cst_119 = arith.constant 1.000000e+00 : f32
    %275 = vector.broadcast %cst_119 : f32 to vector<2x32xf32>
    %276 = arith.addf %275, %274 : vector<2x32xf32>
    %277 = arith.divf %275, %276 : vector<2x32xf32>
    %278 = vector.extract_strided_slice %265 {offsets = [0, 64], sizes = [2, 32], strides = [1, 1]} : vector<2x128xf32> to vector<2x32xf32>
    %279 = math.tanh %278 : vector<2x32xf32>
    %280 = vector.extract_strided_slice %265 {offsets = [0, 96], sizes = [2, 32], strides = [1, 1]} : vector<2x128xf32> to vector<2x32xf32>
    %281 = arith.negf %280 : vector<2x32xf32>
    %282 = math.exp %281 : vector<2x32xf32>
    %cst_120 = arith.constant 1.000000e+00 : f32
    %283 = vector.broadcast %cst_120 : f32 to vector<2x32xf32>
    %284 = arith.addf %283, %282 : vector<2x32xf32>
    %285 = arith.divf %283, %284 : vector<2x32xf32>
    %286 = arith.mulf %277, %259 : vector<2x32xf32>
    %287 = arith.mulf %271, %279 : vector<2x32xf32>
    %288 = arith.addf %286, %287 : vector<2x32xf32>
    %289 = math.tanh %288 : vector<2x32xf32>
    %290 = arith.mulf %285, %289 : vector<2x32xf32>
    %c0_121 = arith.constant 0 : index
    %c0_122 = arith.constant 0 : index
    %291 = vector.load %arg7[%c0_121, %c0_122] : memref<2x32xf32, #tpu.memory_space<vmem>>, vector<2x32xf32>
    tpu.vector_store %arg7[%c0_121, %c0_122], %290 {strides = array<i32>} : memref<2x32xf32, #tpu.memory_space<vmem>>, vector<2x32xf32>,
    %c0_123 = arith.constant 0 : index
    %c0_124 = arith.constant 0 : index
    %292 = vector.load %arg8[%c0_123, %c0_124] : memref<2x32xf32, #tpu.memory_space<vmem>>, vector<2x32xf32>
    tpu.vector_store %arg8[%c0_123, %c0_124], %288 {strides = array<i32>} : memref<2x32xf32, #tpu.memory_space<vmem>>, vector<2x32xf32>,
    %c8_i32 = arith.constant 8 : i32
    %c1_i32_125 = arith.constant 1 : i32
    %293 = arith.cmpi eq, %arg0, %c1_i32_125 : i32
    %294 = arith.extui %293 : i1 to i32
    %c0_i32_126 = arith.constant 0 : i32
    %295 = arith.cmpi ne, %294, %c0_i32_126 : i32
    scf.if %295 {
      %c0_127 = arith.constant 0 : index
      %c0_128 = arith.constant 0 : index
      %296 = vector.load %arg7[%c0_127, %c0_128] : memref<2x32xf32, #tpu.memory_space<vmem>>, vector<2x32xf32>
      %297 = arith.truncf %296 : vector<2x32xf32> to vector<2x32xbf16>
      %c0_129 = arith.constant 0 : index
      %c0_130 = arith.constant 0 : index
      %298 = vector.load %arg5[%c0_129, %c0_130] : memref<32x16xbf16, #tpu.memory_space<vmem>>, vector<32x16xbf16>
      %cst_131 = arith.constant dense<0.000000e+00> : vector<2x16xf32>
      %299 = tpu.matmul %297, %298, %cst_131 {dimension_numbers = #tpu.dot_dimension_numbers<[1], [0], [0], [1], [0, 0, 1, 1], [], []>} : vector<2x32xbf16>, vector<32x16xbf16>, vector<2x16xf32> -> vector<2x16xf32>
      %300 = arith.mulf %299, %299 : vector<2x16xf32>
      %cst_132 = arith.constant dense<0.000000e+00> : vector<2xf32>
      %301 = vector.multi_reduction <add>, %300, %cst_132 [1] : vector<2x16xf32> to vector<2xf32>
      %302 = vector.shape_cast %301 : vector<2xf32> to vector<2x1xf32>
      %cst_133 = arith.constant 1.000000e-24 : f32
      %303 = vector.broadcast %cst_133 : f32 to vector<2x1xf32>
      %304 = arith.maximumf %302, %303 : vector<2x1xf32>
      %305 = math.rsqrt %304 : vector<2x1xf32>
      %306 = vector.broadcast %305 : vector<2x1xf32> to vector<2x16xf32>
      %307 = arith.mulf %299, %306 : vector<2x16xf32>
      %c0_134 = arith.constant 0 : index
      %c0_135 = arith.constant 0 : index
      %308 = vector.load %arg6[%c0_134, %c0_135] : memref<2x16xf32, #tpu.memory_space<vmem>>, vector<2x16xf32>
      tpu.vector_store %arg6[%c0_134, %c0_135], %307 {strides = array<i32>} : memref<2x16xf32, #tpu.memory_space<vmem>>, vector<2x16xf32>,
    } else {
    }
    return
  }
  func.func @transform_0(%arg0: i32) -> (i32, i32, i32) {
    %c0_i32 = arith.constant 0 : i32
    %c0_i32_0 = arith.constant 0 : i32
    %c0_i32_1 = arith.constant 0 : i32
    return %arg0, %c0_i32, %c0_i32_0 : i32, i32, i32
  }
  func.func @transform_1(%arg0: i32) -> (i32, i32) {
    %c0_i32 = arith.constant 0 : i32
    %c0_i32_0 = arith.constant 0 : i32
    %c0_i32_1 = arith.constant 0 : i32
    return %c0_i32, %c0_i32_0 : i32, i32
  }
  func.func @transform_2(%arg0: i32) -> (i32, i32) {
    %c0_i32 = arith.constant 0 : i32
    %c0_i32_0 = arith.constant 0 : i32
    %c0_i32_1 = arith.constant 0 : i32
    return %c0_i32, %c0_i32_0 : i32, i32
  }
  func.func @transform_3(%arg0: i32) -> (i32, i32) {
    %c0_i32 = arith.constant 0 : i32
    %c0_i32_0 = arith.constant 0 : i32
    %c0_i32_1 = arith.constant 0 : i32
    return %c0_i32, %c0_i32_0 : i32, i32
  }
  func.func @transform_4(%arg0: i32) -> (i32, i32) {
    %c0_i32 = arith.constant 0 : i32
    %c0_i32_0 = arith.constant 0 : i32
    %c0_i32_1 = arith.constant 0 : i32
    return %c0_i32, %c0_i32_0 : i32, i32
  }
  func.func @transform_5(%arg0: i32) -> (i32, i32) {
    %c0_i32 = arith.constant 0 : i32
    %c0_i32_0 = arith.constant 0 : i32
    %c0_i32_1 = arith.constant 0 : i32
    return %c0_i32, %c0_i32_0 : i32, i32
  }
}

</mosaic_0001>

<llo_original>
// kernel: lstm_speaker_encoder_forward.4
$region0: #{lstm_speaker_encoder_forward.4}
  #allocation0 [shape = 'u32[]', space=smem, size = 0x4, offset = 0x4, fixed_abs, tag = 'smem constant byte address 0x4 - core index']
  #allocation1 [shape = 'u32[144,128]{1,0:T(1,128)}', space=vmem, size = 0x12000, scoped, tag = 'internal scratch']
  %s0 = inlined_call_operand.vmem [shape: f32[2,16,16], index: 0, kind: input, shape index: {}]
  %s1 = inlined_call_operand.vmem [shape: f32[16,2,16], index: 1, kind: output, shape index: {}]
  %s2 = sld [smem:[#allocation0]]
  $region14: #{lstm_speaker_encoder_forward.4} parent=0
    _
  %s4 = ssub.s32 1, %s2
  %s5 = scalar_select 0, %s4, %s2
  // Predicated region
  $region2: #{lstm_speaker_encoder_forward.4} parent=0 // pred_check
    _
  $region3: #{lstm_speaker_encoder_forward.4} parent=0 // pred_check_branch
    %7 = sbr.rel (0) target = $region5
  $region4: #{lstm_speaker_encoder_forward.4} parent=0 // pred_region
    _
  $region5: #{lstm_speaker_encoder_forward.4} parent=0 // pred_fallthru
    _
  %v8 = vld [vmem:[%s0] sm:$0xff]
  %v9 = vld [vmem:[%s0 + $0x8] sm:$0xff]
  %v10 = vld [vmem:[%s0 + $0x10] sm:$0xff]
  %v11 = vld [vmem:[%s0 + $0x18] sm:$0xff]
  %vm12 = vcmask 130048
  %v13 = vsel %vm12, %v8, 0.0
  %14 = vadd.xlane.f32.xlu0 %v13
  %v15 = vpop.xlane.xlu0 %14
  %v16 = vsel %vm12, %v9, 0.0
  %17 = vadd.xlane.f32.xlu0 %v16
  %v18 = vpop.xlane.xlu0 %17
  %v19 = vsel %vm12, %v10, 0.0
  %20 = vadd.xlane.f32.xlu0 %v19
  %v21 = vpop.xlane.xlu0 %20
  %v22 = vsel %vm12, %v11, 0.0
  %23 = vadd.xlane.f32.xlu0 %v22
  %v24 = vpop.xlane.xlu0 %23
  %v25 = vrcp.pop 16.0
  %v26 = vmul.f32 %v15, %v25
  %v27 = vmul.f32 %v18, %v25
  %v28 = vmul.f32 %v21, %v25
  %v29 = vmul.f32 %v24, %v25
  %v30 = vsub.f32 %v8, %v26
  %v31 = vsub.f32 %v9, %v27
  %v32 = vsub.f32 %v10, %v28
  %v33 = vsub.f32 %v11, %v29
  %v34 = vmul.f32 %v30, %v30
  %v35 = vmul.f32 %v31, %v31
  %v36 = vmul.f32 %v32, %v32
  %v37 = vmul.f32 %v33, %v33
  %v38 = vsel %vm12, %v34, 0.0
  %39 = vadd.xlane.f32.xlu0 %v38
  %v40 = vpop.xlane.xlu0 %39
  %v41 = vsel %vm12, %v35, 0.0
  %42 = vadd.xlane.f32.xlu0 %v41
  %v43 = vpop.xlane.xlu0 %42
  %v44 = vsel %vm12, %v36, 0.0
  %45 = vadd.xlane.f32.xlu0 %v44
  %v46 = vpop.xlane.xlu0 %45
  %v47 = vsel %vm12, %v37, 0.0
  %48 = vadd.xlane.f32.xlu0 %v47
  %v49 = vpop.xlane.xlu0 %48
  %v50 = vmul.f32 %v40, %v25
  %v51 = vmul.f32 %v43, %v25
  %v52 = vmul.f32 %v46, %v25
  %v53 = vmul.f32 %v49, %v25
  %v54 = vadd.f32 %v50, 1e-05
  %v55 = vadd.f32 %v51, 1e-05
  %v56 = vadd.f32 %v52, 1e-05
  %v57 = vadd.f32 %v53, 1e-05
  %v58 = vrsqrt.pop %v54
  %v59 = vrsqrt.pop %v55
  %v60 = vrsqrt.pop %v56
  %v61 = vrsqrt.pop %v57
  %v62 = vmul.f32 %v30, %v58
  %v63 = vmul.f32 %v31, %v59
  %v64 = vmul.f32 %v32, %v60
  %v65 = vmul.f32 %v33, %v61
  %66 = vxpose.xlu0.b32.start [1/16] %v62, 128
  %67 = vxpose.xlu0.b32.cont [2/16] %v63, 128
  %68 = vxpose.xlu0.b32.cont [3/16] 0.0, 128
  %69 = vxpose.xlu0.b32.cont [4/16] 0.0, 128
  %70 = vxpose.xlu0.b32.cont [5/16] 0.0, 128
  %71 = vxpose.xlu0.b32.cont [6/16] 0.0, 128
  %72 = vxpose.xlu0.b32.cont [7/16] 0.0, 128
  %73 = vxpose.xlu0.b32.cont [8/16] 0.0, 128
  %74 = vxpose.xlu0.b32.cont [9/16] 0.0, 128
  %75 = vxpose.xlu0.b32.cont [10/16] 0.0, 128
  %76 = vxpose.xlu0.b32.cont [11/16] 0.0, 128
  %77 = vxpose.xlu0.b32.cont [12/16] 0.0, 128
  %78 = vxpose.xlu0.b32.cont [13/16] 0.0, 128
  %79 = vxpose.xlu0.b32.cont [14/16] 0.0, 128
  %80 = vxpose.xlu0.b32.cont [15/16] 0.0, 128
  %81 = vxpose.xlu0.b32.end [16/16] 0.0, 128
  %v82 = vpop.trf.xlu0
  %v83 = vpop.trf.xlu0
  %v84 = vpop.trf.xlu0
  %v85 = vpop.trf.xlu0
  %v86 = vpop.trf.xlu0
  %v87 = vpop.trf.xlu0
  %v88 = vpop.trf.xlu0
  %v89 = vpop.trf.xlu0
  %v90 = vpop.trf.xlu0
  %v91 = vpop.trf.xlu0
  %v92 = vpop.trf.xlu0
  %v93 = vpop.trf.xlu0
  %v94 = vpop.trf.xlu0
  %v95 = vpop.trf.xlu0
  %v96 = vpop.trf.xlu0
  %v97 = vpop.trf.xlu0
  %v100 = vcombine.high %v82, %v82
  %v102 = vunpack.c.l.s4 1966171168
  %v103 = vunpack.c.0.s8 %v102
  %v104 = vlaneseq
  %v105 = vshrl.u32 %v104, 7
  %v106 = vsub.s32 %v103, %v105
  %v107 = vrot.slane %v82, %v106
  %v109 = vunpack.c.l.s4 1966171168
  %v110 = vunpack.c.0.s8 %v109
  %v111 = vlaneseq
  %v112 = vshrl.u32 %v111, 7
  %v113 = vsub.s32 %v110, %v112
  %v114 = vrot.slane %v100, %v113
  %v115 = vcombine.high %v107, %v107
  %v116 = vcombine.high %v114, %v114
  %v118 = vunpack.c.l.s4 1966171168
  %v119 = vunpack.c.0.s8 %v118
  %v120 = vlaneseq
  %v121 = vshrl.u32 %v120, 7
  %v122 = vsub.s32 %v119, %v121
  %v123 = vrot.slane %v107, %v122
  %v125 = vunpack.c.l.s4 1966171168
  %v126 = vunpack.c.0.s8 %v125
  %v127 = vlaneseq
  %v128 = vshrl.u32 %v127, 7
  %v129 = vsub.s32 %v126, %v128
  %v130 = vrot.slane %v114, %v129
  %v132 = vunpack.c.l.s4 1966171168
  %v133 = vunpack.c.0.s8 %v132
  %v134 = vlaneseq
  %v135 = vshrl.u32 %v134, 7
  %v136 = vsub.s32 %v133, %v135
  %v137 = vrot.slane %v115, %v136
  %v139 = vunpack.c.l.s4 1966171168
  %v140 = vunpack.c.0.s8 %v139
  %v141 = vlaneseq
  %v142 = vshrl.u32 %v141, 7
  %v143 = vsub.s32 %v140, %v142
  %v144 = vrot.slane %v116, %v143
  %v145 = vcombine.high %v123, %v123
  %v146 = vcombine.high %v130, %v130
  %v147 = vcombine.high %v137, %v137
  %v148 = vcombine.high %v144, %v144
  %v149 = vcombine.high %v83, %v83
  %v151 = vunpack.c.l.s4 1966171168
  %v152 = vunpack.c.0.s8 %v151
  %v153 = vlaneseq
  %v154 = vshrl.u32 %v153, 7
  %v155 = vsub.s32 %v152, %v154
  %v156 = vrot.slane %v83, %v155
  %v158 = vunpack.c.l.s4 1966171168
  %v159 = vunpack.c.0.s8 %v158
  %v160 = vlaneseq
  %v161 = vshrl.u32 %v160, 7
  %v162 = vsub.s32 %v159, %v161
  %v163 = vrot.slane %v149, %v162
  %v164 = vcombine.high %v156, %v156
  %v165 = vcombine.high %v163, %v163
  %v167 = vunpack.c.l.s4 1966171168
  %v168 = vunpack.c.0.s8 %v167
  %v169 = vlaneseq
  %v170 = vshrl.u32 %v169, 7
  %v171 = vsub.s32 %v168, %v170
  %v172 = vrot.slane %v156, %v171
  %v174 = vunpack.c.l.s4 1966171168
  %v175 = vunpack.c.0.s8 %v174
  %v176 = vlaneseq
  %v177 = vshrl.u32 %v176, 7
  %v178 = vsub.s32 %v175, %v177
  %v179 = vrot.slane %v163, %v178
  %v181 = vunpack.c.l.s4 1966171168
  %v182 = vunpack.c.0.s8 %v181
  %v183 = vlaneseq
  %v184 = vshrl.u32 %v183, 7
  %v185 = vsub.s32 %v182, %v184
  %v186 = vrot.slane %v164, %v185
  %v188 = vunpack.c.l.s4 1966171168
  %v189 = vunpack.c.0.s8 %v188
  %v190 = vlaneseq
  %v191 = vshrl.u32 %v190, 7
  %v192 = vsub.s32 %v189, %v191
  %v193 = vrot.slane %v165, %v192
  %v194 = vcombine.high %v172, %v172
  %v195 = vcombine.high %v179, %v179
  %v196 = vcombine.high %v186, %v186
  %v197 = vcombine.high %v193, %v193
  %vm214 = vcmask 122880
  %215 = vst.msk [vmem:[%s1] sm:$0x1] %vm214, %v123
  %216 = vst.msk [vmem:[%s1 + $0x2] sm:$0x1] %vm214, %v137
  %217 = vst.msk [vmem:[%s1 + $0x4] sm:$0x1] %vm214, %v145
  %218 = vst.msk [vmem:[%s1 + $0x6] sm:$0x1] %vm214, %v147
  %219 = vst.msk [vmem:[%s1 + $0x8] sm:$0x1] %vm214, %v130
  %220 = vst.msk [vmem:[%s1 + $0xa] sm:$0x1] %vm214, %v144
  %221 = vst.msk [vmem:[%s1 + $0xc] sm:$0x1] %vm214, %v146
  %222 = vst.msk [vmem:[%s1 + $0xe] sm:$0x1] %vm214, %v148
  %223 = vst.msk [vmem:[%s1 + $0x10] sm:$0x1] %vm214, %v172
  %224 = vst.msk [vmem:[%s1 + $0x12] sm:$0x1] %vm214, %v186
  %225 = vst.msk [vmem:[%s1 + $0x14] sm:$0x1] %vm214, %v194
  %226 = vst.msk [vmem:[%s1 + $0x16] sm:$0x1] %vm214, %v196
  %227 = vst.msk [vmem:[%s1 + $0x18] sm:$0x1] %vm214, %v179
  %228 = vst.msk [vmem:[%s1 + $0x1a] sm:$0x1] %vm214, %v193
  %229 = vst.msk [vmem:[%s1 + $0x1c] sm:$0x1] %vm214, %v195
  %230 = vst.msk [vmem:[%s1 + $0x1e] sm:$0x1] %vm214, %v197
  %231 = vxpose.xlu0.b32.start [1/16] %v64, 128
  %232 = vxpose.xlu0.b32.cont [2/16] %v65, 128
  %233 = vxpose.xlu0.b32.cont [3/16] 0.0, 128
  %234 = vxpose.xlu0.b32.cont [4/16] 0.0, 128
  %235 = vxpose.xlu0.b32.cont [5/16] 0.0, 128
  %236 = vxpose.xlu0.b32.cont [6/16] 0.0, 128
  %237 = vxpose.xlu0.b32.cont [7/16] 0.0, 128
  %238 = vxpose.xlu0.b32.cont [8/16] 0.0, 128
  %239 = vxpose.xlu0.b32.cont [9/16] 0.0, 128
  %240 = vxpose.xlu0.b32.cont [10/16] 0.0, 128
  %241 = vxpose.xlu0.b32.cont [11/16] 0.0, 128
  %242 = vxpose.xlu0.b32.cont [12/16] 0.0, 128
  %243 = vxpose.xlu0.b32.cont [13/16] 0.0, 128
  %244 = vxpose.xlu0.b32.cont [14/16] 0.0, 128
  %245 = vxpose.xlu0.b32.cont [15/16] 0.0, 128
  %246 = vxpose.xlu0.b32.end [16/16] 0.0, 128
  %v247 = vpop.trf.xlu0
  %v248 = vpop.trf.xlu0
  %v249 = vpop.trf.xlu0
  %v250 = vpop.trf.xlu0
  %v251 = vpop.trf.xlu0
  %v252 = vpop.trf.xlu0
  %v253 = vpop.trf.xlu0
  %v254 = vpop.trf.xlu0
  %v255 = vpop.trf.xlu0
  %v256 = vpop.trf.xlu0
  %v257 = vpop.trf.xlu0
  %v258 = vpop.trf.xlu0
  %v259 = vpop.trf.xlu0
  %v260 = vpop.trf.xlu0
  %v261 = vpop.trf.xlu0
  %v262 = vpop.trf.xlu0
  %v265 = vcombine.high %v247, %v247
  %v267 = vunpack.c.l.s4 1966171168
  %v268 = vunpack.c.0.s8 %v267
  %v269 = vlaneseq
  %v270 = vshrl.u32 %v269, 7
  %v271 = vsub.s32 %v268, %v270
  %v272 = vrot.slane %v247, %v271
  %v274 = vunpack.c.l.s4 1966171168
  %v275 = vunpack.c.0.s8 %v274
  %v276 = vlaneseq
  %v277 = vshrl.u32 %v276, 7
  %v278 = vsub.s32 %v275, %v277
  %v279 = vrot.slane %v265, %v278
  %v280 = vcombine.high %v272, %v272
  %v281 = vcombine.high %v279, %v279
  %v283 = vunpack.c.l.s4 1966171168
  %v284 = vunpack.c.0.s8 %v283
  %v285 = vlaneseq
  %v286 = vshrl.u32 %v285, 7
  %v287 = vsub.s32 %v284, %v286
  %v288 = vrot.slane %v272, %v287
  %v290 = vunpack.c.l.s4 1966171168
  %v291 = vunpack.c.0.s8 %v290
  %v292 = vlaneseq
  %v293 = vshrl.u32 %v292, 7
  %v294 = vsub.s32 %v291, %v293
  %v295 = vrot.slane %v279, %v294
  %v297 = vunpack.c.l.s4 1966171168
  %v298 = vunpack.c.0.s8 %v297
  %v299 = vlaneseq
  %v300 = vshrl.u32 %v299, 7
  %v301 = vsub.s32 %v298, %v300
  %v302 = vrot.slane %v280, %v301
  %v304 = vunpack.c.l.s4 1966171168
  %v305 = vunpack.c.0.s8 %v304
  %v306 = vlaneseq
  %v307 = vshrl.u32 %v306, 7
  %v308 = vsub.s32 %v305, %v307
  %v309 = vrot.slane %v281, %v308
  %v310 = vcombine.high %v288, %v288
  %v311 = vcombine.high %v295, %v295
  %v312 = vcombine.high %v302, %v302
  %v313 = vcombine.high %v309, %v309
  %v314 = vcombine.high %v248, %v248
  %v316 = vunpack.c.l.s4 1966171168
  %v317 = vunpack.c.0.s8 %v316
  %v318 = vlaneseq
  %v319 = vshrl.u32 %v318, 7
  %v320 = vsub.s32 %v317, %v319
  %v321 = vrot.slane %v248, %v320
  %v323 = vunpack.c.l.s4 1966171168
  %v324 = vunpack.c.0.s8 %v323
  %v325 = vlaneseq
  %v326 = vshrl.u32 %v325, 7
  %v327 = vsub.s32 %v324, %v326
  %v328 = vrot.slane %v314, %v327
  %v329 = vcombine.high %v321, %v321
  %v330 = vcombine.high %v328, %v328
  %v332 = vunpack.c.l.s4 1966171168
  %v333 = vunpack.c.0.s8 %v332
  %v334 = vlaneseq
  %v335 = vshrl.u32 %v334, 7
  %v336 = vsub.s32 %v333, %v335
  %v337 = vrot.slane %v321, %v336
  %v339 = vunpack.c.l.s4 1966171168
  %v340 = vunpack.c.0.s8 %v339
  %v341 = vlaneseq
  %v342 = vshrl.u32 %v341, 7
  %v343 = vsub.s32 %v340, %v342
  %v344 = vrot.slane %v328, %v343
  %v346 = vunpack.c.l.s4 1966171168
  %v347 = vunpack.c.0.s8 %v346
  %v348 = vlaneseq
  %v349 = vshrl.u32 %v348, 7
  %v350 = vsub.s32 %v347, %v349
  %v351 = vrot.slane %v329, %v350
  %v353 = vunpack.c.l.s4 1966171168
  %v354 = vunpack.c.0.s8 %v353
  %v355 = vlaneseq
  %v356 = vshrl.u32 %v355, 7
  %v357 = vsub.s32 %v354, %v356
  %v358 = vrot.slane %v330, %v357
  %v359 = vcombine.high %v337, %v337
  %v360 = vcombine.high %v344, %v344
  %v361 = vcombine.high %v351, %v351
  %v362 = vcombine.high %v358, %v358
  %379 = vst.msk [vmem:[%s1 + $0x1] sm:$0x1] %vm214, %v288
  %380 = vst.msk [vmem:[%s1 + $0x3] sm:$0x1] %vm214, %v302
  %381 = vst.msk [vmem:[%s1 + $0x5] sm:$0x1] %vm214, %v310
  %382 = vst.msk [vmem:[%s1 + $0x7] sm:$0x1] %vm214, %v312
  %383 = vst.msk [vmem:[%s1 + $0x9] sm:$0x1] %vm214, %v295
  %384 = vst.msk [vmem:[%s1 + $0xb] sm:$0x1] %vm214, %v309
  %385 = vst.msk [vmem:[%s1 + $0xd] sm:$0x1] %vm214, %v311
  %386 = vst.msk [vmem:[%s1 + $0xf] sm:$0x1] %vm214, %v313
  %387 = vst.msk [vmem:[%s1 + $0x11] sm:$0x1] %vm214, %v337
  %388 = vst.msk [vmem:[%s1 + $0x13] sm:$0x1] %vm214, %v351
  %389 = vst.msk [vmem:[%s1 + $0x15] sm:$0x1] %vm214, %v359
  %390 = vst.msk [vmem:[%s1 + $0x17] sm:$0x1] %vm214, %v361
  %391 = vst.msk [vmem:[%s1 + $0x19] sm:$0x1] %vm214, %v344
  %392 = vst.msk [vmem:[%s1 + $0x1b] sm:$0x1] %vm214, %v358
  %393 = vst.msk [vmem:[%s1 + $0x1d] sm:$0x1] %vm214, %v360
  %394 = vst.msk [vmem:[%s1 + $0x1f] sm:$0x1] %vm214, %v362
  // Predicated region
  $region6: #{lstm_speaker_encoder_forward.4} parent=0 // pred_check
    _
  $region7: #{lstm_speaker_encoder_forward.4} parent=0 // pred_check_branch
    %396 = sbr.rel (0) target = $region9
  $region8: #{lstm_speaker_encoder_forward.4} parent=0 // pred_region
    _
  $region9: #{lstm_speaker_encoder_forward.4} parent=0 // pred_fallthru
    _
  // Predicated region
  $region10: #{lstm_speaker_encoder_forward.4} parent=0 // pred_check
    _
  $region11: #{lstm_speaker_encoder_forward.4} parent=0 // pred_check_branch
    %398 = sbr.rel (0) target = $region13
  $region12: #{lstm_speaker_encoder_forward.4} parent=0 // pred_region
    _
  $region13: #{lstm_speaker_encoder_forward.4} parent=0 // pred_fallthru
    _

// kernel: lstm_speaker_encoder_forward.5
$region0: #{lstm_speaker_encoder_forward.5}
  #allocation0 [shape = 'u32[]', space=smem, size = 0x4, offset = 0x4, fixed_abs, tag = 'smem constant byte address 0x4 - core index']
  #allocation1 [shape = 'u32[144,128]{1,0:T(1,128)}', space=vmem, size = 0x12000, scoped, tag = 'internal scratch']
  #allocation2 [shape = 'f32[2,32]{1,0:T(2,128)}', space=vmem, size = 0x400, scoped, tag = 'scratch operand']
  #allocation3 [shape = 'f32[2,32]{1,0:T(2,128)}', space=vmem, size = 0x400, scoped, tag = 'scratch operand']
  #allocation4 [shape = 'f32[8,2,128]{2,1,0:T(2,128)}', space=vmem, size = 0x2000, scoped, tag = 'scratch operand']
  #allocation5 [shape = 'f32[8,2,32]{2,1,0:T(2,128)}', space=vmem, size = 0x2000, scoped, tag = 'scratch operand']
  %s0 = inlined_call_operand.vmem [shape: f32[16,2,16], index: 0, kind: input, shape index: {}]
  %s1 = inlined_call_operand.vmem [shape: bf16[16,128], index: 1, kind: input, shape index: {}]
  %s2 = inlined_call_operand.vmem [shape: bf16[32,128], index: 2, kind: input, shape index: {}]
  %s3 = inlined_call_operand.vmem [shape: f32[1,128], index: 3, kind: input, shape index: {}]
  %s4 = inlined_call_operand.vmem [shape: bf16[32,16], index: 4, kind: input, shape index: {}]
  %s5 = inlined_call_operand.vmem [shape: bf16[16,2,16], index: 5, kind: output, shape index: {}]
  %s6 = sld [smem:[#allocation0]]
  $region57: #{lstm_speaker_encoder_forward.5} parent=0
    _
  %s8 = ssub.s32 1, %s6
  %s9 = scalar_select 0, %s8, %s6
  loop: start=0, step=1, limit=4
  $region2: #{lstm_speaker_encoder_forward.5} parent=0 // loop_pre_header
    _
  $region3: #{lstm_speaker_encoder_forward.5} parent=0 // loop_header
    %s11 = sphi 0, %s15
    %p12 = scmp.ge.s32.totalorder %s11, 4
    %s21 = sphi 0, %s23
    %s24 = sphi 0, %s21
    %s25 = sphi 0, %s24
    %s41 = sphi 0, %s25
    %s45 = sphi 0, %s45
    %s47 = sphi 0, %s45
    %s48 = sphi 0, %s47
    %s62 = sphi 0, %s48
    %s66 = sphi 0, %s66
    %s68 = sphi 0, %s66
    %s69 = sphi 0, %s68
    %s83 = sphi 0, %s69
    %s87 = sphi 0, %s87
    %s89 = sphi 0, %s87
    %s90 = sphi 0, %s89
    %s104 = sphi 0, %s90
    %s108 = sphi 0, %s108
    %s110 = sphi 0, %s108
    %s111 = sphi 0, %s110
    %s125 = sphi 0, %s111
    %s131 = sphi 0, %s133
    %s134 = sphi 0, %s131
    %s135 = sphi 0, %s134
    %s151 = sphi 0, %s135
  $region4: #{lstm_speaker_encoder_forward.5} parent=0 // loop_header_branch
    %14 = sbr.rel (%p12) target = $region8
  $region5: #{lstm_speaker_encoder_forward.5} parent=0 // loop_body
    %s16 = ssub.s32 %s11, 1
    %s17 = ssub.s32 %s11, 2
    %s18 = sadd.s32 %s11, 1
    %s19 = ssub.s32 %s11, %s18
    %p20 = scmp.eq.s32.totalorder %s19, 0
    %s22 = sadd.s32 %s21, 1
    %s23 = scalar_select %p20, %s21, %s22
    %p26 = pneg %p20
    %p27 = scmp.eq.s32.totalorder %s11, 1
    %p28 = por %p26, %p27
    %p29 = scmp.ne.s32.totalorder %s21, %s24
    %p30 = scmp.eq.s32.totalorder %s11, 0
    %p31 = por %p29, %p30
    %p32 = scmp.ne.s32.totalorder %s21, %s24
    %p33 = scmp.eq.s32.totalorder %s16, 1
    %p34 = por %p32, %p33
    %p35 = scmp.ne.s32.totalorder %s24, %s25
    %p36 = scmp.eq.s32.totalorder %s16, 0
    %p37 = por %p35, %p36
    %p38 = scmp.ne.s32.totalorder %s24, %s25
    %p39 = scmp.eq.s32.totalorder %s17, 1
    %p40 = por %p38, %p39
    %p42 = scmp.ne.s32.totalorder %s25, %s41
    %p43 = scmp.eq.s32.totalorder %s17, 0
    %p44 = por %p42, %p43
    %s46 = sadd.s32 %s45, 1
    %p49 = scmp.eq.s32.totalorder %s11, 1
    %p50 = scmp.ne.s32.totalorder %s45, %s47
    %p51 = scmp.eq.s32.totalorder %s11, 0
    %p52 = por %p50, %p51
    %p53 = scmp.ne.s32.totalorder %s45, %s47
    %p54 = scmp.eq.s32.totalorder %s16, 1
    %p55 = por %p53, %p54
    %p56 = scmp.ne.s32.totalorder %s47, %s48
    %p57 = scmp.eq.s32.totalorder %s16, 0
    %p58 = por %p56, %p57
    %p59 = scmp.ne.s32.totalorder %s47, %s48
    %p60 = scmp.eq.s32.totalorder %s17, 1
    %p61 = por %p59, %p60
    %p63 = scmp.ne.s32.totalorder %s48, %s62
    %p64 = scmp.eq.s32.totalorder %s17, 0
    %p65 = por %p63, %p64
    %s67 = sadd.s32 %s66, 1
    %p70 = scmp.eq.s32.totalorder %s11, 1
    %p71 = scmp.ne.s32.totalorder %s66, %s68
    %p72 = scmp.eq.s32.totalorder %s11, 0
    %p73 = por %p71, %p72
    %p74 = scmp.ne.s32.totalorder %s66, %s68
    %p75 = scmp.eq.s32.totalorder %s16, 1
    %p76 = por %p74, %p75
    %p77 = scmp.ne.s32.totalorder %s68, %s69
    %p78 = scmp.eq.s32.totalorder %s16, 0
    %p79 = por %p77, %p78
    %p80 = scmp.ne.s32.totalorder %s68, %s69
    %p81 = scmp.eq.s32.totalorder %s17, 1
    %p82 = por %p80, %p81
    %p84 = scmp.ne.s32.totalorder %s69, %s83
    %p85 = scmp.eq.s32.totalorder %s17, 0
    %p86 = por %p84, %p85
    %s88 = sadd.s32 %s87, 1
    %p91 = scmp.eq.s32.totalorder %s11, 1
    %p92 = scmp.ne.s32.totalorder %s87, %s89
    %p93 = scmp.eq.s32.totalorder %s11, 0
    %p94 = por %p92, %p93
    %p95 = scmp.ne.s32.totalorder %s87, %s89
    %p96 = scmp.eq.s32.totalorder %s16, 1
    %p97 = por %p95, %p96
    %p98 = scmp.ne.s32.totalorder %s89, %s90
    %p99 = scmp.eq.s32.totalorder %s16, 0
    %p100 = por %p98, %p99
    %p101 = scmp.ne.s32.totalorder %s89, %s90
    %p102 = scmp.eq.s32.totalorder %s17, 1
    %p103 = por %p101, %p102
    %p105 = scmp.ne.s32.totalorder %s90, %s104
    %p106 = scmp.eq.s32.totalorder %s17, 0
    %p107 = por %p105, %p106
    %s109 = sadd.s32 %s108, 1
    %p112 = scmp.eq.s32.totalorder %s11, 1
    %p113 = scmp.ne.s32.totalorder %s108, %s110
    %p114 = scmp.eq.s32.totalorder %s11, 0
    %p115 = por %p113, %p114
    %p116 = scmp.ne.s32.totalorder %s108, %s110
    %p117 = scmp.eq.s32.totalorder %s16, 1
    %p118 = por %p116, %p117
    %p119 = scmp.ne.s32.totalorder %s110, %s111
    %p120 = scmp.eq.s32.totalorder %s16, 0
    %p121 = por %p119, %p120
    %p122 = scmp.ne.s32.totalorder %s110, %s111
    %p123 = scmp.eq.s32.totalorder %s17, 1
    %p124 = por %p122, %p123
    %p126 = scmp.ne.s32.totalorder %s111, %s125
    %p127 = scmp.eq.s32.totalorder %s17, 0
    %p128 = por %p126, %p127
    %s129 = ssub.s32 %s11, %s18
    %p130 = scmp.eq.s32.totalorder %s129, 0
    %s132 = sadd.s32 %s131, 1
    %s133 = scalar_select %p130, %s131, %s132
    %p136 = pneg %p130
    %p137 = scmp.eq.s32.totalorder %s11, 1
    %p138 = por %p136, %p137
    %p139 = scmp.ne.s32.totalorder %s131, %s134
    %p140 = scmp.eq.s32.totalorder %s11, 0
    %p141 = por %p139, %p140
    %p142 = scmp.ne.s32.totalorder %s131, %s134
    %p143 = scmp.eq.s32.totalorder %s16, 1
    %p144 = por %p142, %p143
    %p145 = scmp.ne.s32.totalorder %s134, %s135
    %p146 = scmp.eq.s32.totalorder %s16, 0
    %p147 = por %p145, %p146
    %p148 = scmp.ne.s32.totalorder %s134, %s135
    %p149 = scmp.eq.s32.totalorder %s17, 1
    %p150 = por %p148, %p149
    %p152 = scmp.ne.s32.totalorder %s135, %s151
    %p153 = scmp.eq.s32.totalorder %s17, 0
    %p154 = por %p152, %p153
    %p155 = scmp.le.s32.totalorder 1, %s11
    %p156 = scmp.lt.s32.totalorder %s11, 3
    %p157 = pnand %p155, %p156
    %p158 = pneg %p157
    // Predicated region
    $region9: #{lstm_speaker_encoder_forward.5} parent=5 // pred_check
      _
    $region10: #{lstm_speaker_encoder_forward.5} parent=5 // pred_check_branch
      %160 = sbr.rel (%p157) target = $region12
    $region11: #{lstm_speaker_encoder_forward.5} parent=5 // pred_region
      %s161 = ssub.s32 %s11, 1
      // Predicated region
      $region13: #{lstm_speaker_encoder_forward.5} parent=11 // pred_check
        %p162 = pneg %p58
      $region14: #{lstm_speaker_encoder_forward.5} parent=11 // pred_check_branch
        %164 = sbr.rel (%p162) target = $region16
      $region15: #{lstm_speaker_encoder_forward.5} parent=11 // pred_region
        _
      $region16: #{lstm_speaker_encoder_forward.5} parent=11 // pred_fallthru
        _
      // Predicated region
      $region17: #{lstm_speaker_encoder_forward.5} parent=11 // pred_check
        %p165 = pneg %p79
      $region18: #{lstm_speaker_encoder_forward.5} parent=11 // pred_check_branch
        %167 = sbr.rel (%p165) target = $region20
      $region19: #{lstm_speaker_encoder_forward.5} parent=11 // pred_region
        _
      $region20: #{lstm_speaker_encoder_forward.5} parent=11 // pred_fallthru
        _
      // Predicated region
      $region21: #{lstm_speaker_encoder_forward.5} parent=11 // pred_check
        %p168 = pneg %p100
      $region22: #{lstm_speaker_encoder_forward.5} parent=11 // pred_check_branch
        %170 = sbr.rel (%p168) target = $region24
      $region23: #{lstm_speaker_encoder_forward.5} parent=11 // pred_region
        _
      $region24: #{lstm_speaker_encoder_forward.5} parent=11 // pred_fallthru
        _
      // Predicated region
      $region25: #{lstm_speaker_encoder_forward.5} parent=11 // pred_check
        %p171 = pneg %p121
      $region26: #{lstm_speaker_encoder_forward.5} parent=11 // pred_check_branch
        %173 = sbr.rel (%p171) target = $region28
      $region27: #{lstm_speaker_encoder_forward.5} parent=11 // pred_region
        _
      $region28: #{lstm_speaker_encoder_forward.5} parent=11 // pred_fallthru
        _
    $region12: #{lstm_speaker_encoder_forward.5} parent=5 // pred_fallthru
      _
    %p174 = scmp.lt.s32.totalorder %s11, 2
    // Predicated region
    $region29: #{lstm_speaker_encoder_forward.5} parent=5 // pred_check
      %p175 = pneg %p174
    $region30: #{lstm_speaker_encoder_forward.5} parent=5 // pred_check_branch
      %177 = sbr.rel (%p175) target = $region32
    $region31: #{lstm_speaker_encoder_forward.5} parent=5 // pred_region
      // Predicated region
      $region33: #{lstm_speaker_encoder_forward.5} parent=31 // pred_check
        %p178 = pneg %p31
      $region34: #{lstm_speaker_encoder_forward.5} parent=31 // pred_check_branch
        %180 = sbr.rel (%p178) target = $region36
      $region35: #{lstm_speaker_encoder_forward.5} parent=31 // pred_region
        %s181 = smul.u32 8, %s11
        %p182 = scmp.lt.s32.totalorder %s181, 15
        %s183 = scalar_select %p182, %s181, 15
        %s184 = smul.addr %s183, 2
        %s185 = scalar_lea.vmem %s0, %s184
        %s186 = smul.u32 8, %s11
      $region36: #{lstm_speaker_encoder_forward.5} parent=31 // pred_fallthru
        _
    $region32: #{lstm_speaker_encoder_forward.5} parent=5 // pred_fallthru
      _
    %p187 = scmp.le.s32.totalorder 1, %s11
    %p188 = scmp.lt.s32.totalorder %s11, 3
    %p189 = pnand %p187, %p188
    %p190 = pneg %p189
    // Predicated region
    $region37: #{lstm_speaker_encoder_forward.5} parent=5 // pred_check
      _
    $region38: #{lstm_speaker_encoder_forward.5} parent=5 // pred_check_branch
      %192 = sbr.rel (%p189) target = $region40
    $region39: #{lstm_speaker_encoder_forward.5} parent=5 // pred_region
      %s193 = ssub.s32 %s11, 1
      %s194 = smul.u32 8, %s16
      %p195 = scmp.lt.s32.totalorder %s194, 15
      %s196 = scalar_select %p195, %s194, 15
      %s197 = smul.addr %s196, 2
      %s198 = scalar_lea.vmem %s0, %s197
      %p199 = pneg %p37
      %p200 = pneg %p34
      %p201 = pneg %p58
      %p202 = pneg %p55
      %p203 = pneg %p79
      %p204 = pneg %p76
      %p205 = pneg %p100
      %p206 = pneg %p97
      %p207 = pneg %p121
      %p208 = pneg %p118
      %p209 = pneg %p147
      %p210 = pneg %p144
      %s211 = smul.u32 8, %s16
      %p212 = scmp.lt.s32.totalorder %s211, 15
      %s213 = scalar_select %p212, %s211, 15
      %s214 = scalar_lea.vmem %s5, %s213
      %s215 = smul.u32 8, %s16
      %p216 = scmp.lt.s32.totalorder %s215, 15
      %s217 = scalar_select %p216, %s215, 15
      %s218 = smul.addr %s217, 2
      %s219 = scalar_lea.vmem %s0, %s218
      %s220 = smul.u32 8, %s16
      %s221 = smul.u32 8, %s16
      %p222 = scmp.lt.s32.totalorder %s221, 15
      %s223 = scalar_select %p222, %s221, 15
      %s224 = scalar_lea.vmem %s5, %s223
      %s225 = smul.u32 8, %s16
      %p227 = scmp.eq.s32.totalorder %s16, 0
      // Predicated region
      $region41: #{lstm_speaker_encoder_forward.5} parent=39 // pred_check
        %p228 = pneg %p227
      $region42: #{lstm_speaker_encoder_forward.5} parent=39 // pred_check_branch
        %230 = sbr.rel (%p228) target = $region44
      $region43: #{lstm_speaker_encoder_forward.5} parent=39 // pred_region
        %vm231 = vcmask 254976
        %232 = vst.msk [vmem:[#allocation2] sm:$0x3] %vm231, 0.0
        %233 = vst.msk [vmem:[#allocation3] sm:$0x3] %vm231, 0.0
      $region44: #{lstm_speaker_encoder_forward.5} parent=39 // pred_fallthru
        _
      %v234 = vld [vmem:[%s219] sm:$0x3]
      %v235 = vld [vmem:[%s219 + $0x2] sm:$0x3]
      %v236 = vld [vmem:[%s219 + $0x4] sm:$0x3]
      %v237 = vld [vmem:[%s219 + $0x6] sm:$0x3]
      %v238 = vld [vmem:[%s219 + $0x8] sm:$0x3]
      %v239 = vld [vmem:[%s219 + $0xa] sm:$0x3]
      %v240 = vld [vmem:[%s219 + $0xc] sm:$0x3]
      %v241 = vld [vmem:[%s219 + $0xe] sm:$0x3]
      %v250 = vcombine.low %v234, %v235
      %v251 = vcombine.low %v236, %v237
      %v253 = vunpack.c.l.s4 1983009808
      %v254 = vunpack.c.0.s8 %v253
      %v255 = vlaneseq
      %v256 = vshrl.u32 %v255, 7
      %v257 = vsub.s32 %v254, %v256
      %v258 = vrot.slane %v250, %v257
      %v260 = vunpack.c.l.s4 1983009808
      %v261 = vunpack.c.0.s8 %v260
      %v262 = vlaneseq
      %v263 = vshrl.u32 %v262, 7
      %v264 = vsub.s32 %v261, %v263
      %v265 = vrot.slane %v251, %v264
      %v266 = vcombine.low %v258, %v265
      %v267 = vcombine.low %v238, %v239
      %v268 = vcombine.low %v240, %v241
      %v270 = vunpack.c.l.s4 1983009808
      %v271 = vunpack.c.0.s8 %v270
      %v272 = vlaneseq
      %v273 = vshrl.u32 %v272, 7
      %v274 = vsub.s32 %v271, %v273
      %v275 = vrot.slane %v267, %v274
      %v277 = vunpack.c.l.s4 1983009808
      %v278 = vunpack.c.0.s8 %v277
      %v279 = vlaneseq
      %v280 = vshrl.u32 %v279, 7
      %v281 = vsub.s32 %v278, %v280
      %v282 = vrot.slane %v268, %v281
      %v283 = vcombine.low %v275, %v282
      %v286 = vpack.c.bf16 %v283, %v266
      %v287 = vld [vmem:[%s1] sm:$0xf]
      %v288 = vld [vmem:[%s1 + $0x4] sm:$0xf]
      %v289 = vld [vmem:[%s3] sm:$0x1]
      %v291 = vlaneseq
      %v292 = vshrl.u32 %v291, 7
      %v293 = vsub.s32 0, %v292
      %v294 = vrot.slane %v289, %v293
      %v298 = vunpack.c.l.b16 %v287
      %v299 = vunpack.c.l.b16 %v288
      %v300 = vpack.c.b16 %v299, %v298
      %vm302 = vcmask 130048
      %v304 = vsel %vm302, %v286, 0
      %306 = vmatprep.subr.bf16.mxu0 0
      %307 = vmatpush1.bf16.msra.mxu0 %v300
      %308 = vmatprep.subr.bf16.mxu0 0
      %309 = vmatpush1.bf16.msra.mxu0 0
      %310 = vmatprep.subr.bf16.mxu0 0
      %311 = vmatpush1.bf16.msra.mxu0 0
      %312 = vmatprep.subr.bf16.mxu0 0
      %313 = vmatpush1.bf16.msra.mxu0 0
      %314 = vmatprep.subr.bf16.mxu0 0
      %315 = vmatpush1.bf16.msra.mxu0 0
      %316 = vmatprep.subr.bf16.mxu0 0
      %317 = vmatpush1.bf16.msra.mxu0 0
      %318 = vmatprep.subr.bf16.mxu0 0
      %319 = vmatpush1.bf16.msra.mxu0 0
      %320 = vmatprep.subr.bf16.mxu0 0
      %321 = vmatpush1.bf16.msra.mxu0 0
      %322 = vmatprep.subr.bf16.mxu0 0
      %323 = vmatpush1.bf16.msra.mxu0 0
      %324 = vmatprep.subr.bf16.mxu0 0
      %325 = vmatpush1.bf16.msra.mxu0 0
      %326 = vmatprep.subr.bf16.mxu0 0
      %327 = vmatpush1.bf16.msra.mxu0 0
      %328 = vmatprep.subr.bf16.mxu0 0
      %329 = vmatpush1.bf16.msra.mxu0 0
      %330 = vmatprep.subr.bf16.mxu0 0
      %331 = vmatpush1.bf16.msra.mxu0 0
      %332 = vmatprep.subr.bf16.mxu0 0
      %333 = vmatpush1.bf16.msra.mxu0 0
      %334 = vmatprep.subr.bf16.mxu0 0
      %335 = vmatpush1.bf16.msra.mxu0 0
      %336 = vmatprep.subr.bf16.mxu0 0
      %337 = vmatpush1.bf16.msra.mxu0 0
      %338 = vmatprep.mubr.bf16.mxu0 0
      %339 = vmatmul.mubr.bf16.gmra.mrb[0].mxu0 %v304
      %v340 = vpop.f32.mrb[0].mxu0
      %v341 = vadd.f32 %v294, %v340
      %v342 = vpop.f32.mrb[0].mxu0
      %v343 = vpop.f32.mrb[0].mxu0
      %v344 = vadd.f32 %v294, %v343
      %v345 = vpop.f32.mrb[0].mxu0
      %346 = vdwg.mxu0
      %v349 = vcombine.high %v341, %v341
      %v351 = vunpack.c.l.s4 1983009808
      %v352 = vunpack.c.0.s8 %v351
      %v353 = vlaneseq
      %v354 = vshrl.u32 %v353, 7
      %v355 = vsub.s32 %v352, %v354
      %v356 = vrot.slane %v341, %v355
      %v358 = vunpack.c.l.s4 1983009808
      %v359 = vunpack.c.0.s8 %v358
      %v360 = vlaneseq
      %v361 = vshrl.u32 %v360, 7
      %v362 = vsub.s32 %v359, %v361
      %v363 = vrot.slane %v349, %v362
      %v364 = vcombine.high %v356, %v356
      %v365 = vcombine.high %v363, %v363
      %v366 = vcombine.high %v344, %v344
      %v368 = vunpack.c.l.s4 1983009808
      %v369 = vunpack.c.0.s8 %v368
      %v370 = vlaneseq
      %v371 = vshrl.u32 %v370, 7
      %v372 = vsub.s32 %v369, %v371
      %v373 = vrot.slane %v344, %v372
      %v375 = vunpack.c.l.s4 1983009808
      %v376 = vunpack.c.0.s8 %v375
      %v377 = vlaneseq
      %v378 = vshrl.u32 %v377, 7
      %v379 = vsub.s32 %v376, %v378
      %v380 = vrot.slane %v366, %v379
      %v381 = vcombine.high %v373, %v373
      %v382 = vcombine.high %v380, %v380
      %391 = vst [vmem:[#allocation4] sm:$0x3] %v356
      %392 = vst [vmem:[#allocation4 + $0x2] sm:$0x3] %v364
      %393 = vst [vmem:[#allocation4 + $0x4] sm:$0x3] %v363
      %394 = vst [vmem:[#allocation4 + $0x6] sm:$0x3] %v365
      %395 = vst [vmem:[#allocation4 + $0x8] sm:$0x3] %v373
      %396 = vst [vmem:[#allocation4 + $0xa] sm:$0x3] %v381
      %397 = vst [vmem:[#allocation4 + $0xc] sm:$0x3] %v380
      %398 = vst [vmem:[#allocation4 + $0xe] sm:$0x3] %v382
      %v399 = vld [vmem:[%s2] sm:$0xf]
      %v400 = vld [vmem:[%s2 + $0x4] sm:$0xf]
      %v401 = vld [vmem:[%s2 + $0x8] sm:$0xf]
      %v402 = vld [vmem:[%s2 + $0xc] sm:$0xf]
      %v403 = vld [vmem:[#allocation2] sm:$0x3]
      %v404 = vld [vmem:[#allocation3] sm:$0x3]
      %v405 = vld [vmem:[#allocation4] sm:$0x3]
      %v406 = vpack.c.bf16 %v403, %v403
      %v411 = vunpack.c.l.b16 %v399
      %v412 = vunpack.c.l.b16 %v400
      %v413 = vunpack.c.l.b16 %v401
      %v414 = vunpack.c.l.b16 %v402
      %v415 = vpack.c.b16 %v412, %v411
      %v416 = vpack.c.b16 %v414, %v413
      %vm419 = vcmask 261120
      %v421 = vsel %vm419, %v406, 0
      %423 = vmatprep.subr.bf16.mxu0 0
      %424 = vmatpush1.bf16.msra.mxu0 %v415
      %425 = vmatprep.subr.bf16.mxu0 0
      %426 = vmatpush1.bf16.msra.mxu0 %v416
      %427 = vmatprep.subr.bf16.mxu0 0
      %428 = vmatpush1.bf16.msra.mxu0 0
      %429 = vmatprep.subr.bf16.mxu0 0
      %430 = vmatpush1.bf16.msra.mxu0 0
      %431 = vmatprep.subr.bf16.mxu0 0
      %432 = vmatpush1.bf16.msra.mxu0 0
      %433 = vmatprep.subr.bf16.mxu0 0
      %434 = vmatpush1.bf16.msra.mxu0 0
      %435 = vmatprep.subr.bf16.mxu0 0
      %436 = vmatpush1.bf16.msra.mxu0 0
      %437 = vmatprep.subr.bf16.mxu0 0
      %438 = vmatpush1.bf16.msra.mxu0 0
      %439 = vmatprep.subr.bf16.mxu0 0
      %440 = vmatpush1.bf16.msra.mxu0 0
      %441 = vmatprep.subr.bf16.mxu0 0
      %442 = vmatpush1.bf16.msra.mxu0 0
      %443 = vmatprep.subr.bf16.mxu0 0
      %444 = vmatpush1.bf16.msra.mxu0 0
      %445 = vmatprep.subr.bf16.mxu0 0
      %446 = vmatpush1.bf16.msra.mxu0 0
      %447 = vmatprep.subr.bf16.mxu0 0
      %448 = vmatpush1.bf16.msra.mxu0 0
      %449 = vmatprep.subr.bf16.mxu0 0
      %450 = vmatpush1.bf16.msra.mxu0 0
      %451 = vmatprep.subr.bf16.mxu0 0
      %452 = vmatpush1.bf16.msra.mxu0 0
      %453 = vmatprep.subr.bf16.mxu0 0
      %454 = vmatpush1.bf16.msra.mxu0 0
      %455 = vmatprep.mubr.bf16.mxu0 0
      %456 = vmatmul.mubr.bf16.gmra.mrb[0].mxu0 %v421
      %v457 = vpop.f32.mrb[0].mxu0
      %v458 = vadd.f32 0.0, %v457
      %v459 = vpop.f32.mrb[0].mxu0
      %v460 = vpop.f32.mrb[0].mxu0
      %v461 = vpop.f32.mrb[0].mxu0
      %462 = vdwg.mxu0
      %v463 = vadd.f32 %v405, %v458
      %v464 = vxor.u32 %v463, 2147483648
      %v465 = vmul.f32 %v464, 1.442695
      %v466 = vpow.pop %v465
      %v467 = vadd.f32 %v466, 1.0
      %v468 = vrcp.pop %v467
      %v469 = vmul.f32 1.0, %v468
      %v470 = vtanh.pop %v463
      %472 = vrot.lane.b32.xlu0 %v404, 32
      %v473 = vpop.permute.xlu0 %472
      %v475 = vmul.f32 %v469, %v473
      %477 = vrot.lane.b32.xlu0 %v470, 64
      %v478 = vpop.permute.xlu0 %477
      %v480 = vmul.f32 %v469, %v478
      %482 = vrot.lane.b32.xlu0 %v480, 32
      %v483 = vpop.permute.xlu0 %482
      %v485 = vadd.f32 %v475, %v483
      %v486 = vtanh.pop %v485
      %488 = vrot.lane.b32.xlu0 %v486, 64
      %v489 = vpop.permute.xlu0 %488
      %v491 = vmul.f32 %v469, %v489
      %493 = vrot.lane.b32.xlu0 %v491, 32
      %v494 = vpop.permute.xlu0 %493
      %vm496 = vcmask 254976
      %497 = vst.msk [vmem:[#allocation2] sm:$0x3] %vm496, %v494
      %499 = vrot.lane.b32.xlu0 %v485, 96
      %v500 = vpop.permute.xlu0 %499
      %502 = vst.msk [vmem:[#allocation3] sm:$0x3] %vm496, %v500
      %503 = vst.msk [vmem:[#allocation5] sm:$0x3] %vm496, %v494
      %v504 = vld [vmem:[#allocation2] sm:$0x3]
      %v505 = vld [vmem:[#allocation3] sm:$0x3]
      %s506 = scalar_lea.vmem [#allocation4], 2
      %v507 = vld [vmem:[%s506] sm:$0x3]
      %v508 = vpack.c.bf16 %v504, %v504
      %v510 = vsel %vm419, %v508, 0
      %512 = vmatprep.subr.bf16.mxu0 0
      %513 = vmatpush1.bf16.msra.mxu0 %v415
      %514 = vmatprep.subr.bf16.mxu0 0
      %515 = vmatpush1.bf16.msra.mxu0 %v416
      %516 = vmatprep.subr.bf16.mxu0 0
      %517 = vmatpush1.bf16.msra.mxu0 0
      %518 = vmatprep.subr.bf16.mxu0 0
      %519 = vmatpush1.bf16.msra.mxu0 0
      %520 = vmatprep.subr.bf16.mxu0 0
      %521 = vmatpush1.bf16.msra.mxu0 0
      %522 = vmatprep.subr.bf16.mxu0 0
      %523 = vmatpush1.bf16.msra.mxu0 0
      %524 = vmatprep.subr.bf16.mxu0 0
      %525 = vmatpush1.bf16.msra.mxu0 0
      %526 = vmatprep.subr.bf16.mxu0 0
      %527 = vmatpush1.bf16.msra.mxu0 0
      %528 = vmatprep.subr.bf16.mxu0 0
      %529 = vmatpush1.bf16.msra.mxu0 0
      %530 = vmatprep.subr.bf16.mxu0 0
      %531 = vmatpush1.bf16.msra.mxu0 0
      %532 = vmatprep.subr.bf16.mxu0 0
      %533 = vmatpush1.bf16.msra.mxu0 0
      %534 = vmatprep.subr.bf16.mxu0 0
      %535 = vmatpush1.bf16.msra.mxu0 0
      %536 = vmatprep.subr.bf16.mxu0 0
      %537 = vmatpush1.bf16.msra.mxu0 0
      %538 = vmatprep.subr.bf16.mxu0 0
      %539 = vmatpush1.bf16.msra.mxu0 0
      %540 = vmatprep.subr.bf16.mxu0 0
      %541 = vmatpush1.bf16.msra.mxu0 0
      %542 = vmatprep.subr.bf16.mxu0 0
      %543 = vmatpush1.bf16.msra.mxu0 0
      %544 = vmatprep.mubr.bf16.mxu0 0
      %545 = vmatmul.mubr.bf16.gmra.mrb[0].mxu0 %v510
      %v546 = vpop.f32.mrb[0].mxu0
      %v547 = vadd.f32 0.0, %v546
      %v548 = vpop.f32.mrb[0].mxu0
      %v549 = vpop.f32.mrb[0].mxu0
      %v550 = vpop.f32.mrb[0].mxu0
      %551 = vdwg.mxu0
      %v552 = vadd.f32 %v507, %v547
      %v553 = vxor.u32 %v552, 2147483648
      %v554 = vmul.f32 %v553, 1.442695
      %v555 = vpow.pop %v554
      %v556 = vadd.f32 %v555, 1.0
      %v557 = vrcp.pop %v556
      %v558 = vmul.f32 1.0, %v557
      %v559 = vtanh.pop %v552
      %561 = vrot.lane.b32.xlu0 %v505, 32
      %v562 = vpop.permute.xlu0 %561
      %v564 = vmul.f32 %v558, %v562
      %566 = vrot.lane.b32.xlu0 %v559, 64
      %v567 = vpop.permute.xlu0 %566
      %v569 = vmul.f32 %v558, %v567
      %571 = vrot.lane.b32.xlu0 %v569, 32
      %v572 = vpop.permute.xlu0 %571
      %v574 = vadd.f32 %v564, %v572
      %v575 = vtanh.pop %v574
      %577 = vrot.lane.b32.xlu0 %v575, 64
      %v578 = vpop.permute.xlu0 %577
      %v580 = vmul.f32 %v558, %v578
      %582 = vrot.lane.b32.xlu0 %v580, 32
      %v583 = vpop.permute.xlu0 %582
      %585 = vst.msk [vmem:[#allocation2] sm:$0x3] %vm496, %v583
      %587 = vrot.lane.b32.xlu0 %v574, 96
      %v588 = vpop.permute.xlu0 %587
      %590 = vst.msk [vmem:[#allocation3] sm:$0x3] %vm496, %v588
      %s591 = scalar_lea.vmem [#allocation5], 2
      %592 = vst.msk [vmem:[%s591] sm:$0x3] %vm496, %v583
      %v593 = vld [vmem:[#allocation2] sm:$0x3]
      %v594 = vld [vmem:[#allocation3] sm:$0x3]
      %s595 = scalar_lea.vmem [#allocation4], 4
      %v596 = vld [vmem:[%s595] sm:$0x3]
      %v597 = vpack.c.bf16 %v593, %v593
      %v599 = vsel %vm419, %v597, 0
      %601 = vmatprep.subr.bf16.mxu0 0
      %602 = vmatpush1.bf16.msra.mxu0 %v415
      %603 = vmatprep.subr.bf16.mxu0 0
      %604 = vmatpush1.bf16.msra.mxu0 %v416
      %605 = vmatprep.subr.bf16.mxu0 0
      %606 = vmatpush1.bf16.msra.mxu0 0
      %607 = vmatprep.subr.bf16.mxu0 0
      %608 = vmatpush1.bf16.msra.mxu0 0
      %609 = vmatprep.subr.bf16.mxu0 0
      %610 = vmatpush1.bf16.msra.mxu0 0
      %611 = vmatprep.subr.bf16.mxu0 0
      %612 = vmatpush1.bf16.msra.mxu0 0
      %613 = vmatprep.subr.bf16.mxu0 0
      %614 = vmatpush1.bf16.msra.mxu0 0
      %615 = vmatprep.subr.bf16.mxu0 0
      %616 = vmatpush1.bf16.msra.mxu0 0
      %617 = vmatprep.subr.bf16.mxu0 0
      %618 = vmatpush1.bf16.msra.mxu0 0
      %619 = vmatprep.subr.bf16.mxu0 0
      %620 = vmatpush1.bf16.msra.mxu0 0
      %621 = vmatprep.subr.bf16.mxu0 0
      %622 = vmatpush1.bf16.msra.mxu0 0
      %623 = vmatprep.subr.bf16.mxu0 0
      %624 = vmatpush1.bf16.msra.mxu0 0
      %625 = vmatprep.subr.bf16.mxu0 0
      %626 = vmatpush1.bf16.msra.mxu0 0
      %627 = vmatprep.subr.bf16.mxu0 0
      %628 = vmatpush1.bf16.msra.mxu0 0
      %629 = vmatprep.subr.bf16.mxu0 0
      %630 = vmatpush1.bf16.msra.mxu0 0
      %631 = vmatprep.subr.bf16.mxu0 0
      %632 = vmatpush1.bf16.msra.mxu0 0
      %633 = vmatprep.mubr.bf16.mxu0 0
      %634 = vmatmul.mubr.bf16.gmra.mrb[0].mxu0 %v599
      %v635 = vpop.f32.mrb[0].mxu0
      %v636 = vadd.f32 0.0, %v635
      %v637 = vpop.f32.mrb[0].mxu0
      %v638 = vpop.f32.mrb[0].mxu0
      %v639 = vpop.f32.mrb[0].mxu0
      %640 = vdwg.mxu0
      %v641 = vadd.f32 %v596, %v636
      %v642 = vxor.u32 %v641, 2147483648
      %v643 = vmul.f32 %v642, 1.442695
      %v644 = vpow.pop %v643
      %v645 = vadd.f32 %v644, 1.0
      %v646 = vrcp.pop %v645
      %v647 = vmul.f32 1.0, %v646
      %v648 = vtanh.pop %v641
      %650 = vrot.lane.b32.xlu0 %v594, 32
      %v651 = vpop.permute.xlu0 %650
      %v653 = vmul.f32 %v647, %v651
      %655 = vrot.lane.b32.xlu0 %v648, 64
      %v656 = vpop.permute.xlu0 %655
      %v658 = vmul.f32 %v647, %v656
      %660 = vrot.lane.b32.xlu0 %v658, 32
      %v661 = vpop.permute.xlu0 %660
      %v663 = vadd.f32 %v653, %v661
      %v664 = vtanh.pop %v663
      %666 = vrot.lane.b32.xlu0 %v664, 64
      %v667 = vpop.permute.xlu0 %666
      %v669 = vmul.f32 %v647, %v667
      %671 = vrot.lane.b32.xlu0 %v669, 32
      %v672 = vpop.permute.xlu0 %671
      %674 = vst.msk [vmem:[#allocation2] sm:$0x3] %vm496, %v672
      %676 = vrot.lane.b32.xlu0 %v663, 96
      %v677 = vpop.permute.xlu0 %676
      %679 = vst.msk [vmem:[#allocation3] sm:$0x3] %vm496, %v677
      %s680 = scalar_lea.vmem [#allocation5], 4
      %681 = vst.msk [vmem:[%s680] sm:$0x3] %vm496, %v672
      %v682 = vld [vmem:[#allocation2] sm:$0x3]
      %v683 = vld [vmem:[#allocation3] sm:$0x3]
      %s684 = scalar_lea.vmem [#allocation4], 6
      %v685 = vld [vmem:[%s684] sm:$0x3]
      %v686 = vpack.c.bf16 %v682, %v682
      %v688 = vsel %vm419, %v686, 0
      %690 = vmatprep.subr.bf16.mxu0 0
      %691 = vmatpush1.bf16.msra.mxu0 %v415
      %692 = vmatprep.subr.bf16.mxu0 0
      %693 = vmatpush1.bf16.msra.mxu0 %v416
      %694 = vmatprep.subr.bf16.mxu0 0
      %695 = vmatpush1.bf16.msra.mxu0 0
      %696 = vmatprep.subr.bf16.mxu0 0
      %697 = vmatpush1.bf16.msra.mxu0 0
      %698 = vmatprep.subr.bf16.mxu0 0
      %699 = vmatpush1.bf16.msra.mxu0 0
      %700 = vmatprep.subr.bf16.mxu0 0
      %701 = vmatpush1.bf16.msra.mxu0 0
      %702 = vmatprep.subr.bf16.mxu0 0
      %703 = vmatpush1.bf16.msra.mxu0 0
      %704 = vmatprep.subr.bf16.mxu0 0
      %705 = vmatpush1.bf16.msra.mxu0 0
      %706 = vmatprep.subr.bf16.mxu0 0
      %707 = vmatpush1.bf16.msra.mxu0 0
      %708 = vmatprep.subr.bf16.mxu0 0
      %709 = vmatpush1.bf16.msra.mxu0 0
      %710 = vmatprep.subr.bf16.mxu0 0
      %711 = vmatpush1.bf16.msra.mxu0 0
      %712 = vmatprep.subr.bf16.mxu0 0
      %713 = vmatpush1.bf16.msra.mxu0 0
      %714 = vmatprep.subr.bf16.mxu0 0
      %715 = vmatpush1.bf16.msra.mxu0 0
      %716 = vmatprep.subr.bf16.mxu0 0
      %717 = vmatpush1.bf16.msra.mxu0 0
      %718 = vmatprep.subr.bf16.mxu0 0
      %719 = vmatpush1.bf16.msra.mxu0 0
      %720 = vmatprep.subr.bf16.mxu0 0
      %721 = vmatpush1.bf16.msra.mxu0 0
      %722 = vmatprep.mubr.bf16.mxu0 0
      %723 = vmatmul.mubr.bf16.gmra.mrb[0].mxu0 %v688
      %v724 = vpop.f32.mrb[0].mxu0
      %v725 = vadd.f32 0.0, %v724
      %v726 = vpop.f32.mrb[0].mxu0
      %v727 = vpop.f32.mrb[0].mxu0
      %v728 = vpop.f32.mrb[0].mxu0
      %729 = vdwg.mxu0
      %v730 = vadd.f32 %v685, %v725
      %v731 = vxor.u32 %v730, 2147483648
      %v732 = vmul.f32 %v731, 1.442695
      %v733 = vpow.pop %v732
      %v734 = vadd.f32 %v733, 1.0
      %v735 = vrcp.pop %v734
      %v736 = vmul.f32 1.0, %v735
      %v737 = vtanh.pop %v730
      %739 = vrot.lane.b32.xlu0 %v683, 32
      %v740 = vpop.permute.xlu0 %739
      %v742 = vmul.f32 %v736, %v740
      %744 = vrot.lane.b32.xlu0 %v737, 64
      %v745 = vpop.permute.xlu0 %744
      %v747 = vmul.f32 %v736, %v745
      %749 = vrot.lane.b32.xlu0 %v747, 32
      %v750 = vpop.permute.xlu0 %749
      %v752 = vadd.f32 %v742, %v750
      %v753 = vtanh.pop %v752
      %755 = vrot.lane.b32.xlu0 %v753, 64
      %v756 = vpop.permute.xlu0 %755
      %v758 = vmul.f32 %v736, %v756
      %760 = vrot.lane.b32.xlu0 %v758, 32
      %v761 = vpop.permute.xlu0 %760
      %763 = vst.msk [vmem:[#allocation2] sm:$0x3] %vm496, %v761
      %765 = vrot.lane.b32.xlu0 %v752, 96
      %v766 = vpop.permute.xlu0 %765
      %768 = vst.msk [vmem:[#allocation3] sm:$0x3] %vm496, %v766
      %s769 = scalar_lea.vmem [#allocation5], 6
      %770 = vst.msk [vmem:[%s769] sm:$0x3] %vm496, %v761
      %v771 = vld [vmem:[#allocation2] sm:$0x3]
      %v772 = vld [vmem:[#allocation3] sm:$0x3]
      %s773 = scalar_lea.vmem [#allocation4], 8
      %v774 = vld [vmem:[%s773] sm:$0x3]
      %v775 = vpack.c.bf16 %v771, %v771
      %v777 = vsel %vm419, %v775, 0
      %779 = vmatprep.subr.bf16.mxu0 0
      %780 = vmatpush1.bf16.msra.mxu0 %v415
      %781 = vmatprep.subr.bf16.mxu0 0
      %782 = vmatpush1.bf16.msra.mxu0 %v416
      %783 = vmatprep.subr.bf16.mxu0 0
      %784 = vmatpush1.bf16.msra.mxu0 0
      %785 = vmatprep.subr.bf16.mxu0 0
      %786 = vmatpush1.bf16.msra.mxu0 0
      %787 = vmatprep.subr.bf16.mxu0 0
      %788 = vmatpush1.bf16.msra.mxu0 0
      %789 = vmatprep.subr.bf16.mxu0 0
      %790 = vmatpush1.bf16.msra.mxu0 0
      %791 = vmatprep.subr.bf16.mxu0 0
      %792 = vmatpush1.bf16.msra.mxu0 0
      %793 = vmatprep.subr.bf16.mxu0 0
      %794 = vmatpush1.bf16.msra.mxu0 0
      %795 = vmatprep.subr.bf16.mxu0 0
      %796 = vmatpush1.bf16.msra.mxu0 0
      %797 = vmatprep.subr.bf16.mxu0 0
      %798 = vmatpush1.bf16.msra.mxu0 0
      %799 = vmatprep.subr.bf16.mxu0 0
      %800 = vmatpush1.bf16.msra.mxu0 0
      %801 = vmatprep.subr.bf16.mxu0 0
      %802 = vmatpush1.bf16.msra.mxu0 0
      %803 = vmatprep.subr.bf16.mxu0 0
      %804 = vmatpush1.bf16.msra.mxu0 0
      %805 = vmatprep.subr.bf16.mxu0 0
      %806 = vmatpush1.bf16.msra.mxu0 0
      %807 = vmatprep.subr.bf16.mxu0 0
      %808 = vmatpush1.bf16.msra.mxu0 0
      %809 = vmatprep.subr.bf16.mxu0 0
      %810 = vmatpush1.bf16.msra.mxu0 0
      %811 = vmatprep.mubr.bf16.mxu0 0
      %812 = vmatmul.mubr.bf16.gmra.mrb[0].mxu0 %v777
      %v813 = vpop.f32.mrb[0].mxu0
      %v814 = vadd.f32 0.0, %v813
      %v815 = vpop.f32.mrb[0].mxu0
      %v816 = vpop.f32.mrb[0].mxu0
      %v817 = vpop.f32.mrb[0].mxu0
      %818 = vdwg.mxu0
      %v819 = vadd.f32 %v774, %v814
      %v820 = vxor.u32 %v819, 2147483648
      %v821 = vmul.f32 %v820, 1.442695
      %v822 = vpow.pop %v821
      %v823 = vadd.f32 %v822, 1.0
      %v824 = vrcp.pop %v823
      %v825 = vmul.f32 1.0, %v824
      %v826 = vtanh.pop %v819
      %828 = vrot.lane.b32.xlu0 %v772, 32
      %v829 = vpop.permute.xlu0 %828
      %v831 = vmul.f32 %v825, %v829
      %833 = vrot.lane.b32.xlu0 %v826, 64
      %v834 = vpop.permute.xlu0 %833
      %v836 = vmul.f32 %v825, %v834
      %838 = vrot.lane.b32.xlu0 %v836, 32
      %v839 = vpop.permute.xlu0 %838
      %v841 = vadd.f32 %v831, %v839
      %v842 = vtanh.pop %v841
      %844 = vrot.lane.b32.xlu0 %v842, 64
      %v845 = vpop.permute.xlu0 %844
      %v847 = vmul.f32 %v825, %v845
      %849 = vrot.lane.b32.xlu0 %v847, 32
      %v850 = vpop.permute.xlu0 %849
      %852 = vst.msk [vmem:[#allocation2] sm:$0x3] %vm496, %v850
      %854 = vrot.lane.b32.xlu0 %v841, 96
      %v855 = vpop.permute.xlu0 %854
      %857 = vst.msk [vmem:[#allocation3] sm:$0x3] %vm496, %v855
      %s858 = scalar_lea.vmem [#allocation5], 8
      %859 = vst.msk [vmem:[%s858] sm:$0x3] %vm496, %v850
      %v860 = vld [vmem:[#allocation2] sm:$0x3]
      %v861 = vld [vmem:[#allocation3] sm:$0x3]
      %s862 = scalar_lea.vmem [#allocation4], 10
      %v863 = vld [vmem:[%s862] sm:$0x3]
      %v864 = vpack.c.bf16 %v860, %v860
      %v866 = vsel %vm419, %v864, 0
      %868 = vmatprep.subr.bf16.mxu0 0
      %869 = vmatpush1.bf16.msra.mxu0 %v415
      %870 = vmatprep.subr.bf16.mxu0 0
      %871 = vmatpush1.bf16.msra.mxu0 %v416
      %872 = vmatprep.subr.bf16.mxu0 0
      %873 = vmatpush1.bf16.msra.mxu0 0
      %874 = vmatprep.subr.bf16.mxu0 0
      %875 = vmatpush1.bf16.msra.mxu0 0
      %876 = vmatprep.subr.bf16.mxu0 0
      %877 = vmatpush1.bf16.msra.mxu0 0
      %878 = vmatprep.subr.bf16.mxu0 0
      %879 = vmatpush1.bf16.msra.mxu0 0
      %880 = vmatprep.subr.bf16.mxu0 0
      %881 = vmatpush1.bf16.msra.mxu0 0
      %882 = vmatprep.subr.bf16.mxu0 0
      %883 = vmatpush1.bf16.msra.mxu0 0
      %884 = vmatprep.subr.bf16.mxu0 0
      %885 = vmatpush1.bf16.msra.mxu0 0
      %886 = vmatprep.subr.bf16.mxu0 0
      %887 = vmatpush1.bf16.msra.mxu0 0
      %888 = vmatprep.subr.bf16.mxu0 0
      %889 = vmatpush1.bf16.msra.mxu0 0
      %890 = vmatprep.subr.bf16.mxu0 0
      %891 = vmatpush1.bf16.msra.mxu0 0
      %892 = vmatprep.subr.bf16.mxu0 0
      %893 = vmatpush1.bf16.msra.mxu0 0
      %894 = vmatprep.subr.bf16.mxu0 0
      %895 = vmatpush1.bf16.msra.mxu0 0
      %896 = vmatprep.subr.bf16.mxu0 0
      %897 = vmatpush1.bf16.msra.mxu0 0
      %898 = vmatprep.subr.bf16.mxu0 0
      %899 = vmatpush1.bf16.msra.mxu0 0
      %900 = vmatprep.mubr.bf16.mxu0 0
      %901 = vmatmul.mubr.bf16.gmra.mrb[0].mxu0 %v866
      %v902 = vpop.f32.mrb[0].mxu0
      %v903 = vadd.f32 0.0, %v902
      %v904 = vpop.f32.mrb[0].mxu0
      %v905 = vpop.f32.mrb[0].mxu0
      %v906 = vpop.f32.mrb[0].mxu0
      %907 = vdwg.mxu0
      %v908 = vadd.f32 %v863, %v903
      %v909 = vxor.u32 %v908, 2147483648
      %v910 = vmul.f32 %v909, 1.442695
      %v911 = vpow.pop %v910
      %v912 = vadd.f32 %v911, 1.0
      %v913 = vrcp.pop %v912
      %v914 = vmul.f32 1.0, %v913
      %v915 = vtanh.pop %v908
      %917 = vrot.lane.b32.xlu0 %v861, 32
      %v918 = vpop.permute.xlu0 %917
      %v920 = vmul.f32 %v914, %v918
      %922 = vrot.lane.b32.xlu0 %v915, 64
      %v923 = vpop.permute.xlu0 %922
      %v925 = vmul.f32 %v914, %v923
      %927 = vrot.lane.b32.xlu0 %v925, 32
      %v928 = vpop.permute.xlu0 %927
      %v930 = vadd.f32 %v920, %v928
      %v931 = vtanh.pop %v930
      %933 = vrot.lane.b32.xlu0 %v931, 64
      %v934 = vpop.permute.xlu0 %933
      %v936 = vmul.f32 %v914, %v934
      %938 = vrot.lane.b32.xlu0 %v936, 32
      %v939 = vpop.permute.xlu0 %938
      %941 = vst.msk [vmem:[#allocation2] sm:$0x3] %vm496, %v939
      %943 = vrot.lane.b32.xlu0 %v930, 96
      %v944 = vpop.permute.xlu0 %943
      %946 = vst.msk [vmem:[#allocation3] sm:$0x3] %vm496, %v944
      %s947 = scalar_lea.vmem [#allocation5], 10
      %948 = vst.msk [vmem:[%s947] sm:$0x3] %vm496, %v939
      %v949 = vld [vmem:[#allocation2] sm:$0x3]
      %v950 = vld [vmem:[#allocation3] sm:$0x3]
      %s951 = scalar_lea.vmem [#allocation4], 12
      %v952 = vld [vmem:[%s951] sm:$0x3]
      %v953 = vpack.c.bf16 %v949, %v949
      %v955 = vsel %vm419, %v953, 0
      %957 = vmatprep.subr.bf16.mxu0 0
      %958 = vmatpush1.bf16.msra.mxu0 %v415
      %959 = vmatprep.subr.bf16.mxu0 0
      %960 = vmatpush1.bf16.msra.mxu0 %v416
      %961 = vmatprep.subr.bf16.mxu0 0
      %962 = vmatpush1.bf16.msra.mxu0 0
      %963 = vmatprep.subr.bf16.mxu0 0
      %964 = vmatpush1.bf16.msra.mxu0 0
      %965 = vmatprep.subr.bf16.mxu0 0
      %966 = vmatpush1.bf16.msra.mxu0 0
      %967 = vmatprep.subr.bf16.mxu0 0
      %968 = vmatpush1.bf16.msra.mxu0 0
      %969 = vmatprep.subr.bf16.mxu0 0
      %970 = vmatpush1.bf16.msra.mxu0 0
      %971 = vmatprep.subr.bf16.mxu0 0
      %972 = vmatpush1.bf16.msra.mxu0 0
      %973 = vmatprep.subr.bf16.mxu0 0
      %974 = vmatpush1.bf16.msra.mxu0 0
      %975 = vmatprep.subr.bf16.mxu0 0
      %976 = vmatpush1.bf16.msra.mxu0 0
      %977 = vmatprep.subr.bf16.mxu0 0
      %978 = vmatpush1.bf16.msra.mxu0 0
      %979 = vmatprep.subr.bf16.mxu0 0
      %980 = vmatpush1.bf16.msra.mxu0 0
      %981 = vmatprep.subr.bf16.mxu0 0
      %982 = vmatpush1.bf16.msra.mxu0 0
      %983 = vmatprep.subr.bf16.mxu0 0
      %984 = vmatpush1.bf16.msra.mxu0 0
      %985 = vmatprep.subr.bf16.mxu0 0
      %986 = vmatpush1.bf16.msra.mxu0 0
      %987 = vmatprep.subr.bf16.mxu0 0
      %988 = vmatpush1.bf16.msra.mxu0 0
      %989 = vmatprep.mubr.bf16.mxu0 0
      %990 = vmatmul.mubr.bf16.gmra.mrb[0].mxu0 %v955
      %v991 = vpop.f32.mrb[0].mxu0
      %v992 = vadd.f32 0.0, %v991
      %v993 = vpop.f32.mrb[0].mxu0
      %v994 = vpop.f32.mrb[0].mxu0
      %v995 = vpop.f32.mrb[0].mxu0
      %996 = vdwg.mxu0
      %v997 = vadd.f32 %v952, %v992
      %v998 = vxor.u32 %v997, 2147483648
      %v999 = vmul.f32 %v998, 1.442695
      %v1000 = vpow.pop %v999
      %v1001 = vadd.f32 %v1000, 1.0
      %v1002 = vrcp.pop %v1001
      %v1003 = vmul.f32 1.0, %v1002
      %v1004 = vtanh.pop %v997
      %1006 = vrot.lane.b32.xlu0 %v950, 32
      %v1007 = vpop.permute.xlu0 %1006
      %v1009 = vmul.f32 %v1003, %v1007
      %1011 = vrot.lane.b32.xlu0 %v1004, 64
      %v1012 = vpop.permute.xlu0 %1011
      %v1014 = vmul.f32 %v1003, %v1012
      %1016 = vrot.lane.b32.xlu0 %v1014, 32
      %v1017 = vpop.permute.xlu0 %1016
      %v1019 = vadd.f32 %v1009, %v1017
      %v1020 = vtanh.pop %v1019
      %1022 = vrot.lane.b32.xlu0 %v1020, 64
      %v1023 = vpop.permute.xlu0 %1022
      %v1025 = vmul.f32 %v1003, %v1023
      %1027 = vrot.lane.b32.xlu0 %v1025, 32
      %v1028 = vpop.permute.xlu0 %1027
      %1030 = vst.msk [vmem:[#allocation2] sm:$0x3] %vm496, %v1028
      %1032 = vrot.lane.b32.xlu0 %v1019, 96
      %v1033 = vpop.permute.xlu0 %1032
      %1035 = vst.msk [vmem:[#allocation3] sm:$0x3] %vm496, %v1033
      %s1036 = scalar_lea.vmem [#allocation5], 12
      %1037 = vst.msk [vmem:[%s1036] sm:$0x3] %vm496, %v1028
      %v1038 = vld [vmem:[#allocation2] sm:$0x3]
      %v1039 = vld [vmem:[#allocation3] sm:$0x3]
      %s1040 = scalar_lea.vmem [#allocation4], 14
      %v1041 = vld [vmem:[%s1040] sm:$0x3]
      %v1042 = vpack.c.bf16 %v1038, %v1038
      %v1044 = vsel %vm419, %v1042, 0
      %1046 = vmatprep.subr.bf16.mxu0 0
      %1047 = vmatpush1.bf16.msra.mxu0 %v415
      %1048 = vmatprep.subr.bf16.mxu0 0
      %1049 = vmatpush1.bf16.msra.mxu0 %v416
      %1050 = vmatprep.subr.bf16.mxu0 0
      %1051 = vmatpush1.bf16.msra.mxu0 0
      %1052 = vmatprep.subr.bf16.mxu0 0
      %1053 = vmatpush1.bf16.msra.mxu0 0
      %1054 = vmatprep.subr.bf16.mxu0 0
      %1055 = vmatpush1.bf16.msra.mxu0 0
      %1056 = vmatprep.subr.bf16.mxu0 0
      %1057 = vmatpush1.bf16.msra.mxu0 0
      %1058 = vmatprep.subr.bf16.mxu0 0
      %1059 = vmatpush1.bf16.msra.mxu0 0
      %1060 = vmatprep.subr.bf16.mxu0 0
      %1061 = vmatpush1.bf16.msra.mxu0 0
      %1062 = vmatprep.subr.bf16.mxu0 0
      %1063 = vmatpush1.bf16.msra.mxu0 0
      %1064 = vmatprep.subr.bf16.mxu0 0
      %1065 = vmatpush1.bf16.msra.mxu0 0
      %1066 = vmatprep.subr.bf16.mxu0 0
      %1067 = vmatpush1.bf16.msra.mxu0 0
      %1068 = vmatprep.subr.bf16.mxu0 0
      %1069 = vmatpush1.bf16.msra.mxu0 0
      %1070 = vmatprep.subr.bf16.mxu0 0
      %1071 = vmatpush1.bf16.msra.mxu0 0
      %1072 = vmatprep.subr.bf16.mxu0 0
      %1073 = vmatpush1.bf16.msra.mxu0 0
      %1074 = vmatprep.subr.bf16.mxu0 0
      %1075 = vmatpush1.bf16.msra.mxu0 0
      %1076 = vmatprep.subr.bf16.mxu0 0
      %1077 = vmatpush1.bf16.msra.mxu0 0
      %1078 = vmatprep.mubr.bf16.mxu0 0
      %1079 = vmatmul.mubr.bf16.gmra.mrb[0].mxu0 %v1044
      %v1080 = vpop.f32.mrb[0].mxu0
      %v1081 = vadd.f32 0.0, %v1080
      %v1082 = vpop.f32.mrb[0].mxu0
      %v1083 = vpop.f32.mrb[0].mxu0
      %v1084 = vpop.f32.mrb[0].mxu0
      %1085 = vdwg.mxu0
      %v1086 = vadd.f32 %v1041, %v1081
      %v1087 = vxor.u32 %v1086, 2147483648
      %v1088 = vmul.f32 %v1087, 1.442695
      %v1089 = vpow.pop %v1088
      %v1090 = vadd.f32 %v1089, 1.0
      %v1091 = vrcp.pop %v1090
      %v1092 = vmul.f32 1.0, %v1091
      %v1093 = vtanh.pop %v1086
      %1095 = vrot.lane.b32.xlu0 %v1039, 32
      %v1096 = vpop.permute.xlu0 %1095
      %v1098 = vmul.f32 %v1092, %v1096
      %1100 = vrot.lane.b32.xlu0 %v1093, 64
      %v1101 = vpop.permute.xlu0 %1100
      %v1103 = vmul.f32 %v1092, %v1101
      %1105 = vrot.lane.b32.xlu0 %v1103, 32
      %v1106 = vpop.permute.xlu0 %1105
      %v1108 = vadd.f32 %v1098, %v1106
      %v1109 = vtanh.pop %v1108
      %1111 = vrot.lane.b32.xlu0 %v1109, 64
      %v1112 = vpop.permute.xlu0 %1111
      %v1114 = vmul.f32 %v1092, %v1112
      %1116 = vrot.lane.b32.xlu0 %v1114, 32
      %v1117 = vpop.permute.xlu0 %1116
      %1119 = vst.msk [vmem:[#allocation2] sm:$0x3] %vm496, %v1117
      %1121 = vrot.lane.b32.xlu0 %v1108, 96
      %v1122 = vpop.permute.xlu0 %1121
      %1124 = vst.msk [vmem:[#allocation3] sm:$0x3] %vm496, %v1122
      %s1125 = scalar_lea.vmem [#allocation5], 14
      %1126 = vst.msk [vmem:[%s1125] sm:$0x3] %vm496, %v1117
      %v1127 = vld [vmem:[#allocation5] sm:$0x3]
      %v1128 = vld [vmem:[#allocation5 + $0x2] sm:$0x3]
      %v1129 = vld [vmem:[#allocation5 + $0x4] sm:$0x3]
      %v1130 = vld [vmem:[#allocation5 + $0x6] sm:$0x3]
      %v1131 = vld [vmem:[#allocation5 + $0x8] sm:$0x3]
      %v1132 = vld [vmem:[#allocation5 + $0xa] sm:$0x3]
      %v1133 = vld [vmem:[#allocation5 + $0xc] sm:$0x3]
      %v1134 = vld [vmem:[#allocation5 + $0xe] sm:$0x3]
      %v1143 = vcombine.low %v1127, %v1128
      %v1144 = vcombine.low %v1129, %v1130
      %v1146 = vunpack.c.l.s4 1983009808
      %v1147 = vunpack.c.0.s8 %v1146
      %v1148 = vlaneseq
      %v1149 = vshrl.u32 %v1148, 7
      %v1150 = vsub.s32 %v1147, %v1149
      %v1151 = vrot.slane %v1143, %v1150
      %v1153 = vunpack.c.l.s4 1983009808
      %v1154 = vunpack.c.0.s8 %v1153
      %v1155 = vlaneseq
      %v1156 = vshrl.u32 %v1155, 7
      %v1157 = vsub.s32 %v1154, %v1156
      %v1158 = vrot.slane %v1144, %v1157
      %v1159 = vcombine.low %v1151, %v1158
      %v1160 = vcombine.low %v1131, %v1132
      %v1161 = vcombine.low %v1133, %v1134
      %v1163 = vunpack.c.l.s4 1983009808
      %v1164 = vunpack.c.0.s8 %v1163
      %v1165 = vlaneseq
      %v1166 = vshrl.u32 %v1165, 7
      %v1167 = vsub.s32 %v1164, %v1166
      %v1168 = vrot.slane %v1160, %v1167
      %v1170 = vunpack.c.l.s4 1983009808
      %v1171 = vunpack.c.0.s8 %v1170
      %v1172 = vlaneseq
      %v1173 = vshrl.u32 %v1172, 7
      %v1174 = vsub.s32 %v1171, %v1173
      %v1175 = vrot.slane %v1161, %v1174
      %v1176 = vcombine.low %v1168, %v1175
      %v1179 = vpack.c.bf16 %v1176, %v1159
      %v1180 = vld [vmem:[%s4] sm:$0xf]
      %v1181 = vld [vmem:[%s4 + $0x4] sm:$0xf]
      %v1182 = vld [vmem:[%s4 + $0x8] sm:$0xf]
      %v1183 = vld [vmem:[%s4 + $0xc] sm:$0xf]
      %v1188 = vunpack.c.l.b16 %v1180
      %v1189 = vunpack.c.l.b16 %v1181
      %v1190 = vunpack.c.l.b16 %v1182
      %v1191 = vunpack.c.l.b16 %v1183
      %v1192 = vpack.c.b16 %v1189, %v1188
      %v1193 = vpack.c.b16 %v1191, %v1190
      %v1197 = vsel %vm419, %v1179, 0
      %1199 = vmatprep.subr.bf16.mxu0 0
      %1200 = vmatpush1.bf16.msra.mxu0 %v1192
      %1201 = vmatprep.subr.bf16.mxu0 0
      %1202 = vmatpush1.bf16.msra.mxu0 %v1193
      %1203 = vmatprep.subr.bf16.mxu0 0
      %1204 = vmatpush1.bf16.msra.mxu0 0
      %1205 = vmatprep.subr.bf16.mxu0 0
      %1206 = vmatpush1.bf16.msra.mxu0 0
      %1207 = vmatprep.subr.bf16.mxu0 0
      %1208 = vmatpush1.bf16.msra.mxu0 0
      %1209 = vmatprep.subr.bf16.mxu0 0
      %1210 = vmatpush1.bf16.msra.mxu0 0
      %1211 = vmatprep.subr.bf16.mxu0 0
      %1212 = vmatpush1.bf16.msra.mxu0 0
      %1213 = vmatprep.subr.bf16.mxu0 0
      %1214 = vmatpush1.bf16.msra.mxu0 0
      %1215 = vmatprep.subr.bf16.mxu0 0
      %1216 = vmatpush1.bf16.msra.mxu0 0
      %1217 = vmatprep.subr.bf16.mxu0 0
      %1218 = vmatpush1.bf16.msra.mxu0 0
      %1219 = vmatprep.subr.bf16.mxu0 0
      %1220 = vmatpush1.bf16.msra.mxu0 0
      %1221 = vmatprep.subr.bf16.mxu0 0
      %1222 = vmatpush1.bf16.msra.mxu0 0
      %1223 = vmatprep.subr.bf16.mxu0 0
      %1224 = vmatpush1.bf16.msra.mxu0 0
      %1225 = vmatprep.subr.bf16.mxu0 0
      %1226 = vmatpush1.bf16.msra.mxu0 0
      %1227 = vmatprep.subr.bf16.mxu0 0
      %1228 = vmatpush1.bf16.msra.mxu0 0
      %1229 = vmatprep.subr.bf16.mxu0 0
      %1230 = vmatpush1.bf16.msra.mxu0 0
      %1231 = vmatprep.mubr.bf16.mxu0 0
      %1232 = vmatmul.mubr.bf16.gmra.mrb[0].mxu0 %v1197
      %v1233 = vpop.f32.mrb[0].mxu0
      %v1234 = vadd.f32 0.0, %v1233
      %v1235 = vpop.f32.mrb[0].mxu0
      %v1236 = vpop.f32.mrb[0].mxu0
      %v1237 = vadd.f32 0.0, %v1236
      %v1238 = vpop.f32.mrb[0].mxu0
      %1239 = vdwg.mxu0
      %v1242 = vcombine.high %v1234, %v1234
      %v1244 = vunpack.c.l.s4 1983009808
      %v1245 = vunpack.c.0.s8 %v1244
      %v1246 = vlaneseq
      %v1247 = vshrl.u32 %v1246, 7
      %v1248 = vsub.s32 %v1245, %v1247
      %v1249 = vrot.slane %v1234, %v1248
      %v1251 = vunpack.c.l.s4 1983009808
      %v1252 = vunpack.c.0.s8 %v1251
      %v1253 = vlaneseq
      %v1254 = vshrl.u32 %v1253, 7
      %v1255 = vsub.s32 %v1252, %v1254
      %v1256 = vrot.slane %v1242, %v1255
      %v1257 = vcombine.high %v1249, %v1249
      %v1258 = vcombine.high %v1256, %v1256
      %v1259 = vcombine.high %v1237, %v1237
      %v1261 = vunpack.c.l.s4 1983009808
      %v1262 = vunpack.c.0.s8 %v1261
      %v1263 = vlaneseq
      %v1264 = vshrl.u32 %v1263, 7
      %v1265 = vsub.s32 %v1262, %v1264
      %v1266 = vrot.slane %v1237, %v1265
      %v1268 = vunpack.c.l.s4 1983009808
      %v1269 = vunpack.c.0.s8 %v1268
      %v1270 = vlaneseq
      %v1271 = vshrl.u32 %v1270, 7
      %v1272 = vsub.s32 %v1269, %v1271
      %v1273 = vrot.slane %v1259, %v1272
      %v1274 = vcombine.high %v1266, %v1266
      %v1275 = vcombine.high %v1273, %v1273
      %v1284 = vpack.c.bf16 %v1249, %v1249
      %v1285 = vpack.c.bf16 %v1257, %v1257
      %v1286 = vpack.c.bf16 %v1256, %v1256
      %v1287 = vpack.c.bf16 %v1258, %v1258
      %v1288 = vpack.c.bf16 %v1266, %v1266
      %v1289 = vpack.c.bf16 %v1274, %v1274
      %v1290 = vpack.c.bf16 %v1273, %v1273
      %v1291 = vpack.c.bf16 %v1275, %v1275
      %vm1292 = vcmask 122880
      %1293 = vst.msk [vmem:[%s224] sm:$0x1] %vm1292, %v1284
      %1294 = vst.msk [vmem:[%s224 + $0x1] sm:$0x1] %vm1292, %v1285
      %1295 = vst.msk [vmem:[%s224 + $0x2] sm:$0x1] %vm1292, %v1286
      %1296 = vst.msk [vmem:[%s224 + $0x3] sm:$0x1] %vm1292, %v1287
      %1297 = vst.msk [vmem:[%s224 + $0x4] sm:$0x1] %vm1292, %v1288
      %1298 = vst.msk [vmem:[%s224 + $0x5] sm:$0x1] %vm1292, %v1289
      %1299 = vst.msk [vmem:[%s224 + $0x6] sm:$0x1] %vm1292, %v1290
      %1300 = vst.msk [vmem:[%s224 + $0x7] sm:$0x1] %vm1292, %v1291
      %s1301 = smul.u32 8, %s16
      %p1302 = scmp.lt.s32.totalorder %s1301, 15
      %s1303 = scalar_select %p1302, %s1301, 15
      %s1304 = scalar_lea.vmem %s5, %s1303
      // Predicated region
      $region45: #{lstm_speaker_encoder_forward.5} parent=39 // pred_check
        %p1305 = pneg %p144
      $region46: #{lstm_speaker_encoder_forward.5} parent=39 // pred_check_branch
        %1307 = sbr.rel (%p1305) target = $region48
      $region47: #{lstm_speaker_encoder_forward.5} parent=39 // pred_region
        %s1308 = smul.u32 8, %s16
      $region48: #{lstm_speaker_encoder_forward.5} parent=39 // pred_fallthru
        _
    $region40: #{lstm_speaker_encoder_forward.5} parent=5 // pred_fallthru
      _
    %p1309 = scmp.le.s32.totalorder 2, %s11
    // Predicated region
    $region49: #{lstm_speaker_encoder_forward.5} parent=5 // pred_check
      %p1310 = pneg %p1309
    $region50: #{lstm_speaker_encoder_forward.5} parent=5 // pred_check_branch
      %1312 = sbr.rel (%p1310) target = $region52
    $region51: #{lstm_speaker_encoder_forward.5} parent=5 // pred_region
      %s1313 = ssub.s32 %s11, 2
      // Predicated region
      $region53: #{lstm_speaker_encoder_forward.5} parent=51 // pred_check
        %p1314 = pneg %p150
      $region54: #{lstm_speaker_encoder_forward.5} parent=51 // pred_check_branch
        %1316 = sbr.rel (%p1314) target = $region56
      $region55: #{lstm_speaker_encoder_forward.5} parent=51 // pred_region
        %s1317 = smul.u32 8, %s17
        %p1318 = scmp.lt.s32.totalorder %s1317, 15
        %s1319 = scalar_select %p1318, %s1317, 15
        %s1320 = scalar_lea.vmem %s5, %s1319
      $region56: #{lstm_speaker_encoder_forward.5} parent=51 // pred_fallthru
        _
    $region52: #{lstm_speaker_encoder_forward.5} parent=5 // pred_fallthru
      _
  $region6: #{lstm_speaker_encoder_forward.5} parent=0 // loop_footer
    %s15 = sadd.s32 1, %s11
  $region7: #{lstm_speaker_encoder_forward.5} parent=0 // loop_footer_branch
    %10 = sbr.rel target = $region3
  $region8: #{lstm_speaker_encoder_forward.5} parent=0 // loop_exit
    _

// kernel: lstm_speaker_encoder_forward.6
$region0: #{lstm_speaker_encoder_forward.6}
  #allocation0 [shape = 'u32[]', space=smem, size = 0x4, offset = 0x4, fixed_abs, tag = 'smem constant byte address 0x4 - core index']
  #allocation1 [shape = 'u32[144,128]{1,0:T(1,128)}', space=vmem, size = 0x12000, scoped, tag = 'internal scratch']
  #allocation2 [shape = 'f32[2,32]{1,0:T(2,128)}', space=vmem, size = 0x400, scoped, tag = 'scratch operand']
  #allocation3 [shape = 'f32[2,32]{1,0:T(2,128)}', space=vmem, size = 0x400, scoped, tag = 'scratch operand']
  #allocation4 [shape = 'f32[8,2,128]{2,1,0:T(2,128)}', space=vmem, size = 0x2000, scoped, tag = 'scratch operand']
  #allocation5 [shape = 'f32[8,2,32]{2,1,0:T(2,128)}', space=vmem, size = 0x2000, scoped, tag = 'scratch operand']
  %s0 = inlined_call_operand.vmem [shape: bf16[16,2,16], index: 0, kind: input, shape index: {}]
  %s1 = inlined_call_operand.vmem [shape: bf16[16,128], index: 1, kind: input, shape index: {}]
  %s2 = inlined_call_operand.vmem [shape: bf16[32,128], index: 2, kind: input, shape index: {}]
  %s3 = inlined_call_operand.vmem [shape: f32[1,128], index: 3, kind: input, shape index: {}]
  %s4 = inlined_call_operand.vmem [shape: bf16[32,16], index: 4, kind: input, shape index: {}]
  %s5 = inlined_call_operand.vmem [shape: bf16[16,2,16], index: 5, kind: output, shape index: {}]
  %s6 = sld [smem:[#allocation0]]
  $region57: #{lstm_speaker_encoder_forward.6} parent=0
    _
  %s8 = ssub.s32 1, %s6
  %s9 = scalar_select 0, %s8, %s6
  loop: start=0, step=1, limit=4
  $region2: #{lstm_speaker_encoder_forward.6} parent=0 // loop_pre_header
    _
  $region3: #{lstm_speaker_encoder_forward.6} parent=0 // loop_header
    %s11 = sphi 0, %s15
    %p12 = scmp.ge.s32.totalorder %s11, 4
    %s21 = sphi 0, %s23
    %s24 = sphi 0, %s21
    %s25 = sphi 0, %s24
    %s41 = sphi 0, %s25
    %s45 = sphi 0, %s45
    %s47 = sphi 0, %s45
    %s48 = sphi 0, %s47
    %s62 = sphi 0, %s48
    %s66 = sphi 0, %s66
    %s68 = sphi 0, %s66
    %s69 = sphi 0, %s68
    %s83 = sphi 0, %s69
    %s87 = sphi 0, %s87
    %s89 = sphi 0, %s87
    %s90 = sphi 0, %s89
    %s104 = sphi 0, %s90
    %s108 = sphi 0, %s108
    %s110 = sphi 0, %s108
    %s111 = sphi 0, %s110
    %s125 = sphi 0, %s111
    %s131 = sphi 0, %s133
    %s134 = sphi 0, %s131
    %s135 = sphi 0, %s134
    %s151 = sphi 0, %s135
  $region4: #{lstm_speaker_encoder_forward.6} parent=0 // loop_header_branch
    %14 = sbr.rel (%p12) target = $region8
  $region5: #{lstm_speaker_encoder_forward.6} parent=0 // loop_body
    %s16 = ssub.s32 %s11, 1
    %s17 = ssub.s32 %s11, 2
    %s18 = sadd.s32 %s11, 1
    %s19 = ssub.s32 %s11, %s18
    %p20 = scmp.eq.s32.totalorder %s19, 0
    %s22 = sadd.s32 %s21, 1
    %s23 = scalar_select %p20, %s21, %s22
    %p26 = pneg %p20
    %p27 = scmp.eq.s32.totalorder %s11, 1
    %p28 = por %p26, %p27
    %p29 = scmp.ne.s32.totalorder %s21, %s24
    %p30 = scmp.eq.s32.totalorder %s11, 0
    %p31 = por %p29, %p30
    %p32 = scmp.ne.s32.totalorder %s21, %s24
    %p33 = scmp.eq.s32.totalorder %s16, 1
    %p34 = por %p32, %p33
    %p35 = scmp.ne.s32.totalorder %s24, %s25
    %p36 = scmp.eq.s32.totalorder %s16, 0
    %p37 = por %p35, %p36
    %p38 = scmp.ne.s32.totalorder %s24, %s25
    %p39 = scmp.eq.s32.totalorder %s17, 1
    %p40 = por %p38, %p39
    %p42 = scmp.ne.s32.totalorder %s25, %s41
    %p43 = scmp.eq.s32.totalorder %s17, 0
    %p44 = por %p42, %p43
    %s46 = sadd.s32 %s45, 1
    %p49 = scmp.eq.s32.totalorder %s11, 1
    %p50 = scmp.ne.s32.totalorder %s45, %s47
    %p51 = scmp.eq.s32.totalorder %s11, 0
    %p52 = por %p50, %p51
    %p53 = scmp.ne.s32.totalorder %s45, %s47
    %p54 = scmp.eq.s32.totalorder %s16, 1
    %p55 = por %p53, %p54
    %p56 = scmp.ne.s32.totalorder %s47, %s48
    %p57 = scmp.eq.s32.totalorder %s16, 0
    %p58 = por %p56, %p57
    %p59 = scmp.ne.s32.totalorder %s47, %s48
    %p60 = scmp.eq.s32.totalorder %s17, 1
    %p61 = por %p59, %p60
    %p63 = scmp.ne.s32.totalorder %s48, %s62
    %p64 = scmp.eq.s32.totalorder %s17, 0
    %p65 = por %p63, %p64
    %s67 = sadd.s32 %s66, 1
    %p70 = scmp.eq.s32.totalorder %s11, 1
    %p71 = scmp.ne.s32.totalorder %s66, %s68
    %p72 = scmp.eq.s32.totalorder %s11, 0
    %p73 = por %p71, %p72
    %p74 = scmp.ne.s32.totalorder %s66, %s68
    %p75 = scmp.eq.s32.totalorder %s16, 1
    %p76 = por %p74, %p75
    %p77 = scmp.ne.s32.totalorder %s68, %s69
    %p78 = scmp.eq.s32.totalorder %s16, 0
    %p79 = por %p77, %p78
    %p80 = scmp.ne.s32.totalorder %s68, %s69
    %p81 = scmp.eq.s32.totalorder %s17, 1
    %p82 = por %p80, %p81
    %p84 = scmp.ne.s32.totalorder %s69, %s83
    %p85 = scmp.eq.s32.totalorder %s17, 0
    %p86 = por %p84, %p85
    %s88 = sadd.s32 %s87, 1
    %p91 = scmp.eq.s32.totalorder %s11, 1
    %p92 = scmp.ne.s32.totalorder %s87, %s89
    %p93 = scmp.eq.s32.totalorder %s11, 0
    %p94 = por %p92, %p93
    %p95 = scmp.ne.s32.totalorder %s87, %s89
    %p96 = scmp.eq.s32.totalorder %s16, 1
    %p97 = por %p95, %p96
    %p98 = scmp.ne.s32.totalorder %s89, %s90
    %p99 = scmp.eq.s32.totalorder %s16, 0
    %p100 = por %p98, %p99
    %p101 = scmp.ne.s32.totalorder %s89, %s90
    %p102 = scmp.eq.s32.totalorder %s17, 1
    %p103 = por %p101, %p102
    %p105 = scmp.ne.s32.totalorder %s90, %s104
    %p106 = scmp.eq.s32.totalorder %s17, 0
    %p107 = por %p105, %p106
    %s109 = sadd.s32 %s108, 1
    %p112 = scmp.eq.s32.totalorder %s11, 1
    %p113 = scmp.ne.s32.totalorder %s108, %s110
    %p114 = scmp.eq.s32.totalorder %s11, 0
    %p115 = por %p113, %p114
    %p116 = scmp.ne.s32.totalorder %s108, %s110
    %p117 = scmp.eq.s32.totalorder %s16, 1
    %p118 = por %p116, %p117
    %p119 = scmp.ne.s32.totalorder %s110, %s111
    %p120 = scmp.eq.s32.totalorder %s16, 0
    %p121 = por %p119, %p120
    %p122 = scmp.ne.s32.totalorder %s110, %s111
    %p123 = scmp.eq.s32.totalorder %s17, 1
    %p124 = por %p122, %p123
    %p126 = scmp.ne.s32.totalorder %s111, %s125
    %p127 = scmp.eq.s32.totalorder %s17, 0
    %p128 = por %p126, %p127
    %s129 = ssub.s32 %s11, %s18
    %p130 = scmp.eq.s32.totalorder %s129, 0
    %s132 = sadd.s32 %s131, 1
    %s133 = scalar_select %p130, %s131, %s132
    %p136 = pneg %p130
    %p137 = scmp.eq.s32.totalorder %s11, 1
    %p138 = por %p136, %p137
    %p139 = scmp.ne.s32.totalorder %s131, %s134
    %p140 = scmp.eq.s32.totalorder %s11, 0
    %p141 = por %p139, %p140
    %p142 = scmp.ne.s32.totalorder %s131, %s134
    %p143 = scmp.eq.s32.totalorder %s16, 1
    %p144 = por %p142, %p143
    %p145 = scmp.ne.s32.totalorder %s134, %s135
    %p146 = scmp.eq.s32.totalorder %s16, 0
    %p147 = por %p145, %p146
    %p148 = scmp.ne.s32.totalorder %s134, %s135
    %p149 = scmp.eq.s32.totalorder %s17, 1
    %p150 = por %p148, %p149
    %p152 = scmp.ne.s32.totalorder %s135, %s151
    %p153 = scmp.eq.s32.totalorder %s17, 0
    %p154 = por %p152, %p153
    %p155 = scmp.le.s32.totalorder 1, %s11
    %p156 = scmp.lt.s32.totalorder %s11, 3
    %p157 = pnand %p155, %p156
    %p158 = pneg %p157
    // Predicated region
    $region9: #{lstm_speaker_encoder_forward.6} parent=5 // pred_check
      _
    $region10: #{lstm_speaker_encoder_forward.6} parent=5 // pred_check_branch
      %160 = sbr.rel (%p157) target = $region12
    $region11: #{lstm_speaker_encoder_forward.6} parent=5 // pred_region
      %s161 = ssub.s32 %s11, 1
      // Predicated region
      $region13: #{lstm_speaker_encoder_forward.6} parent=11 // pred_check
        %p162 = pneg %p58
      $region14: #{lstm_speaker_encoder_forward.6} parent=11 // pred_check_branch
        %164 = sbr.rel (%p162) target = $region16
      $region15: #{lstm_speaker_encoder_forward.6} parent=11 // pred_region
        _
      $region16: #{lstm_speaker_encoder_forward.6} parent=11 // pred_fallthru
        _
      // Predicated region
      $region17: #{lstm_speaker_encoder_forward.6} parent=11 // pred_check
        %p165 = pneg %p79
      $region18: #{lstm_speaker_encoder_forward.6} parent=11 // pred_check_branch
        %167 = sbr.rel (%p165) target = $region20
      $region19: #{lstm_speaker_encoder_forward.6} parent=11 // pred_region
        _
      $region20: #{lstm_speaker_encoder_forward.6} parent=11 // pred_fallthru
        _
      // Predicated region
      $region21: #{lstm_speaker_encoder_forward.6} parent=11 // pred_check
        %p168 = pneg %p100
      $region22: #{lstm_speaker_encoder_forward.6} parent=11 // pred_check_branch
        %170 = sbr.rel (%p168) target = $region24
      $region23: #{lstm_speaker_encoder_forward.6} parent=11 // pred_region
        _
      $region24: #{lstm_speaker_encoder_forward.6} parent=11 // pred_fallthru
        _
      // Predicated region
      $region25: #{lstm_speaker_encoder_forward.6} parent=11 // pred_check
        %p171 = pneg %p121
      $region26: #{lstm_speaker_encoder_forward.6} parent=11 // pred_check_branch
        %173 = sbr.rel (%p171) target = $region28
      $region27: #{lstm_speaker_encoder_forward.6} parent=11 // pred_region
        _
      $region28: #{lstm_speaker_encoder_forward.6} parent=11 // pred_fallthru
        _
    $region12: #{lstm_speaker_encoder_forward.6} parent=5 // pred_fallthru
      _
    %p174 = scmp.lt.s32.totalorder %s11, 2
    // Predicated region
    $region29: #{lstm_speaker_encoder_forward.6} parent=5 // pred_check
      %p175 = pneg %p174
    $region30: #{lstm_speaker_encoder_forward.6} parent=5 // pred_check_branch
      %177 = sbr.rel (%p175) target = $region32
    $region31: #{lstm_speaker_encoder_forward.6} parent=5 // pred_region
      // Predicated region
      $region33: #{lstm_speaker_encoder_forward.6} parent=31 // pred_check
        %p178 = pneg %p31
      $region34: #{lstm_speaker_encoder_forward.6} parent=31 // pred_check_branch
        %180 = sbr.rel (%p178) target = $region36
      $region35: #{lstm_speaker_encoder_forward.6} parent=31 // pred_region
        %s181 = smul.u32 8, %s11
        %p182 = scmp.lt.s32.totalorder %s181, 15
        %s183 = scalar_select %p182, %s181, 15
        %s184 = scalar_lea.vmem %s0, %s183
        %s185 = smul.u32 8, %s11
      $region36: #{lstm_speaker_encoder_forward.6} parent=31 // pred_fallthru
        _
    $region32: #{lstm_speaker_encoder_forward.6} parent=5 // pred_fallthru
      _
    %p186 = scmp.le.s32.totalorder 1, %s11
    %p187 = scmp.lt.s32.totalorder %s11, 3
    %p188 = pnand %p186, %p187
    %p189 = pneg %p188
    // Predicated region
    $region37: #{lstm_speaker_encoder_forward.6} parent=5 // pred_check
      _
    $region38: #{lstm_speaker_encoder_forward.6} parent=5 // pred_check_branch
      %191 = sbr.rel (%p188) target = $region40
    $region39: #{lstm_speaker_encoder_forward.6} parent=5 // pred_region
      %s192 = ssub.s32 %s11, 1
      %s193 = smul.u32 8, %s16
      %p194 = scmp.lt.s32.totalorder %s193, 15
      %s195 = scalar_select %p194, %s193, 15
      %s196 = scalar_lea.vmem %s0, %s195
      %p197 = pneg %p37
      %p198 = pneg %p34
      %p199 = pneg %p58
      %p200 = pneg %p55
      %p201 = pneg %p79
      %p202 = pneg %p76
      %p203 = pneg %p100
      %p204 = pneg %p97
      %p205 = pneg %p121
      %p206 = pneg %p118
      %p207 = pneg %p147
      %p208 = pneg %p144
      %s209 = smul.u32 8, %s16
      %p210 = scmp.lt.s32.totalorder %s209, 15
      %s211 = scalar_select %p210, %s209, 15
      %s212 = scalar_lea.vmem %s5, %s211
      %s213 = smul.u32 8, %s16
      %p214 = scmp.lt.s32.totalorder %s213, 15
      %s215 = scalar_select %p214, %s213, 15
      %s216 = scalar_lea.vmem %s0, %s215
      %s217 = smul.u32 8, %s16
      %s218 = smul.u32 8, %s16
      %p219 = scmp.lt.s32.totalorder %s218, 15
      %s220 = scalar_select %p219, %s218, 15
      %s221 = scalar_lea.vmem %s5, %s220
      %s222 = smul.u32 8, %s16
      %p224 = scmp.eq.s32.totalorder %s16, 0
      // Predicated region
      $region41: #{lstm_speaker_encoder_forward.6} parent=39 // pred_check
        %p225 = pneg %p224
      $region42: #{lstm_speaker_encoder_forward.6} parent=39 // pred_check_branch
        %227 = sbr.rel (%p225) target = $region44
      $region43: #{lstm_speaker_encoder_forward.6} parent=39 // pred_region
        %vm228 = vcmask 254976
        %229 = vst.msk [vmem:[#allocation2] sm:$0x3] %vm228, 0.0
        %230 = vst.msk [vmem:[#allocation3] sm:$0x3] %vm228, 0.0
      $region44: #{lstm_speaker_encoder_forward.6} parent=39 // pred_fallthru
        _
      %v231 = vld [vmem:[%s216] sm:$0x1]
      %v232 = vld [vmem:[%s216 + $0x1] sm:$0x1]
      %v233 = vld [vmem:[%s216 + $0x2] sm:$0x1]
      %v234 = vld [vmem:[%s216 + $0x3] sm:$0x1]
      %v235 = vld [vmem:[%s216 + $0x4] sm:$0x1]
      %v236 = vld [vmem:[%s216 + $0x5] sm:$0x1]
      %v237 = vld [vmem:[%s216 + $0x6] sm:$0x1]
      %v238 = vld [vmem:[%s216 + $0x7] sm:$0x1]
      %v239 = vld [vmem:[%s1] sm:$0xf]
      %v240 = vld [vmem:[%s1 + $0x4] sm:$0xf]
      %v241 = vld [vmem:[%s3] sm:$0x1]
      %v243 = vlaneseq
      %v244 = vshrl.u32 %v243, 7
      %v245 = vsub.s32 0, %v244
      %v246 = vrot.slane %v241, %v245
      %v256 = vcombine.low %v231, %v232
      %v257 = vcombine.low %v233, %v234
      %v258 = vcombine.low %v235, %v236
      %v259 = vcombine.low %v237, %v238
      %v261 = vunpack.c.l.s4 1966171168
      %v262 = vunpack.c.0.s8 %v261
      %v263 = vlaneseq
      %v264 = vshrl.u32 %v263, 7
      %v265 = vsub.s32 %v262, %v264
      %v266 = vrot.slane %v256, %v265
      %v268 = vunpack.c.l.s4 1966171168
      %v269 = vunpack.c.0.s8 %v268
      %v270 = vlaneseq
      %v271 = vshrl.u32 %v270, 7
      %v272 = vsub.s32 %v269, %v271
      %v273 = vrot.slane %v257, %v272
      %v275 = vunpack.c.l.s4 1966171168
      %v276 = vunpack.c.0.s8 %v275
      %v277 = vlaneseq
      %v278 = vshrl.u32 %v277, 7
      %v279 = vsub.s32 %v276, %v278
      %v280 = vrot.slane %v258, %v279
      %v282 = vunpack.c.l.s4 1966171168
      %v283 = vunpack.c.0.s8 %v282
      %v284 = vlaneseq
      %v285 = vshrl.u32 %v284, 7
      %v286 = vsub.s32 %v283, %v285
      %v287 = vrot.slane %v259, %v286
      %v288 = vcombine.low %v266, %v273
      %v289 = vcombine.low %v280, %v287
      %v291 = vunpack.c.l.s4 1966171168
      %v292 = vunpack.c.0.s8 %v291
      %v293 = vlaneseq
      %v294 = vshrl.u32 %v293, 7
      %v295 = vsub.s32 %v292, %v294
      %v296 = vrot.slane %v288, %v295
      %v298 = vunpack.c.l.s4 1966171168
      %v299 = vunpack.c.0.s8 %v298
      %v300 = vlaneseq
      %v301 = vshrl.u32 %v300, 7
      %v302 = vsub.s32 %v299, %v301
      %v303 = vrot.slane %v289, %v302
      %v304 = vcombine.low %v296, %v303
      %v307 = vunpack.c.l.b16 %v239
      %v308 = vunpack.c.l.b16 %v240
      %v309 = vpack.c.b16 %v308, %v307
      %vm311 = vcmask 130048
      %v313 = vsel %vm311, %v304, 0
      %315 = vmatprep.subr.bf16.mxu0 0
      %316 = vmatpush1.bf16.msra.mxu0 %v309
      %317 = vmatprep.subr.bf16.mxu0 0
      %318 = vmatpush1.bf16.msra.mxu0 0
      %319 = vmatprep.subr.bf16.mxu0 0
      %320 = vmatpush1.bf16.msra.mxu0 0
      %321 = vmatprep.subr.bf16.mxu0 0
      %322 = vmatpush1.bf16.msra.mxu0 0
      %323 = vmatprep.subr.bf16.mxu0 0
      %324 = vmatpush1.bf16.msra.mxu0 0
      %325 = vmatprep.subr.bf16.mxu0 0
      %326 = vmatpush1.bf16.msra.mxu0 0
      %327 = vmatprep.subr.bf16.mxu0 0
      %328 = vmatpush1.bf16.msra.mxu0 0
      %329 = vmatprep.subr.bf16.mxu0 0
      %330 = vmatpush1.bf16.msra.mxu0 0
      %331 = vmatprep.subr.bf16.mxu0 0
      %332 = vmatpush1.bf16.msra.mxu0 0
      %333 = vmatprep.subr.bf16.mxu0 0
      %334 = vmatpush1.bf16.msra.mxu0 0
      %335 = vmatprep.subr.bf16.mxu0 0
      %336 = vmatpush1.bf16.msra.mxu0 0
      %337 = vmatprep.subr.bf16.mxu0 0
      %338 = vmatpush1.bf16.msra.mxu0 0
      %339 = vmatprep.subr.bf16.mxu0 0
      %340 = vmatpush1.bf16.msra.mxu0 0
      %341 = vmatprep.subr.bf16.mxu0 0
      %342 = vmatpush1.bf16.msra.mxu0 0
      %343 = vmatprep.subr.bf16.mxu0 0
      %344 = vmatpush1.bf16.msra.mxu0 0
      %345 = vmatprep.subr.bf16.mxu0 0
      %346 = vmatpush1.bf16.msra.mxu0 0
      %347 = vmatprep.mubr.bf16.mxu0 0
      %348 = vmatmul.mubr.bf16.gmra.mrb[0].mxu0 %v313
      %v349 = vpop.f32.mrb[0].mxu0
      %v350 = vadd.f32 %v246, %v349
      %v351 = vpop.f32.mrb[0].mxu0
      %v352 = vpop.f32.mrb[0].mxu0
      %v353 = vadd.f32 %v246, %v352
      %v354 = vpop.f32.mrb[0].mxu0
      %355 = vdwg.mxu0
      %v358 = vcombine.high %v350, %v350
      %v360 = vunpack.c.l.s4 1983009808
      %v361 = vunpack.c.0.s8 %v360
      %v362 = vlaneseq
      %v363 = vshrl.u32 %v362, 7
      %v364 = vsub.s32 %v361, %v363
      %v365 = vrot.slane %v350, %v364
      %v367 = vunpack.c.l.s4 1983009808
      %v368 = vunpack.c.0.s8 %v367
      %v369 = vlaneseq
      %v370 = vshrl.u32 %v369, 7
      %v371 = vsub.s32 %v368, %v370
      %v372 = vrot.slane %v358, %v371
      %v373 = vcombine.high %v365, %v365
      %v374 = vcombine.high %v372, %v372
      %v375 = vcombine.high %v353, %v353
      %v377 = vunpack.c.l.s4 1983009808
      %v378 = vunpack.c.0.s8 %v377
      %v379 = vlaneseq
      %v380 = vshrl.u32 %v379, 7
      %v381 = vsub.s32 %v378, %v380
      %v382 = vrot.slane %v353, %v381
      %v384 = vunpack.c.l.s4 1983009808
      %v385 = vunpack.c.0.s8 %v384
      %v386 = vlaneseq
      %v387 = vshrl.u32 %v386, 7
      %v388 = vsub.s32 %v385, %v387
      %v389 = vrot.slane %v375, %v388
      %v390 = vcombine.high %v382, %v382
      %v391 = vcombine.high %v389, %v389
      %400 = vst [vmem:[#allocation4] sm:$0x3] %v365
      %401 = vst [vmem:[#allocation4 + $0x2] sm:$0x3] %v373
      %402 = vst [vmem:[#allocation4 + $0x4] sm:$0x3] %v372
      %403 = vst [vmem:[#allocation4 + $0x6] sm:$0x3] %v374
      %404 = vst [vmem:[#allocation4 + $0x8] sm:$0x3] %v382
      %405 = vst [vmem:[#allocation4 + $0xa] sm:$0x3] %v390
      %406 = vst [vmem:[#allocation4 + $0xc] sm:$0x3] %v389
      %407 = vst [vmem:[#allocation4 + $0xe] sm:$0x3] %v391
      %v408 = vld [vmem:[%s2] sm:$0xf]
      %v409 = vld [vmem:[%s2 + $0x4] sm:$0xf]
      %v410 = vld [vmem:[%s2 + $0x8] sm:$0xf]
      %v411 = vld [vmem:[%s2 + $0xc] sm:$0xf]
      %v412 = vld [vmem:[#allocation2] sm:$0x3]
      %v413 = vld [vmem:[#allocation3] sm:$0x3]
      %v414 = vld [vmem:[#allocation4] sm:$0x3]
      %v415 = vpack.c.bf16 %v412, %v412
      %v420 = vunpack.c.l.b16 %v408
      %v421 = vunpack.c.l.b16 %v409
      %v422 = vunpack.c.l.b16 %v410
      %v423 = vunpack.c.l.b16 %v411
      %v424 = vpack.c.b16 %v421, %v420
      %v425 = vpack.c.b16 %v423, %v422
      %vm428 = vcmask 261120
      %v430 = vsel %vm428, %v415, 0
      %432 = vmatprep.subr.bf16.mxu0 0
      %433 = vmatpush1.bf16.msra.mxu0 %v424
      %434 = vmatprep.subr.bf16.mxu0 0
      %435 = vmatpush1.bf16.msra.mxu0 %v425
      %436 = vmatprep.subr.bf16.mxu0 0
      %437 = vmatpush1.bf16.msra.mxu0 0
      %438 = vmatprep.subr.bf16.mxu0 0
      %439 = vmatpush1.bf16.msra.mxu0 0
      %440 = vmatprep.subr.bf16.mxu0 0
      %441 = vmatpush1.bf16.msra.mxu0 0
      %442 = vmatprep.subr.bf16.mxu0 0
      %443 = vmatpush1.bf16.msra.mxu0 0
      %444 = vmatprep.subr.bf16.mxu0 0
      %445 = vmatpush1.bf16.msra.mxu0 0
      %446 = vmatprep.subr.bf16.mxu0 0
      %447 = vmatpush1.bf16.msra.mxu0 0
      %448 = vmatprep.subr.bf16.mxu0 0
      %449 = vmatpush1.bf16.msra.mxu0 0
      %450 = vmatprep.subr.bf16.mxu0 0
      %451 = vmatpush1.bf16.msra.mxu0 0
      %452 = vmatprep.subr.bf16.mxu0 0
      %453 = vmatpush1.bf16.msra.mxu0 0
      %454 = vmatprep.subr.bf16.mxu0 0
      %455 = vmatpush1.bf16.msra.mxu0 0
      %456 = vmatprep.subr.bf16.mxu0 0
      %457 = vmatpush1.bf16.msra.mxu0 0
      %458 = vmatprep.subr.bf16.mxu0 0
      %459 = vmatpush1.bf16.msra.mxu0 0
      %460 = vmatprep.subr.bf16.mxu0 0
      %461 = vmatpush1.bf16.msra.mxu0 0
      %462 = vmatprep.subr.bf16.mxu0 0
      %463 = vmatpush1.bf16.msra.mxu0 0
      %464 = vmatprep.mubr.bf16.mxu0 0
      %465 = vmatmul.mubr.bf16.gmra.mrb[0].mxu0 %v430
      %v466 = vpop.f32.mrb[0].mxu0
      %v467 = vadd.f32 0.0, %v466
      %v468 = vpop.f32.mrb[0].mxu0
      %v469 = vpop.f32.mrb[0].mxu0
      %v470 = vpop.f32.mrb[0].mxu0
      %471 = vdwg.mxu0
      %v472 = vadd.f32 %v414, %v467
      %v473 = vxor.u32 %v472, 2147483648
      %v474 = vmul.f32 %v473, 1.442695
      %v475 = vpow.pop %v474
      %v476 = vadd.f32 %v475, 1.0
      %v477 = vrcp.pop %v476
      %v478 = vmul.f32 1.0, %v477
      %v479 = vtanh.pop %v472
      %481 = vrot.lane.b32.xlu0 %v413, 32
      %v482 = vpop.permute.xlu0 %481
      %v484 = vmul.f32 %v478, %v482
      %486 = vrot.lane.b32.xlu0 %v479, 64
      %v487 = vpop.permute.xlu0 %486
      %v489 = vmul.f32 %v478, %v487
      %491 = vrot.lane.b32.xlu0 %v489, 32
      %v492 = vpop.permute.xlu0 %491
      %v494 = vadd.f32 %v484, %v492
      %v495 = vtanh.pop %v494
      %497 = vrot.lane.b32.xlu0 %v495, 64
      %v498 = vpop.permute.xlu0 %497
      %v500 = vmul.f32 %v478, %v498
      %502 = vrot.lane.b32.xlu0 %v500, 32
      %v503 = vpop.permute.xlu0 %502
      %vm505 = vcmask 254976
      %506 = vst.msk [vmem:[#allocation2] sm:$0x3] %vm505, %v503
      %508 = vrot.lane.b32.xlu0 %v494, 96
      %v509 = vpop.permute.xlu0 %508
      %511 = vst.msk [vmem:[#allocation3] sm:$0x3] %vm505, %v509
      %512 = vst.msk [vmem:[#allocation5] sm:$0x3] %vm505, %v503
      %v513 = vld [vmem:[#allocation2] sm:$0x3]
      %v514 = vld [vmem:[#allocation3] sm:$0x3]
      %s515 = scalar_lea.vmem [#allocation4], 2
      %v516 = vld [vmem:[%s515] sm:$0x3]
      %v517 = vpack.c.bf16 %v513, %v513
      %v519 = vsel %vm428, %v517, 0
      %521 = vmatprep.subr.bf16.mxu0 0
      %522 = vmatpush1.bf16.msra.mxu0 %v424
      %523 = vmatprep.subr.bf16.mxu0 0
      %524 = vmatpush1.bf16.msra.mxu0 %v425
      %525 = vmatprep.subr.bf16.mxu0 0
      %526 = vmatpush1.bf16.msra.mxu0 0
      %527 = vmatprep.subr.bf16.mxu0 0
      %528 = vmatpush1.bf16.msra.mxu0 0
      %529 = vmatprep.subr.bf16.mxu0 0
      %530 = vmatpush1.bf16.msra.mxu0 0
      %531 = vmatprep.subr.bf16.mxu0 0
      %532 = vmatpush1.bf16.msra.mxu0 0
      %533 = vmatprep.subr.bf16.mxu0 0
      %534 = vmatpush1.bf16.msra.mxu0 0
      %535 = vmatprep.subr.bf16.mxu0 0
      %536 = vmatpush1.bf16.msra.mxu0 0
      %537 = vmatprep.subr.bf16.mxu0 0
      %538 = vmatpush1.bf16.msra.mxu0 0
      %539 = vmatprep.subr.bf16.mxu0 0
      %540 = vmatpush1.bf16.msra.mxu0 0
      %541 = vmatprep.subr.bf16.mxu0 0
      %542 = vmatpush1.bf16.msra.mxu0 0
      %543 = vmatprep.subr.bf16.mxu0 0
      %544 = vmatpush1.bf16.msra.mxu0 0
      %545 = vmatprep.subr.bf16.mxu0 0
      %546 = vmatpush1.bf16.msra.mxu0 0
      %547 = vmatprep.subr.bf16.mxu0 0
      %548 = vmatpush1.bf16.msra.mxu0 0
      %549 = vmatprep.subr.bf16.mxu0 0
      %550 = vmatpush1.bf16.msra.mxu0 0
      %551 = vmatprep.subr.bf16.mxu0 0
      %552 = vmatpush1.bf16.msra.mxu0 0
      %553 = vmatprep.mubr.bf16.mxu0 0
      %554 = vmatmul.mubr.bf16.gmra.mrb[0].mxu0 %v519
      %v555 = vpop.f32.mrb[0].mxu0
      %v556 = vadd.f32 0.0, %v555
      %v557 = vpop.f32.mrb[0].mxu0
      %v558 = vpop.f32.mrb[0].mxu0
      %v559 = vpop.f32.mrb[0].mxu0
      %560 = vdwg.mxu0
      %v561 = vadd.f32 %v516, %v556
      %v562 = vxor.u32 %v561, 2147483648
      %v563 = vmul.f32 %v562, 1.442695
      %v564 = vpow.pop %v563
      %v565 = vadd.f32 %v564, 1.0
      %v566 = vrcp.pop %v565
      %v567 = vmul.f32 1.0, %v566
      %v568 = vtanh.pop %v561
      %570 = vrot.lane.b32.xlu0 %v514, 32
      %v571 = vpop.permute.xlu0 %570
      %v573 = vmul.f32 %v567, %v571
      %575 = vrot.lane.b32.xlu0 %v568, 64
      %v576 = vpop.permute.xlu0 %575
      %v578 = vmul.f32 %v567, %v576
      %580 = vrot.lane.b32.xlu0 %v578, 32
      %v581 = vpop.permute.xlu0 %580
      %v583 = vadd.f32 %v573, %v581
      %v584 = vtanh.pop %v583
      %586 = vrot.lane.b32.xlu0 %v584, 64
      %v587 = vpop.permute.xlu0 %586
      %v589 = vmul.f32 %v567, %v587
      %591 = vrot.lane.b32.xlu0 %v589, 32
      %v592 = vpop.permute.xlu0 %591
      %594 = vst.msk [vmem:[#allocation2] sm:$0x3] %vm505, %v592
      %596 = vrot.lane.b32.xlu0 %v583, 96
      %v597 = vpop.permute.xlu0 %596
      %599 = vst.msk [vmem:[#allocation3] sm:$0x3] %vm505, %v597
      %s600 = scalar_lea.vmem [#allocation5], 2
      %601 = vst.msk [vmem:[%s600] sm:$0x3] %vm505, %v592
      %v602 = vld [vmem:[#allocation2] sm:$0x3]
      %v603 = vld [vmem:[#allocation3] sm:$0x3]
      %s604 = scalar_lea.vmem [#allocation4], 4
      %v605 = vld [vmem:[%s604] sm:$0x3]
      %v606 = vpack.c.bf16 %v602, %v602
      %v608 = vsel %vm428, %v606, 0
      %610 = vmatprep.subr.bf16.mxu0 0
      %611 = vmatpush1.bf16.msra.mxu0 %v424
      %612 = vmatprep.subr.bf16.mxu0 0
      %613 = vmatpush1.bf16.msra.mxu0 %v425
      %614 = vmatprep.subr.bf16.mxu0 0
      %615 = vmatpush1.bf16.msra.mxu0 0
      %616 = vmatprep.subr.bf16.mxu0 0
      %617 = vmatpush1.bf16.msra.mxu0 0
      %618 = vmatprep.subr.bf16.mxu0 0
      %619 = vmatpush1.bf16.msra.mxu0 0
      %620 = vmatprep.subr.bf16.mxu0 0
      %621 = vmatpush1.bf16.msra.mxu0 0
      %622 = vmatprep.subr.bf16.mxu0 0
      %623 = vmatpush1.bf16.msra.mxu0 0
      %624 = vmatprep.subr.bf16.mxu0 0
      %625 = vmatpush1.bf16.msra.mxu0 0
      %626 = vmatprep.subr.bf16.mxu0 0
      %627 = vmatpush1.bf16.msra.mxu0 0
      %628 = vmatprep.subr.bf16.mxu0 0
      %629 = vmatpush1.bf16.msra.mxu0 0
      %630 = vmatprep.subr.bf16.mxu0 0
      %631 = vmatpush1.bf16.msra.mxu0 0
      %632 = vmatprep.subr.bf16.mxu0 0
      %633 = vmatpush1.bf16.msra.mxu0 0
      %634 = vmatprep.subr.bf16.mxu0 0
      %635 = vmatpush1.bf16.msra.mxu0 0
      %636 = vmatprep.subr.bf16.mxu0 0
      %637 = vmatpush1.bf16.msra.mxu0 0
      %638 = vmatprep.subr.bf16.mxu0 0
      %639 = vmatpush1.bf16.msra.mxu0 0
      %640 = vmatprep.subr.bf16.mxu0 0
      %641 = vmatpush1.bf16.msra.mxu0 0
      %642 = vmatprep.mubr.bf16.mxu0 0
      %643 = vmatmul.mubr.bf16.gmra.mrb[0].mxu0 %v608
      %v644 = vpop.f32.mrb[0].mxu0
      %v645 = vadd.f32 0.0, %v644
      %v646 = vpop.f32.mrb[0].mxu0
      %v647 = vpop.f32.mrb[0].mxu0
      %v648 = vpop.f32.mrb[0].mxu0
      %649 = vdwg.mxu0
      %v650 = vadd.f32 %v605, %v645
      %v651 = vxor.u32 %v650, 2147483648
      %v652 = vmul.f32 %v651, 1.442695
      %v653 = vpow.pop %v652
      %v654 = vadd.f32 %v653, 1.0
      %v655 = vrcp.pop %v654
      %v656 = vmul.f32 1.0, %v655
      %v657 = vtanh.pop %v650
      %659 = vrot.lane.b32.xlu0 %v603, 32
      %v660 = vpop.permute.xlu0 %659
      %v662 = vmul.f32 %v656, %v660
      %664 = vrot.lane.b32.xlu0 %v657, 64
      %v665 = vpop.permute.xlu0 %664
      %v667 = vmul.f32 %v656, %v665
      %669 = vrot.lane.b32.xlu0 %v667, 32
      %v670 = vpop.permute.xlu0 %669
      %v672 = vadd.f32 %v662, %v670
      %v673 = vtanh.pop %v672
      %675 = vrot.lane.b32.xlu0 %v673, 64
      %v676 = vpop.permute.xlu0 %675
      %v678 = vmul.f32 %v656, %v676
      %680 = vrot.lane.b32.xlu0 %v678, 32
      %v681 = vpop.permute.xlu0 %680
      %683 = vst.msk [vmem:[#allocation2] sm:$0x3] %vm505, %v681
      %685 = vrot.lane.b32.xlu0 %v672, 96
      %v686 = vpop.permute.xlu0 %685
      %688 = vst.msk [vmem:[#allocation3] sm:$0x3] %vm505, %v686
      %s689 = scalar_lea.vmem [#allocation5], 4
      %690 = vst.msk [vmem:[%s689] sm:$0x3] %vm505, %v681
      %v691 = vld [vmem:[#allocation2] sm:$0x3]
      %v692 = vld [vmem:[#allocation3] sm:$0x3]
      %s693 = scalar_lea.vmem [#allocation4], 6
      %v694 = vld [vmem:[%s693] sm:$0x3]
      %v695 = vpack.c.bf16 %v691, %v691
      %v697 = vsel %vm428, %v695, 0
      %699 = vmatprep.subr.bf16.mxu0 0
      %700 = vmatpush1.bf16.msra.mxu0 %v424
      %701 = vmatprep.subr.bf16.mxu0 0
      %702 = vmatpush1.bf16.msra.mxu0 %v425
      %703 = vmatprep.subr.bf16.mxu0 0
      %704 = vmatpush1.bf16.msra.mxu0 0
      %705 = vmatprep.subr.bf16.mxu0 0
      %706 = vmatpush1.bf16.msra.mxu0 0
      %707 = vmatprep.subr.bf16.mxu0 0
      %708 = vmatpush1.bf16.msra.mxu0 0
      %709 = vmatprep.subr.bf16.mxu0 0
      %710 = vmatpush1.bf16.msra.mxu0 0
      %711 = vmatprep.subr.bf16.mxu0 0
      %712 = vmatpush1.bf16.msra.mxu0 0
      %713 = vmatprep.subr.bf16.mxu0 0
      %714 = vmatpush1.bf16.msra.mxu0 0
      %715 = vmatprep.subr.bf16.mxu0 0
      %716 = vmatpush1.bf16.msra.mxu0 0
      %717 = vmatprep.subr.bf16.mxu0 0
      %718 = vmatpush1.bf16.msra.mxu0 0
      %719 = vmatprep.subr.bf16.mxu0 0
      %720 = vmatpush1.bf16.msra.mxu0 0
      %721 = vmatprep.subr.bf16.mxu0 0
      %722 = vmatpush1.bf16.msra.mxu0 0
      %723 = vmatprep.subr.bf16.mxu0 0
      %724 = vmatpush1.bf16.msra.mxu0 0
      %725 = vmatprep.subr.bf16.mxu0 0
      %726 = vmatpush1.bf16.msra.mxu0 0
      %727 = vmatprep.subr.bf16.mxu0 0
      %728 = vmatpush1.bf16.msra.mxu0 0
      %729 = vmatprep.subr.bf16.mxu0 0
      %730 = vmatpush1.bf16.msra.mxu0 0
      %731 = vmatprep.mubr.bf16.mxu0 0
      %732 = vmatmul.mubr.bf16.gmra.mrb[0].mxu0 %v697
      %v733 = vpop.f32.mrb[0].mxu0
      %v734 = vadd.f32 0.0, %v733
      %v735 = vpop.f32.mrb[0].mxu0
      %v736 = vpop.f32.mrb[0].mxu0
      %v737 = vpop.f32.mrb[0].mxu0
      %738 = vdwg.mxu0
      %v739 = vadd.f32 %v694, %v734
      %v740 = vxor.u32 %v739, 2147483648
      %v741 = vmul.f32 %v740, 1.442695
      %v742 = vpow.pop %v741
      %v743 = vadd.f32 %v742, 1.0
      %v744 = vrcp.pop %v743
      %v745 = vmul.f32 1.0, %v744
      %v746 = vtanh.pop %v739
      %748 = vrot.lane.b32.xlu0 %v692, 32
      %v749 = vpop.permute.xlu0 %748
      %v751 = vmul.f32 %v745, %v749
      %753 = vrot.lane.b32.xlu0 %v746, 64
      %v754 = vpop.permute.xlu0 %753
      %v756 = vmul.f32 %v745, %v754
      %758 = vrot.lane.b32.xlu0 %v756, 32
      %v759 = vpop.permute.xlu0 %758
      %v761 = vadd.f32 %v751, %v759
      %v762 = vtanh.pop %v761
      %764 = vrot.lane.b32.xlu0 %v762, 64
      %v765 = vpop.permute.xlu0 %764
      %v767 = vmul.f32 %v745, %v765
      %769 = vrot.lane.b32.xlu0 %v767, 32
      %v770 = vpop.permute.xlu0 %769
      %772 = vst.msk [vmem:[#allocation2] sm:$0x3] %vm505, %v770
      %774 = vrot.lane.b32.xlu0 %v761, 96
      %v775 = vpop.permute.xlu0 %774
      %777 = vst.msk [vmem:[#allocation3] sm:$0x3] %vm505, %v775
      %s778 = scalar_lea.vmem [#allocation5], 6
      %779 = vst.msk [vmem:[%s778] sm:$0x3] %vm505, %v770
      %v780 = vld [vmem:[#allocation2] sm:$0x3]
      %v781 = vld [vmem:[#allocation3] sm:$0x3]
      %s782 = scalar_lea.vmem [#allocation4], 8
      %v783 = vld [vmem:[%s782] sm:$0x3]
      %v784 = vpack.c.bf16 %v780, %v780
      %v786 = vsel %vm428, %v784, 0
      %788 = vmatprep.subr.bf16.mxu0 0
      %789 = vmatpush1.bf16.msra.mxu0 %v424
      %790 = vmatprep.subr.bf16.mxu0 0
      %791 = vmatpush1.bf16.msra.mxu0 %v425
      %792 = vmatprep.subr.bf16.mxu0 0
      %793 = vmatpush1.bf16.msra.mxu0 0
      %794 = vmatprep.subr.bf16.mxu0 0
      %795 = vmatpush1.bf16.msra.mxu0 0
      %796 = vmatprep.subr.bf16.mxu0 0
      %797 = vmatpush1.bf16.msra.mxu0 0
      %798 = vmatprep.subr.bf16.mxu0 0
      %799 = vmatpush1.bf16.msra.mxu0 0
      %800 = vmatprep.subr.bf16.mxu0 0
      %801 = vmatpush1.bf16.msra.mxu0 0
      %802 = vmatprep.subr.bf16.mxu0 0
      %803 = vmatpush1.bf16.msra.mxu0 0
      %804 = vmatprep.subr.bf16.mxu0 0
      %805 = vmatpush1.bf16.msra.mxu0 0
      %806 = vmatprep.subr.bf16.mxu0 0
      %807 = vmatpush1.bf16.msra.mxu0 0
      %808 = vmatprep.subr.bf16.mxu0 0
      %809 = vmatpush1.bf16.msra.mxu0 0
      %810 = vmatprep.subr.bf16.mxu0 0
      %811 = vmatpush1.bf16.msra.mxu0 0
      %812 = vmatprep.subr.bf16.mxu0 0
      %813 = vmatpush1.bf16.msra.mxu0 0
      %814 = vmatprep.subr.bf16.mxu0 0
      %815 = vmatpush1.bf16.msra.mxu0 0
      %816 = vmatprep.subr.bf16.mxu0 0
      %817 = vmatpush1.bf16.msra.mxu0 0
      %818 = vmatprep.subr.bf16.mxu0 0
      %819 = vmatpush1.bf16.msra.mxu0 0
      %820 = vmatprep.mubr.bf16.mxu0 0
      %821 = vmatmul.mubr.bf16.gmra.mrb[0].mxu0 %v786
      %v822 = vpop.f32.mrb[0].mxu0
      %v823 = vadd.f32 0.0, %v822
      %v824 = vpop.f32.mrb[0].mxu0
      %v825 = vpop.f32.mrb[0].mxu0
      %v826 = vpop.f32.mrb[0].mxu0
      %827 = vdwg.mxu0
      %v828 = vadd.f32 %v783, %v823
      %v829 = vxor.u32 %v828, 2147483648
      %v830 = vmul.f32 %v829, 1.442695
      %v831 = vpow.pop %v830
      %v832 = vadd.f32 %v831, 1.0
      %v833 = vrcp.pop %v832
      %v834 = vmul.f32 1.0, %v833
      %v835 = vtanh.pop %v828
      %837 = vrot.lane.b32.xlu0 %v781, 32
      %v838 = vpop.permute.xlu0 %837
      %v840 = vmul.f32 %v834, %v838
      %842 = vrot.lane.b32.xlu0 %v835, 64
      %v843 = vpop.permute.xlu0 %842
      %v845 = vmul.f32 %v834, %v843
      %847 = vrot.lane.b32.xlu0 %v845, 32
      %v848 = vpop.permute.xlu0 %847
      %v850 = vadd.f32 %v840, %v848
      %v851 = vtanh.pop %v850
      %853 = vrot.lane.b32.xlu0 %v851, 64
      %v854 = vpop.permute.xlu0 %853
      %v856 = vmul.f32 %v834, %v854
      %858 = vrot.lane.b32.xlu0 %v856, 32
      %v859 = vpop.permute.xlu0 %858
      %861 = vst.msk [vmem:[#allocation2] sm:$0x3] %vm505, %v859
      %863 = vrot.lane.b32.xlu0 %v850, 96
      %v864 = vpop.permute.xlu0 %863
      %866 = vst.msk [vmem:[#allocation3] sm:$0x3] %vm505, %v864
      %s867 = scalar_lea.vmem [#allocation5], 8
      %868 = vst.msk [vmem:[%s867] sm:$0x3] %vm505, %v859
      %v869 = vld [vmem:[#allocation2] sm:$0x3]
      %v870 = vld [vmem:[#allocation3] sm:$0x3]
      %s871 = scalar_lea.vmem [#allocation4], 10
      %v872 = vld [vmem:[%s871] sm:$0x3]
      %v873 = vpack.c.bf16 %v869, %v869
      %v875 = vsel %vm428, %v873, 0
      %877 = vmatprep.subr.bf16.mxu0 0
      %878 = vmatpush1.bf16.msra.mxu0 %v424
      %879 = vmatprep.subr.bf16.mxu0 0
      %880 = vmatpush1.bf16.msra.mxu0 %v425
      %881 = vmatprep.subr.bf16.mxu0 0
      %882 = vmatpush1.bf16.msra.mxu0 0
      %883 = vmatprep.subr.bf16.mxu0 0
      %884 = vmatpush1.bf16.msra.mxu0 0
      %885 = vmatprep.subr.bf16.mxu0 0
      %886 = vmatpush1.bf16.msra.mxu0 0
      %887 = vmatprep.subr.bf16.mxu0 0
      %888 = vmatpush1.bf16.msra.mxu0 0
      %889 = vmatprep.subr.bf16.mxu0 0
      %890 = vmatpush1.bf16.msra.mxu0 0
      %891 = vmatprep.subr.bf16.mxu0 0
      %892 = vmatpush1.bf16.msra.mxu0 0
      %893 = vmatprep.subr.bf16.mxu0 0
      %894 = vmatpush1.bf16.msra.mxu0 0
      %895 = vmatprep.subr.bf16.mxu0 0
      %896 = vmatpush1.bf16.msra.mxu0 0
      %897 = vmatprep.subr.bf16.mxu0 0
      %898 = vmatpush1.bf16.msra.mxu0 0
      %899 = vmatprep.subr.bf16.mxu0 0
      %900 = vmatpush1.bf16.msra.mxu0 0
      %901 = vmatprep.subr.bf16.mxu0 0
      %902 = vmatpush1.bf16.msra.mxu0 0
      %903 = vmatprep.subr.bf16.mxu0 0
      %904 = vmatpush1.bf16.msra.mxu0 0
      %905 = vmatprep.subr.bf16.mxu0 0
      %906 = vmatpush1.bf16.msra.mxu0 0
      %907 = vmatprep.subr.bf16.mxu0 0
      %908 = vmatpush1.bf16.msra.mxu0 0
      %909 = vmatprep.mubr.bf16.mxu0 0
      %910 = vmatmul.mubr.bf16.gmra.mrb[0].mxu0 %v875
      %v911 = vpop.f32.mrb[0].mxu0
      %v912 = vadd.f32 0.0, %v911
      %v913 = vpop.f32.mrb[0].mxu0
      %v914 = vpop.f32.mrb[0].mxu0
      %v915 = vpop.f32.mrb[0].mxu0
      %916 = vdwg.mxu0
      %v917 = vadd.f32 %v872, %v912
      %v918 = vxor.u32 %v917, 2147483648
      %v919 = vmul.f32 %v918, 1.442695
      %v920 = vpow.pop %v919
      %v921 = vadd.f32 %v920, 1.0
      %v922 = vrcp.pop %v921
      %v923 = vmul.f32 1.0, %v922
      %v924 = vtanh.pop %v917
      %926 = vrot.lane.b32.xlu0 %v870, 32
      %v927 = vpop.permute.xlu0 %926
      %v929 = vmul.f32 %v923, %v927
      %931 = vrot.lane.b32.xlu0 %v924, 64
      %v932 = vpop.permute.xlu0 %931
      %v934 = vmul.f32 %v923, %v932
      %936 = vrot.lane.b32.xlu0 %v934, 32
      %v937 = vpop.permute.xlu0 %936
      %v939 = vadd.f32 %v929, %v937
      %v940 = vtanh.pop %v939
      %942 = vrot.lane.b32.xlu0 %v940, 64
      %v943 = vpop.permute.xlu0 %942
      %v945 = vmul.f32 %v923, %v943
      %947 = vrot.lane.b32.xlu0 %v945, 32
      %v948 = vpop.permute.xlu0 %947
      %950 = vst.msk [vmem:[#allocation2] sm:$0x3] %vm505, %v948
      %952 = vrot.lane.b32.xlu0 %v939, 96
      %v953 = vpop.permute.xlu0 %952
      %955 = vst.msk [vmem:[#allocation3] sm:$0x3] %vm505, %v953
      %s956 = scalar_lea.vmem [#allocation5], 10
      %957 = vst.msk [vmem:[%s956] sm:$0x3] %vm505, %v948
      %v958 = vld [vmem:[#allocation2] sm:$0x3]
      %v959 = vld [vmem:[#allocation3] sm:$0x3]
      %s960 = scalar_lea.vmem [#allocation4], 12
      %v961 = vld [vmem:[%s960] sm:$0x3]
      %v962 = vpack.c.bf16 %v958, %v958
      %v964 = vsel %vm428, %v962, 0
      %966 = vmatprep.subr.bf16.mxu0 0
      %967 = vmatpush1.bf16.msra.mxu0 %v424
      %968 = vmatprep.subr.bf16.mxu0 0
      %969 = vmatpush1.bf16.msra.mxu0 %v425
      %970 = vmatprep.subr.bf16.mxu0 0
      %971 = vmatpush1.bf16.msra.mxu0 0
      %972 = vmatprep.subr.bf16.mxu0 0
      %973 = vmatpush1.bf16.msra.mxu0 0
      %974 = vmatprep.subr.bf16.mxu0 0
      %975 = vmatpush1.bf16.msra.mxu0 0
      %976 = vmatprep.subr.bf16.mxu0 0
      %977 = vmatpush1.bf16.msra.mxu0 0
      %978 = vmatprep.subr.bf16.mxu0 0
      %979 = vmatpush1.bf16.msra.mxu0 0
      %980 = vmatprep.subr.bf16.mxu0 0
      %981 = vmatpush1.bf16.msra.mxu0 0
      %982 = vmatprep.subr.bf16.mxu0 0
      %983 = vmatpush1.bf16.msra.mxu0 0
      %984 = vmatprep.subr.bf16.mxu0 0
      %985 = vmatpush1.bf16.msra.mxu0 0
      %986 = vmatprep.subr.bf16.mxu0 0
      %987 = vmatpush1.bf16.msra.mxu0 0
      %988 = vmatprep.subr.bf16.mxu0 0
      %989 = vmatpush1.bf16.msra.mxu0 0
      %990 = vmatprep.subr.bf16.mxu0 0
      %991 = vmatpush1.bf16.msra.mxu0 0
      %992 = vmatprep.subr.bf16.mxu0 0
      %993 = vmatpush1.bf16.msra.mxu0 0
      %994 = vmatprep.subr.bf16.mxu0 0
      %995 = vmatpush1.bf16.msra.mxu0 0
      %996 = vmatprep.subr.bf16.mxu0 0
      %997 = vmatpush1.bf16.msra.mxu0 0
      %998 = vmatprep.mubr.bf16.mxu0 0
      %999 = vmatmul.mubr.bf16.gmra.mrb[0].mxu0 %v964
      %v1000 = vpop.f32.mrb[0].mxu0
      %v1001 = vadd.f32 0.0, %v1000
      %v1002 = vpop.f32.mrb[0].mxu0
      %v1003 = vpop.f32.mrb[0].mxu0
      %v1004 = vpop.f32.mrb[0].mxu0
      %1005 = vdwg.mxu0
      %v1006 = vadd.f32 %v961, %v1001
      %v1007 = vxor.u32 %v1006, 2147483648
      %v1008 = vmul.f32 %v1007, 1.442695
      %v1009 = vpow.pop %v1008
      %v1010 = vadd.f32 %v1009, 1.0
      %v1011 = vrcp.pop %v1010
      %v1012 = vmul.f32 1.0, %v1011
      %v1013 = vtanh.pop %v1006
      %1015 = vrot.lane.b32.xlu0 %v959, 32
      %v1016 = vpop.permute.xlu0 %1015
      %v1018 = vmul.f32 %v1012, %v1016
      %1020 = vrot.lane.b32.xlu0 %v1013, 64
      %v1021 = vpop.permute.xlu0 %1020
      %v1023 = vmul.f32 %v1012, %v1021
      %1025 = vrot.lane.b32.xlu0 %v1023, 32
      %v1026 = vpop.permute.xlu0 %1025
      %v1028 = vadd.f32 %v1018, %v1026
      %v1029 = vtanh.pop %v1028
      %1031 = vrot.lane.b32.xlu0 %v1029, 64
      %v1032 = vpop.permute.xlu0 %1031
      %v1034 = vmul.f32 %v1012, %v1032
      %1036 = vrot.lane.b32.xlu0 %v1034, 32
      %v1037 = vpop.permute.xlu0 %1036
      %1039 = vst.msk [vmem:[#allocation2] sm:$0x3] %vm505, %v1037
      %1041 = vrot.lane.b32.xlu0 %v1028, 96
      %v1042 = vpop.permute.xlu0 %1041
      %1044 = vst.msk [vmem:[#allocation3] sm:$0x3] %vm505, %v1042
      %s1045 = scalar_lea.vmem [#allocation5], 12
      %1046 = vst.msk [vmem:[%s1045] sm:$0x3] %vm505, %v1037
      %v1047 = vld [vmem:[#allocation2] sm:$0x3]
      %v1048 = vld [vmem:[#allocation3] sm:$0x3]
      %s1049 = scalar_lea.vmem [#allocation4], 14
      %v1050 = vld [vmem:[%s1049] sm:$0x3]
      %v1051 = vpack.c.bf16 %v1047, %v1047
      %v1053 = vsel %vm428, %v1051, 0
      %1055 = vmatprep.subr.bf16.mxu0 0
      %1056 = vmatpush1.bf16.msra.mxu0 %v424
      %1057 = vmatprep.subr.bf16.mxu0 0
      %1058 = vmatpush1.bf16.msra.mxu0 %v425
      %1059 = vmatprep.subr.bf16.mxu0 0
      %1060 = vmatpush1.bf16.msra.mxu0 0
      %1061 = vmatprep.subr.bf16.mxu0 0
      %1062 = vmatpush1.bf16.msra.mxu0 0
      %1063 = vmatprep.subr.bf16.mxu0 0
      %1064 = vmatpush1.bf16.msra.mxu0 0
      %1065 = vmatprep.subr.bf16.mxu0 0
      %1066 = vmatpush1.bf16.msra.mxu0 0
      %1067 = vmatprep.subr.bf16.mxu0 0
      %1068 = vmatpush1.bf16.msra.mxu0 0
      %1069 = vmatprep.subr.bf16.mxu0 0
      %1070 = vmatpush1.bf16.msra.mxu0 0
      %1071 = vmatprep.subr.bf16.mxu0 0
      %1072 = vmatpush1.bf16.msra.mxu0 0
      %1073 = vmatprep.subr.bf16.mxu0 0
      %1074 = vmatpush1.bf16.msra.mxu0 0
      %1075 = vmatprep.subr.bf16.mxu0 0
      %1076 = vmatpush1.bf16.msra.mxu0 0
      %1077 = vmatprep.subr.bf16.mxu0 0
      %1078 = vmatpush1.bf16.msra.mxu0 0
      %1079 = vmatprep.subr.bf16.mxu0 0
      %1080 = vmatpush1.bf16.msra.mxu0 0
      %1081 = vmatprep.subr.bf16.mxu0 0
      %1082 = vmatpush1.bf16.msra.mxu0 0
      %1083 = vmatprep.subr.bf16.mxu0 0
      %1084 = vmatpush1.bf16.msra.mxu0 0
      %1085 = vmatprep.subr.bf16.mxu0 0
      %1086 = vmatpush1.bf16.msra.mxu0 0
      %1087 = vmatprep.mubr.bf16.mxu0 0
      %1088 = vmatmul.mubr.bf16.gmra.mrb[0].mxu0 %v1053
      %v1089 = vpop.f32.mrb[0].mxu0
      %v1090 = vadd.f32 0.0, %v1089
      %v1091 = vpop.f32.mrb[0].mxu0
      %v1092 = vpop.f32.mrb[0].mxu0
      %v1093 = vpop.f32.mrb[0].mxu0
      %1094 = vdwg.mxu0
      %v1095 = vadd.f32 %v1050, %v1090
      %v1096 = vxor.u32 %v1095, 2147483648
      %v1097 = vmul.f32 %v1096, 1.442695
      %v1098 = vpow.pop %v1097
      %v1099 = vadd.f32 %v1098, 1.0
      %v1100 = vrcp.pop %v1099
      %v1101 = vmul.f32 1.0, %v1100
      %v1102 = vtanh.pop %v1095
      %1104 = vrot.lane.b32.xlu0 %v1048, 32
      %v1105 = vpop.permute.xlu0 %1104
      %v1107 = vmul.f32 %v1101, %v1105
      %1109 = vrot.lane.b32.xlu0 %v1102, 64
      %v1110 = vpop.permute.xlu0 %1109
      %v1112 = vmul.f32 %v1101, %v1110
      %1114 = vrot.lane.b32.xlu0 %v1112, 32
      %v1115 = vpop.permute.xlu0 %1114
      %v1117 = vadd.f32 %v1107, %v1115
      %v1118 = vtanh.pop %v1117
      %1120 = vrot.lane.b32.xlu0 %v1118, 64
      %v1121 = vpop.permute.xlu0 %1120
      %v1123 = vmul.f32 %v1101, %v1121
      %1125 = vrot.lane.b32.xlu0 %v1123, 32
      %v1126 = vpop.permute.xlu0 %1125
      %1128 = vst.msk [vmem:[#allocation2] sm:$0x3] %vm505, %v1126
      %1130 = vrot.lane.b32.xlu0 %v1117, 96
      %v1131 = vpop.permute.xlu0 %1130
      %1133 = vst.msk [vmem:[#allocation3] sm:$0x3] %vm505, %v1131
      %s1134 = scalar_lea.vmem [#allocation5], 14
      %1135 = vst.msk [vmem:[%s1134] sm:$0x3] %vm505, %v1126
      %v1136 = vld [vmem:[#allocation5] sm:$0x3]
      %v1137 = vld [vmem:[#allocation5 + $0x2] sm:$0x3]
      %v1138 = vld [vmem:[#allocation5 + $0x4] sm:$0x3]
      %v1139 = vld [vmem:[#allocation5 + $0x6] sm:$0x3]
      %v1140 = vld [vmem:[#allocation5 + $0x8] sm:$0x3]
      %v1141 = vld [vmem:[#allocation5 + $0xa] sm:$0x3]
      %v1142 = vld [vmem:[#allocation5 + $0xc] sm:$0x3]
      %v1143 = vld [vmem:[#allocation5 + $0xe] sm:$0x3]
      %v1152 = vcombine.low %v1136, %v1137
      %v1153 = vcombine.low %v1138, %v1139
      %v1155 = vunpack.c.l.s4 1983009808
      %v1156 = vunpack.c.0.s8 %v1155
      %v1157 = vlaneseq
      %v1158 = vshrl.u32 %v1157, 7
      %v1159 = vsub.s32 %v1156, %v1158
      %v1160 = vrot.slane %v1152, %v1159
      %v1162 = vunpack.c.l.s4 1983009808
      %v1163 = vunpack.c.0.s8 %v1162
      %v1164 = vlaneseq
      %v1165 = vshrl.u32 %v1164, 7
      %v1166 = vsub.s32 %v1163, %v1165
      %v1167 = vrot.slane %v1153, %v1166
      %v1168 = vcombine.low %v1160, %v1167
      %v1169 = vcombine.low %v1140, %v1141
      %v1170 = vcombine.low %v1142, %v1143
      %v1172 = vunpack.c.l.s4 1983009808
      %v1173 = vunpack.c.0.s8 %v1172
      %v1174 = vlaneseq
      %v1175 = vshrl.u32 %v1174, 7
      %v1176 = vsub.s32 %v1173, %v1175
      %v1177 = vrot.slane %v1169, %v1176
      %v1179 = vunpack.c.l.s4 1983009808
      %v1180 = vunpack.c.0.s8 %v1179
      %v1181 = vlaneseq
      %v1182 = vshrl.u32 %v1181, 7
      %v1183 = vsub.s32 %v1180, %v1182
      %v1184 = vrot.slane %v1170, %v1183
      %v1185 = vcombine.low %v1177, %v1184
      %v1188 = vpack.c.bf16 %v1185, %v1168
      %v1189 = vld [vmem:[%s4] sm:$0xf]
      %v1190 = vld [vmem:[%s4 + $0x4] sm:$0xf]
      %v1191 = vld [vmem:[%s4 + $0x8] sm:$0xf]
      %v1192 = vld [vmem:[%s4 + $0xc] sm:$0xf]
      %v1197 = vunpack.c.l.b16 %v1189
      %v1198 = vunpack.c.l.b16 %v1190
      %v1199 = vunpack.c.l.b16 %v1191
      %v1200 = vunpack.c.l.b16 %v1192
      %v1201 = vpack.c.b16 %v1198, %v1197
      %v1202 = vpack.c.b16 %v1200, %v1199
      %v1206 = vsel %vm428, %v1188, 0
      %1208 = vmatprep.subr.bf16.mxu0 0
      %1209 = vmatpush1.bf16.msra.mxu0 %v1201
      %1210 = vmatprep.subr.bf16.mxu0 0
      %1211 = vmatpush1.bf16.msra.mxu0 %v1202
      %1212 = vmatprep.subr.bf16.mxu0 0
      %1213 = vmatpush1.bf16.msra.mxu0 0
      %1214 = vmatprep.subr.bf16.mxu0 0
      %1215 = vmatpush1.bf16.msra.mxu0 0
      %1216 = vmatprep.subr.bf16.mxu0 0
      %1217 = vmatpush1.bf16.msra.mxu0 0
      %1218 = vmatprep.subr.bf16.mxu0 0
      %1219 = vmatpush1.bf16.msra.mxu0 0
      %1220 = vmatprep.subr.bf16.mxu0 0
      %1221 = vmatpush1.bf16.msra.mxu0 0
      %1222 = vmatprep.subr.bf16.mxu0 0
      %1223 = vmatpush1.bf16.msra.mxu0 0
      %1224 = vmatprep.subr.bf16.mxu0 0
      %1225 = vmatpush1.bf16.msra.mxu0 0
      %1226 = vmatprep.subr.bf16.mxu0 0
      %1227 = vmatpush1.bf16.msra.mxu0 0
      %1228 = vmatprep.subr.bf16.mxu0 0
      %1229 = vmatpush1.bf16.msra.mxu0 0
      %1230 = vmatprep.subr.bf16.mxu0 0
      %1231 = vmatpush1.bf16.msra.mxu0 0
      %1232 = vmatprep.subr.bf16.mxu0 0
      %1233 = vmatpush1.bf16.msra.mxu0 0
      %1234 = vmatprep.subr.bf16.mxu0 0
      %1235 = vmatpush1.bf16.msra.mxu0 0
      %1236 = vmatprep.subr.bf16.mxu0 0
      %1237 = vmatpush1.bf16.msra.mxu0 0
      %1238 = vmatprep.subr.bf16.mxu0 0
      %1239 = vmatpush1.bf16.msra.mxu0 0
      %1240 = vmatprep.mubr.bf16.mxu0 0
      %1241 = vmatmul.mubr.bf16.gmra.mrb[0].mxu0 %v1206
      %v1242 = vpop.f32.mrb[0].mxu0
      %v1243 = vadd.f32 0.0, %v1242
      %v1244 = vpop.f32.mrb[0].mxu0
      %v1245 = vpop.f32.mrb[0].mxu0
      %v1246 = vadd.f32 0.0, %v1245
      %v1247 = vpop.f32.mrb[0].mxu0
      %1248 = vdwg.mxu0
      %v1251 = vcombine.high %v1243, %v1243
      %v1253 = vunpack.c.l.s4 1983009808
      %v1254 = vunpack.c.0.s8 %v1253
      %v1255 = vlaneseq
      %v1256 = vshrl.u32 %v1255, 7
      %v1257 = vsub.s32 %v1254, %v1256
      %v1258 = vrot.slane %v1243, %v1257
      %v1260 = vunpack.c.l.s4 1983009808
      %v1261 = vunpack.c.0.s8 %v1260
      %v1262 = vlaneseq
      %v1263 = vshrl.u32 %v1262, 7
      %v1264 = vsub.s32 %v1261, %v1263
      %v1265 = vrot.slane %v1251, %v1264
      %v1266 = vcombine.high %v1258, %v1258
      %v1267 = vcombine.high %v1265, %v1265
      %v1268 = vcombine.high %v1246, %v1246
      %v1270 = vunpack.c.l.s4 1983009808
      %v1271 = vunpack.c.0.s8 %v1270
      %v1272 = vlaneseq
      %v1273 = vshrl.u32 %v1272, 7
      %v1274 = vsub.s32 %v1271, %v1273
      %v1275 = vrot.slane %v1246, %v1274
      %v1277 = vunpack.c.l.s4 1983009808
      %v1278 = vunpack.c.0.s8 %v1277
      %v1279 = vlaneseq
      %v1280 = vshrl.u32 %v1279, 7
      %v1281 = vsub.s32 %v1278, %v1280
      %v1282 = vrot.slane %v1268, %v1281
      %v1283 = vcombine.high %v1275, %v1275
      %v1284 = vcombine.high %v1282, %v1282
      %v1293 = vpack.c.bf16 %v1258, %v1258
      %v1294 = vpack.c.bf16 %v1266, %v1266
      %v1295 = vpack.c.bf16 %v1265, %v1265
      %v1296 = vpack.c.bf16 %v1267, %v1267
      %v1297 = vpack.c.bf16 %v1275, %v1275
      %v1298 = vpack.c.bf16 %v1283, %v1283
      %v1299 = vpack.c.bf16 %v1282, %v1282
      %v1300 = vpack.c.bf16 %v1284, %v1284
      %vm1301 = vcmask 122880
      %1302 = vst.msk [vmem:[%s221] sm:$0x1] %vm1301, %v1293
      %1303 = vst.msk [vmem:[%s221 + $0x1] sm:$0x1] %vm1301, %v1294
      %1304 = vst.msk [vmem:[%s221 + $0x2] sm:$0x1] %vm1301, %v1295
      %1305 = vst.msk [vmem:[%s221 + $0x3] sm:$0x1] %vm1301, %v1296
      %1306 = vst.msk [vmem:[%s221 + $0x4] sm:$0x1] %vm1301, %v1297
      %1307 = vst.msk [vmem:[%s221 + $0x5] sm:$0x1] %vm1301, %v1298
      %1308 = vst.msk [vmem:[%s221 + $0x6] sm:$0x1] %vm1301, %v1299
      %1309 = vst.msk [vmem:[%s221 + $0x7] sm:$0x1] %vm1301, %v1300
      %s1310 = smul.u32 8, %s16
      %p1311 = scmp.lt.s32.totalorder %s1310, 15
      %s1312 = scalar_select %p1311, %s1310, 15
      %s1313 = scalar_lea.vmem %s5, %s1312
      // Predicated region
      $region45: #{lstm_speaker_encoder_forward.6} parent=39 // pred_check
        %p1314 = pneg %p144
      $region46: #{lstm_speaker_encoder_forward.6} parent=39 // pred_check_branch
        %1316 = sbr.rel (%p1314) target = $region48
      $region47: #{lstm_speaker_encoder_forward.6} parent=39 // pred_region
        %s1317 = smul.u32 8, %s16
      $region48: #{lstm_speaker_encoder_forward.6} parent=39 // pred_fallthru
        _
    $region40: #{lstm_speaker_encoder_forward.6} parent=5 // pred_fallthru
      _
    %p1318 = scmp.le.s32.totalorder 2, %s11
    // Predicated region
    $region49: #{lstm_speaker_encoder_forward.6} parent=5 // pred_check
      %p1319 = pneg %p1318
    $region50: #{lstm_speaker_encoder_forward.6} parent=5 // pred_check_branch
      %1321 = sbr.rel (%p1319) target = $region52
    $region51: #{lstm_speaker_encoder_forward.6} parent=5 // pred_region
      %s1322 = ssub.s32 %s11, 2
      // Predicated region
      $region53: #{lstm_speaker_encoder_forward.6} parent=51 // pred_check
        %p1323 = pneg %p150
      $region54: #{lstm_speaker_encoder_forward.6} parent=51 // pred_check_branch
        %1325 = sbr.rel (%p1323) target = $region56
      $region55: #{lstm_speaker_encoder_forward.6} parent=51 // pred_region
        %s1326 = smul.u32 8, %s17
        %p1327 = scmp.lt.s32.totalorder %s1326, 15
        %s1328 = scalar_select %p1327, %s1326, 15
        %s1329 = scalar_lea.vmem %s5, %s1328
      $region56: #{lstm_speaker_encoder_forward.6} parent=51 // pred_fallthru
        _
    $region52: #{lstm_speaker_encoder_forward.6} parent=5 // pred_fallthru
      _
  $region6: #{lstm_speaker_encoder_forward.6} parent=0 // loop_footer
    %s15 = sadd.s32 1, %s11
  $region7: #{lstm_speaker_encoder_forward.6} parent=0 // loop_footer_branch
    %10 = sbr.rel target = $region3
  $region8: #{lstm_speaker_encoder_forward.6} parent=0 // loop_exit
    _

// kernel: lstm_speaker_encoder_forward.7
$region0: #{lstm_speaker_encoder_forward.7}
  #allocation0 [shape = 'u32[]', space=smem, size = 0x4, offset = 0x4, fixed_abs, tag = 'smem constant byte address 0x4 - core index']
  #allocation1 [shape = 'u32[144,128]{1,0:T(1,128)}', space=vmem, size = 0x12000, scoped, tag = 'internal scratch']
  #allocation2 [shape = 'f32[2,32]{1,0:T(2,128)}', space=vmem, size = 0x400, scoped, tag = 'scratch operand']
  #allocation3 [shape = 'f32[2,32]{1,0:T(2,128)}', space=vmem, size = 0x400, scoped, tag = 'scratch operand']
  #allocation4 [shape = 'f32[8,2,128]{2,1,0:T(2,128)}', space=vmem, size = 0x2000, scoped, tag = 'scratch operand']
  %s0 = inlined_call_operand.vmem [shape: bf16[16,2,16], index: 0, kind: input, shape index: {}]
  %s1 = inlined_call_operand.vmem [shape: bf16[16,128], index: 1, kind: input, shape index: {}]
  %s2 = inlined_call_operand.vmem [shape: bf16[32,128], index: 2, kind: input, shape index: {}]
  %s3 = inlined_call_operand.vmem [shape: f32[1,128], index: 3, kind: input, shape index: {}]
  %s4 = inlined_call_operand.vmem [shape: bf16[32,16], index: 4, kind: input, shape index: {}]
  %s5 = inlined_call_operand.hbm [shape: f32[2,16], index: 5, kind: output, shape index: {}]
  %s6 = sld [smem:[#allocation0]]
  $region61: #{lstm_speaker_encoder_forward.7} parent=0
    _
  %s8 = ssub.s32 1, %s6
  %s9 = scalar_select 0, %s8, %s6
  $region1: #{lstm_speaker_encoder_forward.7} parent=0
    #allocation5 [shape = 'u8[1024]{0}', space=vmem, size = 0x400, scoped, tag = 'output window, operand 0, single buffered']
    #allocation6 [shape = 's32[2]{0}', space=sflag, size = 0x8, scoped, tag = 'scoped memory for lstm_speaker_encoder_forward.7']
    %10 = vsyncpa [#allocation6], 0
    loop: start=0, step=1, limit=4
    $region2: #{lstm_speaker_encoder_forward.7} parent=1 // loop_pre_header
      _
    $region3: #{lstm_speaker_encoder_forward.7} parent=1 // loop_header
      %s12 = sphi 0, %s16
      %p13 = scmp.ge.s32.totalorder %s12, 4
      %s22 = sphi 0, %s24
      %s25 = sphi 0, %s22
      %s26 = sphi 0, %s25
      %s42 = sphi 0, %s26
      %s46 = sphi 0, %s46
      %s48 = sphi 0, %s46
      %s49 = sphi 0, %s48
      %s63 = sphi 0, %s49
      %s67 = sphi 0, %s67
      %s69 = sphi 0, %s67
      %s70 = sphi 0, %s69
      %s84 = sphi 0, %s70
      %s88 = sphi 0, %s88
      %s90 = sphi 0, %s88
      %s91 = sphi 0, %s90
      %s105 = sphi 0, %s91
      %s109 = sphi 0, %s109
      %s111 = sphi 0, %s109
      %s112 = sphi 0, %s111
      %s126 = sphi 0, %s112
      %s130 = sphi 0, %s130
      %s132 = sphi 0, %s130
      %s133 = sphi 0, %s132
      %s147 = sphi 0, %s133
    $region4: #{lstm_speaker_encoder_forward.7} parent=1 // loop_header_branch
      %15 = sbr.rel (%p13) target = $region8
    $region5: #{lstm_speaker_encoder_forward.7} parent=1 // loop_body
      %s17 = ssub.s32 %s12, 1
      %s18 = ssub.s32 %s12, 2
      %s19 = sadd.s32 %s12, 1
      %s20 = ssub.s32 %s12, %s19
      %p21 = scmp.eq.s32.totalorder %s20, 0
      %s23 = sadd.s32 %s22, 1
      %s24 = scalar_select %p21, %s22, %s23
      %p27 = pneg %p21
      %p28 = scmp.eq.s32.totalorder %s12, 1
      %p29 = por %p27, %p28
      %p30 = scmp.ne.s32.totalorder %s22, %s25
      %p31 = scmp.eq.s32.totalorder %s12, 0
      %p32 = por %p30, %p31
      %p33 = scmp.ne.s32.totalorder %s22, %s25
      %p34 = scmp.eq.s32.totalorder %s17, 1
      %p35 = por %p33, %p34
      %p36 = scmp.ne.s32.totalorder %s25, %s26
      %p37 = scmp.eq.s32.totalorder %s17, 0
      %p38 = por %p36, %p37
      %p39 = scmp.ne.s32.totalorder %s25, %s26
      %p40 = scmp.eq.s32.totalorder %s18, 1
      %p41 = por %p39, %p40
      %p43 = scmp.ne.s32.totalorder %s26, %s42
      %p44 = scmp.eq.s32.totalorder %s18, 0
      %p45 = por %p43, %p44
      %s47 = sadd.s32 %s46, 1
      %p50 = scmp.eq.s32.totalorder %s12, 1
      %p51 = scmp.ne.s32.totalorder %s46, %s48
      %p52 = scmp.eq.s32.totalorder %s12, 0
      %p53 = por %p51, %p52
      %p54 = scmp.ne.s32.totalorder %s46, %s48
      %p55 = scmp.eq.s32.totalorder %s17, 1
      %p56 = por %p54, %p55
      %p57 = scmp.ne.s32.totalorder %s48, %s49
      %p58 = scmp.eq.s32.totalorder %s17, 0
      %p59 = por %p57, %p58
      %p60 = scmp.ne.s32.totalorder %s48, %s49
      %p61 = scmp.eq.s32.totalorder %s18, 1
      %p62 = por %p60, %p61
      %p64 = scmp.ne.s32.totalorder %s49, %s63
      %p65 = scmp.eq.s32.totalorder %s18, 0
      %p66 = por %p64, %p65
      %s68 = sadd.s32 %s67, 1
      %p71 = scmp.eq.s32.totalorder %s12, 1
      %p72 = scmp.ne.s32.totalorder %s67, %s69
      %p73 = scmp.eq.s32.totalorder %s12, 0
      %p74 = por %p72, %p73
      %p75 = scmp.ne.s32.totalorder %s67, %s69
      %p76 = scmp.eq.s32.totalorder %s17, 1
      %p77 = por %p75, %p76
      %p78 = scmp.ne.s32.totalorder %s69, %s70
      %p79 = scmp.eq.s32.totalorder %s17, 0
      %p80 = por %p78, %p79
      %p81 = scmp.ne.s32.totalorder %s69, %s70
      %p82 = scmp.eq.s32.totalorder %s18, 1
      %p83 = por %p81, %p82
      %p85 = scmp.ne.s32.totalorder %s70, %s84
      %p86 = scmp.eq.s32.totalorder %s18, 0
      %p87 = por %p85, %p86
      %s89 = sadd.s32 %s88, 1
      %p92 = scmp.eq.s32.totalorder %s12, 1
      %p93 = scmp.ne.s32.totalorder %s88, %s90
      %p94 = scmp.eq.s32.totalorder %s12, 0
      %p95 = por %p93, %p94
      %p96 = scmp.ne.s32.totalorder %s88, %s90
      %p97 = scmp.eq.s32.totalorder %s17, 1
      %p98 = por %p96, %p97
      %p99 = scmp.ne.s32.totalorder %s90, %s91
      %p100 = scmp.eq.s32.totalorder %s17, 0
      %p101 = por %p99, %p100
      %p102 = scmp.ne.s32.totalorder %s90, %s91
      %p103 = scmp.eq.s32.totalorder %s18, 1
      %p104 = por %p102, %p103
      %p106 = scmp.ne.s32.totalorder %s91, %s105
      %p107 = scmp.eq.s32.totalorder %s18, 0
      %p108 = por %p106, %p107
      %s110 = sadd.s32 %s109, 1
      %p113 = scmp.eq.s32.totalorder %s12, 1
      %p114 = scmp.ne.s32.totalorder %s109, %s111
      %p115 = scmp.eq.s32.totalorder %s12, 0
      %p116 = por %p114, %p115
      %p117 = scmp.ne.s32.totalorder %s109, %s111
      %p118 = scmp.eq.s32.totalorder %s17, 1
      %p119 = por %p117, %p118
      %p120 = scmp.ne.s32.totalorder %s111, %s112
      %p121 = scmp.eq.s32.totalorder %s17, 0
      %p122 = por %p120, %p121
      %p123 = scmp.ne.s32.totalorder %s111, %s112
      %p124 = scmp.eq.s32.totalorder %s18, 1
      %p125 = por %p123, %p124
      %p127 = scmp.ne.s32.totalorder %s112, %s126
      %p128 = scmp.eq.s32.totalorder %s18, 0
      %p129 = por %p127, %p128
      %s131 = sadd.s32 %s130, 1
      %p134 = scmp.eq.s32.totalorder %s12, 1
      %p135 = scmp.ne.s32.totalorder %s130, %s132
      %p136 = scmp.eq.s32.totalorder %s12, 0
      %p137 = por %p135, %p136
      %p138 = scmp.ne.s32.totalorder %s130, %s132
      %p139 = scmp.eq.s32.totalorder %s17, 1
      %p140 = por %p138, %p139
      %p141 = scmp.ne.s32.totalorder %s132, %s133
      %p142 = scmp.eq.s32.totalorder %s17, 0
      %p143 = por %p141, %p142
      %p144 = scmp.ne.s32.totalorder %s132, %s133
      %p145 = scmp.eq.s32.totalorder %s18, 1
      %p146 = por %p144, %p145
      %p148 = scmp.ne.s32.totalorder %s133, %s147
      %p149 = scmp.eq.s32.totalorder %s18, 0
      %p150 = por %p148, %p149
      %p151 = scmp.le.s32.totalorder 1, %s12
      %p152 = scmp.lt.s32.totalorder %s12, 3
      %p153 = pnand %p151, %p152
      %p154 = pneg %p153
      // Predicated region
      $region9: #{lstm_speaker_encoder_forward.7} parent=5 // pred_check
        _
      $region10: #{lstm_speaker_encoder_forward.7} parent=5 // pred_check_branch
        %156 = sbr.rel (%p153) target = $region12
      $region11: #{lstm_speaker_encoder_forward.7} parent=5 // pred_region
        %s157 = ssub.s32 %s12, 1
        // Predicated region
        $region13: #{lstm_speaker_encoder_forward.7} parent=11 // pred_check
          %p158 = pneg %p59
        $region14: #{lstm_speaker_encoder_forward.7} parent=11 // pred_check_branch
          %160 = sbr.rel (%p158) target = $region16
        $region15: #{lstm_speaker_encoder_forward.7} parent=11 // pred_region
          _
        $region16: #{lstm_speaker_encoder_forward.7} parent=11 // pred_fallthru
          _
        // Predicated region
        $region17: #{lstm_speaker_encoder_forward.7} parent=11 // pred_check
          %p161 = pneg %p80
        $region18: #{lstm_speaker_encoder_forward.7} parent=11 // pred_check_branch
          %163 = sbr.rel (%p161) target = $region20
        $region19: #{lstm_speaker_encoder_forward.7} parent=11 // pred_region
          _
        $region20: #{lstm_speaker_encoder_forward.7} parent=11 // pred_fallthru
          _
        // Predicated region
        $region21: #{lstm_speaker_encoder_forward.7} parent=11 // pred_check
          %p164 = pneg %p101
        $region22: #{lstm_speaker_encoder_forward.7} parent=11 // pred_check_branch
          %166 = sbr.rel (%p164) target = $region24
        $region23: #{lstm_speaker_encoder_forward.7} parent=11 // pred_region
          _
        $region24: #{lstm_speaker_encoder_forward.7} parent=11 // pred_fallthru
          _
        // Predicated region
        $region25: #{lstm_speaker_encoder_forward.7} parent=11 // pred_check
          %p167 = pneg %p122
        $region26: #{lstm_speaker_encoder_forward.7} parent=11 // pred_check_branch
          %169 = sbr.rel (%p167) target = $region28
        $region27: #{lstm_speaker_encoder_forward.7} parent=11 // pred_region
          _
        $region28: #{lstm_speaker_encoder_forward.7} parent=11 // pred_fallthru
          _
      $region12: #{lstm_speaker_encoder_forward.7} parent=5 // pred_fallthru
        _
      %p170 = scmp.lt.s32.totalorder %s12, 2
      // Predicated region
      $region29: #{lstm_speaker_encoder_forward.7} parent=5 // pred_check
        %p171 = pneg %p170
      $region30: #{lstm_speaker_encoder_forward.7} parent=5 // pred_check_branch
        %173 = sbr.rel (%p171) target = $region32
      $region31: #{lstm_speaker_encoder_forward.7} parent=5 // pred_region
        // Predicated region
        $region33: #{lstm_speaker_encoder_forward.7} parent=31 // pred_check
          %p174 = pneg %p32
        $region34: #{lstm_speaker_encoder_forward.7} parent=31 // pred_check_branch
          %176 = sbr.rel (%p174) target = $region36
        $region35: #{lstm_speaker_encoder_forward.7} parent=31 // pred_region
          %s177 = smul.u32 8, %s12
          %p178 = scmp.lt.s32.totalorder %s177, 15
          %s179 = scalar_select %p178, %s177, 15
          %s180 = scalar_lea.vmem %s0, %s179
          %s181 = smul.u32 8, %s12
        $region36: #{lstm_speaker_encoder_forward.7} parent=31 // pred_fallthru
          _
      $region32: #{lstm_speaker_encoder_forward.7} parent=5 // pred_fallthru
        _
      %p182 = scmp.le.s32.totalorder 1, %s12
      %p183 = scmp.lt.s32.totalorder %s12, 3
      %p184 = pnand %p182, %p183
      %p185 = pneg %p184
      // Predicated region
      $region37: #{lstm_speaker_encoder_forward.7} parent=5 // pred_check
        _
      $region38: #{lstm_speaker_encoder_forward.7} parent=5 // pred_check_branch
        %187 = sbr.rel (%p184) target = $region40
      $region39: #{lstm_speaker_encoder_forward.7} parent=5 // pred_region
        %s188 = ssub.s32 %s12, 1
        %s189 = smul.u32 8, %s17
        %p190 = scmp.lt.s32.totalorder %s189, 15
        %s191 = scalar_select %p190, %s189, 15
        %s192 = scalar_lea.vmem %s0, %s191
        %p193 = pneg %p38
        %p194 = pneg %p35
        %p195 = pneg %p59
        %p196 = pneg %p56
        %p197 = pneg %p80
        %p198 = pneg %p77
        %p199 = pneg %p101
        %p200 = pneg %p98
        %p201 = pneg %p122
        %p202 = pneg %p119
        %p203 = pneg %p143
        %p204 = pneg %p140
        %s205 = smul.u32 8, %s17
        %p206 = scmp.lt.s32.totalorder %s205, 15
        %s207 = scalar_select %p206, %s205, 15
        %s208 = scalar_lea.vmem %s0, %s207
        %s209 = smul.u32 8, %s17
        %p211 = scmp.eq.s32.totalorder %s17, 0
        // Predicated region
        $region41: #{lstm_speaker_encoder_forward.7} parent=39 // pred_check
          %p212 = pneg %p211
        $region42: #{lstm_speaker_encoder_forward.7} parent=39 // pred_check_branch
          %214 = sbr.rel (%p212) target = $region44
        $region43: #{lstm_speaker_encoder_forward.7} parent=39 // pred_region
          %vm215 = vcmask 254976
          %216 = vst.msk [vmem:[#allocation2] sm:$0x3] %vm215, 0.0
          %217 = vst.msk [vmem:[#allocation3] sm:$0x3] %vm215, 0.0
        $region44: #{lstm_speaker_encoder_forward.7} parent=39 // pred_fallthru
          _
        %v218 = vld [vmem:[%s208] sm:$0x1]
        %v219 = vld [vmem:[%s208 + $0x1] sm:$0x1]
        %v220 = vld [vmem:[%s208 + $0x2] sm:$0x1]
        %v221 = vld [vmem:[%s208 + $0x3] sm:$0x1]
        %v222 = vld [vmem:[%s208 + $0x4] sm:$0x1]
        %v223 = vld [vmem:[%s208 + $0x5] sm:$0x1]
        %v224 = vld [vmem:[%s208 + $0x6] sm:$0x1]
        %v225 = vld [vmem:[%s208 + $0x7] sm:$0x1]
        %v226 = vld [vmem:[%s1] sm:$0xf]
        %v227 = vld [vmem:[%s1 + $0x4] sm:$0xf]
        %v228 = vld [vmem:[%s3] sm:$0x1]
        %v230 = vlaneseq
        %v231 = vshrl.u32 %v230, 7
        %v232 = vsub.s32 0, %v231
        %v233 = vrot.slane %v228, %v232
        %v243 = vcombine.low %v218, %v219
        %v244 = vcombine.low %v220, %v221
        %v245 = vcombine.low %v222, %v223
        %v246 = vcombine.low %v224, %v225
        %v248 = vunpack.c.l.s4 1966171168
        %v249 = vunpack.c.0.s8 %v248
        %v250 = vlaneseq
        %v251 = vshrl.u32 %v250, 7
        %v252 = vsub.s32 %v249, %v251
        %v253 = vrot.slane %v243, %v252
        %v255 = vunpack.c.l.s4 1966171168
        %v256 = vunpack.c.0.s8 %v255
        %v257 = vlaneseq
        %v258 = vshrl.u32 %v257, 7
        %v259 = vsub.s32 %v256, %v258
        %v260 = vrot.slane %v244, %v259
        %v262 = vunpack.c.l.s4 1966171168
        %v263 = vunpack.c.0.s8 %v262
        %v264 = vlaneseq
        %v265 = vshrl.u32 %v264, 7
        %v266 = vsub.s32 %v263, %v265
        %v267 = vrot.slane %v245, %v266
        %v269 = vunpack.c.l.s4 1966171168
        %v270 = vunpack.c.0.s8 %v269
        %v271 = vlaneseq
        %v272 = vshrl.u32 %v271, 7
        %v273 = vsub.s32 %v270, %v272
        %v274 = vrot.slane %v246, %v273
        %v275 = vcombine.low %v253, %v260
        %v276 = vcombine.low %v267, %v274
        %v278 = vunpack.c.l.s4 1966171168
        %v279 = vunpack.c.0.s8 %v278
        %v280 = vlaneseq
        %v281 = vshrl.u32 %v280, 7
        %v282 = vsub.s32 %v279, %v281
        %v283 = vrot.slane %v275, %v282
        %v285 = vunpack.c.l.s4 1966171168
        %v286 = vunpack.c.0.s8 %v285
        %v287 = vlaneseq
        %v288 = vshrl.u32 %v287, 7
        %v289 = vsub.s32 %v286, %v288
        %v290 = vrot.slane %v276, %v289
        %v291 = vcombine.low %v283, %v290
        %v294 = vunpack.c.l.b16 %v226
        %v295 = vunpack.c.l.b16 %v227
        %v296 = vpack.c.b16 %v295, %v294
        %vm298 = vcmask 130048
        %v300 = vsel %vm298, %v291, 0
        %302 = vmatprep.subr.bf16.mxu0 0
        %303 = vmatpush1.bf16.msra.mxu0 %v296
        %304 = vmatprep.subr.bf16.mxu0 0
        %305 = vmatpush1.bf16.msra.mxu0 0
        %306 = vmatprep.subr.bf16.mxu0 0
        %307 = vmatpush1.bf16.msra.mxu0 0
        %308 = vmatprep.subr.bf16.mxu0 0
        %309 = vmatpush1.bf16.msra.mxu0 0
        %310 = vmatprep.subr.bf16.mxu0 0
        %311 = vmatpush1.bf16.msra.mxu0 0
        %312 = vmatprep.subr.bf16.mxu0 0
        %313 = vmatpush1.bf16.msra.mxu0 0
        %314 = vmatprep.subr.bf16.mxu0 0
        %315 = vmatpush1.bf16.msra.mxu0 0
        %316 = vmatprep.subr.bf16.mxu0 0
        %317 = vmatpush1.bf16.msra.mxu0 0
        %318 = vmatprep.subr.bf16.mxu0 0
        %319 = vmatpush1.bf16.msra.mxu0 0
        %320 = vmatprep.subr.bf16.mxu0 0
        %321 = vmatpush1.bf16.msra.mxu0 0
        %322 = vmatprep.subr.bf16.mxu0 0
        %323 = vmatpush1.bf16.msra.mxu0 0
        %324 = vmatprep.subr.bf16.mxu0 0
        %325 = vmatpush1.bf16.msra.mxu0 0
        %326 = vmatprep.subr.bf16.mxu0 0
        %327 = vmatpush1.bf16.msra.mxu0 0
        %328 = vmatprep.subr.bf16.mxu0 0
        %329 = vmatpush1.bf16.msra.mxu0 0
        %330 = vmatprep.subr.bf16.mxu0 0
        %331 = vmatpush1.bf16.msra.mxu0 0
        %332 = vmatprep.subr.bf16.mxu0 0
        %333 = vmatpush1.bf16.msra.mxu0 0
        %334 = vmatprep.mubr.bf16.mxu0 0
        %335 = vmatmul.mubr.bf16.gmra.mrb[0].mxu0 %v300
        %v336 = vpop.f32.mrb[0].mxu0
        %v337 = vadd.f32 %v233, %v336
        %v338 = vpop.f32.mrb[0].mxu0
        %v339 = vpop.f32.mrb[0].mxu0
        %v340 = vadd.f32 %v233, %v339
        %v341 = vpop.f32.mrb[0].mxu0
        %342 = vdwg.mxu0
        %v345 = vcombine.high %v337, %v337
        %v347 = vunpack.c.l.s4 1983009808
        %v348 = vunpack.c.0.s8 %v347
        %v349 = vlaneseq
        %v350 = vshrl.u32 %v349, 7
        %v351 = vsub.s32 %v348, %v350
        %v352 = vrot.slane %v337, %v351
        %v354 = vunpack.c.l.s4 1983009808
        %v355 = vunpack.c.0.s8 %v354
        %v356 = vlaneseq
        %v357 = vshrl.u32 %v356, 7
        %v358 = vsub.s32 %v355, %v357
        %v359 = vrot.slane %v345, %v358
        %v360 = vcombine.high %v352, %v352
        %v361 = vcombine.high %v359, %v359
        %v362 = vcombine.high %v340, %v340
        %v364 = vunpack.c.l.s4 1983009808
        %v365 = vunpack.c.0.s8 %v364
        %v366 = vlaneseq
        %v367 = vshrl.u32 %v366, 7
        %v368 = vsub.s32 %v365, %v367
        %v369 = vrot.slane %v340, %v368
        %v371 = vunpack.c.l.s4 1983009808
        %v372 = vunpack.c.0.s8 %v371
        %v373 = vlaneseq
        %v374 = vshrl.u32 %v373, 7
        %v375 = vsub.s32 %v372, %v374
        %v376 = vrot.slane %v362, %v375
        %v377 = vcombine.high %v369, %v369
        %v378 = vcombine.high %v376, %v376
        %387 = vst [vmem:[#allocation4] sm:$0x3] %v352
        %388 = vst [vmem:[#allocation4 + $0x2] sm:$0x3] %v360
        %389 = vst [vmem:[#allocation4 + $0x4] sm:$0x3] %v359
        %390 = vst [vmem:[#allocation4 + $0x6] sm:$0x3] %v361
        %391 = vst [vmem:[#allocation4 + $0x8] sm:$0x3] %v369
        %392 = vst [vmem:[#allocation4 + $0xa] sm:$0x3] %v377
        %393 = vst [vmem:[#allocation4 + $0xc] sm:$0x3] %v376
        %394 = vst [vmem:[#allocation4 + $0xe] sm:$0x3] %v378
        %v395 = vld [vmem:[%s2] sm:$0xf]
        %v396 = vld [vmem:[%s2 + $0x4] sm:$0xf]
        %v397 = vld [vmem:[%s2 + $0x8] sm:$0xf]
        %v398 = vld [vmem:[%s2 + $0xc] sm:$0xf]
        %v399 = vld [vmem:[#allocation2] sm:$0x3]
        %v400 = vld [vmem:[#allocation3] sm:$0x3]
        %v401 = vld [vmem:[#allocation4] sm:$0x3]
        %v402 = vpack.c.bf16 %v399, %v399
        %v407 = vunpack.c.l.b16 %v395
        %v408 = vunpack.c.l.b16 %v396
        %v409 = vunpack.c.l.b16 %v397
        %v410 = vunpack.c.l.b16 %v398
        %v411 = vpack.c.b16 %v408, %v407
        %v412 = vpack.c.b16 %v410, %v409
        %vm415 = vcmask 261120
        %v417 = vsel %vm415, %v402, 0
        %419 = vmatprep.subr.bf16.mxu0 0
        %420 = vmatpush1.bf16.msra.mxu0 %v411
        %421 = vmatprep.subr.bf16.mxu0 0
        %422 = vmatpush1.bf16.msra.mxu0 %v412
        %423 = vmatprep.subr.bf16.mxu0 0
        %424 = vmatpush1.bf16.msra.mxu0 0
        %425 = vmatprep.subr.bf16.mxu0 0
        %426 = vmatpush1.bf16.msra.mxu0 0
        %427 = vmatprep.subr.bf16.mxu0 0
        %428 = vmatpush1.bf16.msra.mxu0 0
        %429 = vmatprep.subr.bf16.mxu0 0
        %430 = vmatpush1.bf16.msra.mxu0 0
        %431 = vmatprep.subr.bf16.mxu0 0
        %432 = vmatpush1.bf16.msra.mxu0 0
        %433 = vmatprep.subr.bf16.mxu0 0
        %434 = vmatpush1.bf16.msra.mxu0 0
        %435 = vmatprep.subr.bf16.mxu0 0
        %436 = vmatpush1.bf16.msra.mxu0 0
        %437 = vmatprep.subr.bf16.mxu0 0
        %438 = vmatpush1.bf16.msra.mxu0 0
        %439 = vmatprep.subr.bf16.mxu0 0
        %440 = vmatpush1.bf16.msra.mxu0 0
        %441 = vmatprep.subr.bf16.mxu0 0
        %442 = vmatpush1.bf16.msra.mxu0 0
        %443 = vmatprep.subr.bf16.mxu0 0
        %444 = vmatpush1.bf16.msra.mxu0 0
        %445 = vmatprep.subr.bf16.mxu0 0
        %446 = vmatpush1.bf16.msra.mxu0 0
        %447 = vmatprep.subr.bf16.mxu0 0
        %448 = vmatpush1.bf16.msra.mxu0 0
        %449 = vmatprep.subr.bf16.mxu0 0
        %450 = vmatpush1.bf16.msra.mxu0 0
        %451 = vmatprep.mubr.bf16.mxu0 0
        %452 = vmatmul.mubr.bf16.gmra.mrb[0].mxu0 %v417
        %v453 = vpop.f32.mrb[0].mxu0
        %v454 = vadd.f32 0.0, %v453
        %v455 = vpop.f32.mrb[0].mxu0
        %v456 = vpop.f32.mrb[0].mxu0
        %v457 = vpop.f32.mrb[0].mxu0
        %458 = vdwg.mxu0
        %v459 = vadd.f32 %v401, %v454
        %v460 = vxor.u32 %v459, 2147483648
        %v461 = vmul.f32 %v460, 1.442695
        %v462 = vpow.pop %v461
        %v463 = vadd.f32 %v462, 1.0
        %v464 = vrcp.pop %v463
        %v465 = vmul.f32 1.0, %v464
        %v466 = vtanh.pop %v459
        %468 = vrot.lane.b32.xlu0 %v400, 32
        %v469 = vpop.permute.xlu0 %468
        %v471 = vmul.f32 %v465, %v469
        %473 = vrot.lane.b32.xlu0 %v466, 64
        %v474 = vpop.permute.xlu0 %473
        %v476 = vmul.f32 %v465, %v474
        %478 = vrot.lane.b32.xlu0 %v476, 32
        %v479 = vpop.permute.xlu0 %478
        %v481 = vadd.f32 %v471, %v479
        %v482 = vtanh.pop %v481
        %484 = vrot.lane.b32.xlu0 %v482, 64
        %v485 = vpop.permute.xlu0 %484
        %v487 = vmul.f32 %v465, %v485
        %489 = vrot.lane.b32.xlu0 %v487, 32
        %v490 = vpop.permute.xlu0 %489
        %vm492 = vcmask 254976
        %493 = vst.msk [vmem:[#allocation2] sm:$0x3] %vm492, %v490
        %495 = vrot.lane.b32.xlu0 %v481, 96
        %v496 = vpop.permute.xlu0 %495
        %498 = vst.msk [vmem:[#allocation3] sm:$0x3] %vm492, %v496
        %v499 = vld [vmem:[#allocation2] sm:$0x3]
        %v500 = vld [vmem:[#allocation3] sm:$0x3]
        %s501 = scalar_lea.vmem [#allocation4], 2
        %v502 = vld [vmem:[%s501] sm:$0x3]
        %v503 = vpack.c.bf16 %v499, %v499
        %v505 = vsel %vm415, %v503, 0
        %507 = vmatprep.subr.bf16.mxu0 0
        %508 = vmatpush1.bf16.msra.mxu0 %v411
        %509 = vmatprep.subr.bf16.mxu0 0
        %510 = vmatpush1.bf16.msra.mxu0 %v412
        %511 = vmatprep.subr.bf16.mxu0 0
        %512 = vmatpush1.bf16.msra.mxu0 0
        %513 = vmatprep.subr.bf16.mxu0 0
        %514 = vmatpush1.bf16.msra.mxu0 0
        %515 = vmatprep.subr.bf16.mxu0 0
        %516 = vmatpush1.bf16.msra.mxu0 0
        %517 = vmatprep.subr.bf16.mxu0 0
        %518 = vmatpush1.bf16.msra.mxu0 0
        %519 = vmatprep.subr.bf16.mxu0 0
        %520 = vmatpush1.bf16.msra.mxu0 0
        %521 = vmatprep.subr.bf16.mxu0 0
        %522 = vmatpush1.bf16.msra.mxu0 0
        %523 = vmatprep.subr.bf16.mxu0 0
        %524 = vmatpush1.bf16.msra.mxu0 0
        %525 = vmatprep.subr.bf16.mxu0 0
        %526 = vmatpush1.bf16.msra.mxu0 0
        %527 = vmatprep.subr.bf16.mxu0 0
        %528 = vmatpush1.bf16.msra.mxu0 0
        %529 = vmatprep.subr.bf16.mxu0 0
        %530 = vmatpush1.bf16.msra.mxu0 0
        %531 = vmatprep.subr.bf16.mxu0 0
        %532 = vmatpush1.bf16.msra.mxu0 0
        %533 = vmatprep.subr.bf16.mxu0 0
        %534 = vmatpush1.bf16.msra.mxu0 0
        %535 = vmatprep.subr.bf16.mxu0 0
        %536 = vmatpush1.bf16.msra.mxu0 0
        %537 = vmatprep.subr.bf16.mxu0 0
        %538 = vmatpush1.bf16.msra.mxu0 0
        %539 = vmatprep.mubr.bf16.mxu0 0
        %540 = vmatmul.mubr.bf16.gmra.mrb[0].mxu0 %v505
        %v541 = vpop.f32.mrb[0].mxu0
        %v542 = vadd.f32 0.0, %v541
        %v543 = vpop.f32.mrb[0].mxu0
        %v544 = vpop.f32.mrb[0].mxu0
        %v545 = vpop.f32.mrb[0].mxu0
        %546 = vdwg.mxu0
        %v547 = vadd.f32 %v502, %v542
        %v548 = vxor.u32 %v547, 2147483648
        %v549 = vmul.f32 %v548, 1.442695
        %v550 = vpow.pop %v549
        %v551 = vadd.f32 %v550, 1.0
        %v552 = vrcp.pop %v551
        %v553 = vmul.f32 1.0, %v552
        %v554 = vtanh.pop %v547
        %556 = vrot.lane.b32.xlu0 %v500, 32
        %v557 = vpop.permute.xlu0 %556
        %v559 = vmul.f32 %v553, %v557
        %561 = vrot.lane.b32.xlu0 %v554, 64
        %v562 = vpop.permute.xlu0 %561
        %v564 = vmul.f32 %v553, %v562
        %566 = vrot.lane.b32.xlu0 %v564, 32
        %v567 = vpop.permute.xlu0 %566
        %v569 = vadd.f32 %v559, %v567
        %v570 = vtanh.pop %v569
        %572 = vrot.lane.b32.xlu0 %v570, 64
        %v573 = vpop.permute.xlu0 %572
        %v575 = vmul.f32 %v553, %v573
        %577 = vrot.lane.b32.xlu0 %v575, 32
        %v578 = vpop.permute.xlu0 %577
        %580 = vst.msk [vmem:[#allocation2] sm:$0x3] %vm492, %v578
        %582 = vrot.lane.b32.xlu0 %v569, 96
        %v583 = vpop.permute.xlu0 %582
        %585 = vst.msk [vmem:[#allocation3] sm:$0x3] %vm492, %v583
        %v586 = vld [vmem:[#allocation2] sm:$0x3]
        %v587 = vld [vmem:[#allocation3] sm:$0x3]
        %s588 = scalar_lea.vmem [#allocation4], 4
        %v589 = vld [vmem:[%s588] sm:$0x3]
        %v590 = vpack.c.bf16 %v586, %v586
        %v592 = vsel %vm415, %v590, 0
        %594 = vmatprep.subr.bf16.mxu0 0
        %595 = vmatpush1.bf16.msra.mxu0 %v411
        %596 = vmatprep.subr.bf16.mxu0 0
        %597 = vmatpush1.bf16.msra.mxu0 %v412
        %598 = vmatprep.subr.bf16.mxu0 0
        %599 = vmatpush1.bf16.msra.mxu0 0
        %600 = vmatprep.subr.bf16.mxu0 0
        %601 = vmatpush1.bf16.msra.mxu0 0
        %602 = vmatprep.subr.bf16.mxu0 0
        %603 = vmatpush1.bf16.msra.mxu0 0
        %604 = vmatprep.subr.bf16.mxu0 0
        %605 = vmatpush1.bf16.msra.mxu0 0
        %606 = vmatprep.subr.bf16.mxu0 0
        %607 = vmatpush1.bf16.msra.mxu0 0
        %608 = vmatprep.subr.bf16.mxu0 0
        %609 = vmatpush1.bf16.msra.mxu0 0
        %610 = vmatprep.subr.bf16.mxu0 0
        %611 = vmatpush1.bf16.msra.mxu0 0
        %612 = vmatprep.subr.bf16.mxu0 0
        %613 = vmatpush1.bf16.msra.mxu0 0
        %614 = vmatprep.subr.bf16.mxu0 0
        %615 = vmatpush1.bf16.msra.mxu0 0
        %616 = vmatprep.subr.bf16.mxu0 0
        %617 = vmatpush1.bf16.msra.mxu0 0
        %618 = vmatprep.subr.bf16.mxu0 0
        %619 = vmatpush1.bf16.msra.mxu0 0
        %620 = vmatprep.subr.bf16.mxu0 0
        %621 = vmatpush1.bf16.msra.mxu0 0
        %622 = vmatprep.subr.bf16.mxu0 0
        %623 = vmatpush1.bf16.msra.mxu0 0
        %624 = vmatprep.subr.bf16.mxu0 0
        %625 = vmatpush1.bf16.msra.mxu0 0
        %626 = vmatprep.mubr.bf16.mxu0 0
        %627 = vmatmul.mubr.bf16.gmra.mrb[0].mxu0 %v592
        %v628 = vpop.f32.mrb[0].mxu0
        %v629 = vadd.f32 0.0, %v628
        %v630 = vpop.f32.mrb[0].mxu0
        %v631 = vpop.f32.mrb[0].mxu0
        %v632 = vpop.f32.mrb[0].mxu0
        %633 = vdwg.mxu0
        %v634 = vadd.f32 %v589, %v629
        %v635 = vxor.u32 %v634, 2147483648
        %v636 = vmul.f32 %v635, 1.442695
        %v637 = vpow.pop %v636
        %v638 = vadd.f32 %v637, 1.0
        %v639 = vrcp.pop %v638
        %v640 = vmul.f32 1.0, %v639
        %v641 = vtanh.pop %v634
        %643 = vrot.lane.b32.xlu0 %v587, 32
        %v644 = vpop.permute.xlu0 %643
        %v646 = vmul.f32 %v640, %v644
        %648 = vrot.lane.b32.xlu0 %v641, 64
        %v649 = vpop.permute.xlu0 %648
        %v651 = vmul.f32 %v640, %v649
        %653 = vrot.lane.b32.xlu0 %v651, 32
        %v654 = vpop.permute.xlu0 %653
        %v656 = vadd.f32 %v646, %v654
        %v657 = vtanh.pop %v656
        %659 = vrot.lane.b32.xlu0 %v657, 64
        %v660 = vpop.permute.xlu0 %659
        %v662 = vmul.f32 %v640, %v660
        %664 = vrot.lane.b32.xlu0 %v662, 32
        %v665 = vpop.permute.xlu0 %664
        %667 = vst.msk [vmem:[#allocation2] sm:$0x3] %vm492, %v665
        %669 = vrot.lane.b32.xlu0 %v656, 96
        %v670 = vpop.permute.xlu0 %669
        %672 = vst.msk [vmem:[#allocation3] sm:$0x3] %vm492, %v670
        %v673 = vld [vmem:[#allocation2] sm:$0x3]
        %v674 = vld [vmem:[#allocation3] sm:$0x3]
        %s675 = scalar_lea.vmem [#allocation4], 6
        %v676 = vld [vmem:[%s675] sm:$0x3]
        %v677 = vpack.c.bf16 %v673, %v673
        %v679 = vsel %vm415, %v677, 0
        %681 = vmatprep.subr.bf16.mxu0 0
        %682 = vmatpush1.bf16.msra.mxu0 %v411
        %683 = vmatprep.subr.bf16.mxu0 0
        %684 = vmatpush1.bf16.msra.mxu0 %v412
        %685 = vmatprep.subr.bf16.mxu0 0
        %686 = vmatpush1.bf16.msra.mxu0 0
        %687 = vmatprep.subr.bf16.mxu0 0
        %688 = vmatpush1.bf16.msra.mxu0 0
        %689 = vmatprep.subr.bf16.mxu0 0
        %690 = vmatpush1.bf16.msra.mxu0 0
        %691 = vmatprep.subr.bf16.mxu0 0
        %692 = vmatpush1.bf16.msra.mxu0 0
        %693 = vmatprep.subr.bf16.mxu0 0
        %694 = vmatpush1.bf16.msra.mxu0 0
        %695 = vmatprep.subr.bf16.mxu0 0
        %696 = vmatpush1.bf16.msra.mxu0 0
        %697 = vmatprep.subr.bf16.mxu0 0
        %698 = vmatpush1.bf16.msra.mxu0 0
        %699 = vmatprep.subr.bf16.mxu0 0
        %700 = vmatpush1.bf16.msra.mxu0 0
        %701 = vmatprep.subr.bf16.mxu0 0
        %702 = vmatpush1.bf16.msra.mxu0 0
        %703 = vmatprep.subr.bf16.mxu0 0
        %704 = vmatpush1.bf16.msra.mxu0 0
        %705 = vmatprep.subr.bf16.mxu0 0
        %706 = vmatpush1.bf16.msra.mxu0 0
        %707 = vmatprep.subr.bf16.mxu0 0
        %708 = vmatpush1.bf16.msra.mxu0 0
        %709 = vmatprep.subr.bf16.mxu0 0
        %710 = vmatpush1.bf16.msra.mxu0 0
        %711 = vmatprep.subr.bf16.mxu0 0
        %712 = vmatpush1.bf16.msra.mxu0 0
        %713 = vmatprep.mubr.bf16.mxu0 0
        %714 = vmatmul.mubr.bf16.gmra.mrb[0].mxu0 %v679
        %v715 = vpop.f32.mrb[0].mxu0
        %v716 = vadd.f32 0.0, %v715
        %v717 = vpop.f32.mrb[0].mxu0
        %v718 = vpop.f32.mrb[0].mxu0
        %v719 = vpop.f32.mrb[0].mxu0
        %720 = vdwg.mxu0
        %v721 = vadd.f32 %v676, %v716
        %v722 = vxor.u32 %v721, 2147483648
        %v723 = vmul.f32 %v722, 1.442695
        %v724 = vpow.pop %v723
        %v725 = vadd.f32 %v724, 1.0
        %v726 = vrcp.pop %v725
        %v727 = vmul.f32 1.0, %v726
        %v728 = vtanh.pop %v721
        %730 = vrot.lane.b32.xlu0 %v674, 32
        %v731 = vpop.permute.xlu0 %730
        %v733 = vmul.f32 %v727, %v731
        %735 = vrot.lane.b32.xlu0 %v728, 64
        %v736 = vpop.permute.xlu0 %735
        %v738 = vmul.f32 %v727, %v736
        %740 = vrot.lane.b32.xlu0 %v738, 32
        %v741 = vpop.permute.xlu0 %740
        %v743 = vadd.f32 %v733, %v741
        %v744 = vtanh.pop %v743
        %746 = vrot.lane.b32.xlu0 %v744, 64
        %v747 = vpop.permute.xlu0 %746
        %v749 = vmul.f32 %v727, %v747
        %751 = vrot.lane.b32.xlu0 %v749, 32
        %v752 = vpop.permute.xlu0 %751
        %754 = vst.msk [vmem:[#allocation2] sm:$0x3] %vm492, %v752
        %756 = vrot.lane.b32.xlu0 %v743, 96
        %v757 = vpop.permute.xlu0 %756
        %759 = vst.msk [vmem:[#allocation3] sm:$0x3] %vm492, %v757
        %v760 = vld [vmem:[#allocation2] sm:$0x3]
        %v761 = vld [vmem:[#allocation3] sm:$0x3]
        %s762 = scalar_lea.vmem [#allocation4], 8
        %v763 = vld [vmem:[%s762] sm:$0x3]
        %v764 = vpack.c.bf16 %v760, %v760
        %v766 = vsel %vm415, %v764, 0
        %768 = vmatprep.subr.bf16.mxu0 0
        %769 = vmatpush1.bf16.msra.mxu0 %v411
        %770 = vmatprep.subr.bf16.mxu0 0
        %771 = vmatpush1.bf16.msra.mxu0 %v412
        %772 = vmatprep.subr.bf16.mxu0 0
        %773 = vmatpush1.bf16.msra.mxu0 0
        %774 = vmatprep.subr.bf16.mxu0 0
        %775 = vmatpush1.bf16.msra.mxu0 0
        %776 = vmatprep.subr.bf16.mxu0 0
        %777 = vmatpush1.bf16.msra.mxu0 0
        %778 = vmatprep.subr.bf16.mxu0 0
        %779 = vmatpush1.bf16.msra.mxu0 0
        %780 = vmatprep.subr.bf16.mxu0 0
        %781 = vmatpush1.bf16.msra.mxu0 0
        %782 = vmatprep.subr.bf16.mxu0 0
        %783 = vmatpush1.bf16.msra.mxu0 0
        %784 = vmatprep.subr.bf16.mxu0 0
        %785 = vmatpush1.bf16.msra.mxu0 0
        %786 = vmatprep.subr.bf16.mxu0 0
        %787 = vmatpush1.bf16.msra.mxu0 0
        %788 = vmatprep.subr.bf16.mxu0 0
        %789 = vmatpush1.bf16.msra.mxu0 0
        %790 = vmatprep.subr.bf16.mxu0 0
        %791 = vmatpush1.bf16.msra.mxu0 0
        %792 = vmatprep.subr.bf16.mxu0 0
        %793 = vmatpush1.bf16.msra.mxu0 0
        %794 = vmatprep.subr.bf16.mxu0 0
        %795 = vmatpush1.bf16.msra.mxu0 0
        %796 = vmatprep.subr.bf16.mxu0 0
        %797 = vmatpush1.bf16.msra.mxu0 0
        %798 = vmatprep.subr.bf16.mxu0 0
        %799 = vmatpush1.bf16.msra.mxu0 0
        %800 = vmatprep.mubr.bf16.mxu0 0
        %801 = vmatmul.mubr.bf16.gmra.mrb[0].mxu0 %v766
        %v802 = vpop.f32.mrb[0].mxu0
        %v803 = vadd.f32 0.0, %v802
        %v804 = vpop.f32.mrb[0].mxu0
        %v805 = vpop.f32.mrb[0].mxu0
        %v806 = vpop.f32.mrb[0].mxu0
        %807 = vdwg.mxu0
        %v808 = vadd.f32 %v763, %v803
        %v809 = vxor.u32 %v808, 2147483648
        %v810 = vmul.f32 %v809, 1.442695
        %v811 = vpow.pop %v810
        %v812 = vadd.f32 %v811, 1.0
        %v813 = vrcp.pop %v812
        %v814 = vmul.f32 1.0, %v813
        %v815 = vtanh.pop %v808
        %817 = vrot.lane.b32.xlu0 %v761, 32
        %v818 = vpop.permute.xlu0 %817
        %v820 = vmul.f32 %v814, %v818
        %822 = vrot.lane.b32.xlu0 %v815, 64
        %v823 = vpop.permute.xlu0 %822
        %v825 = vmul.f32 %v814, %v823
        %827 = vrot.lane.b32.xlu0 %v825, 32
        %v828 = vpop.permute.xlu0 %827
        %v830 = vadd.f32 %v820, %v828
        %v831 = vtanh.pop %v830
        %833 = vrot.lane.b32.xlu0 %v831, 64
        %v834 = vpop.permute.xlu0 %833
        %v836 = vmul.f32 %v814, %v834
        %838 = vrot.lane.b32.xlu0 %v836, 32
        %v839 = vpop.permute.xlu0 %838
        %841 = vst.msk [vmem:[#allocation2] sm:$0x3] %vm492, %v839
        %843 = vrot.lane.b32.xlu0 %v830, 96
        %v844 = vpop.permute.xlu0 %843
        %846 = vst.msk [vmem:[#allocation3] sm:$0x3] %vm492, %v844
        %v847 = vld [vmem:[#allocation2] sm:$0x3]
        %v848 = vld [vmem:[#allocation3] sm:$0x3]
        %s849 = scalar_lea.vmem [#allocation4], 10
        %v850 = vld [vmem:[%s849] sm:$0x3]
        %v851 = vpack.c.bf16 %v847, %v847
        %v853 = vsel %vm415, %v851, 0
        %855 = vmatprep.subr.bf16.mxu0 0
        %856 = vmatpush1.bf16.msra.mxu0 %v411
        %857 = vmatprep.subr.bf16.mxu0 0
        %858 = vmatpush1.bf16.msra.mxu0 %v412
        %859 = vmatprep.subr.bf16.mxu0 0
        %860 = vmatpush1.bf16.msra.mxu0 0
        %861 = vmatprep.subr.bf16.mxu0 0
        %862 = vmatpush1.bf16.msra.mxu0 0
        %863 = vmatprep.subr.bf16.mxu0 0
        %864 = vmatpush1.bf16.msra.mxu0 0
        %865 = vmatprep.subr.bf16.mxu0 0
        %866 = vmatpush1.bf16.msra.mxu0 0
        %867 = vmatprep.subr.bf16.mxu0 0
        %868 = vmatpush1.bf16.msra.mxu0 0
        %869 = vmatprep.subr.bf16.mxu0 0
        %870 = vmatpush1.bf16.msra.mxu0 0
        %871 = vmatprep.subr.bf16.mxu0 0
        %872 = vmatpush1.bf16.msra.mxu0 0
        %873 = vmatprep.subr.bf16.mxu0 0
        %874 = vmatpush1.bf16.msra.mxu0 0
        %875 = vmatprep.subr.bf16.mxu0 0
        %876 = vmatpush1.bf16.msra.mxu0 0
        %877 = vmatprep.subr.bf16.mxu0 0
        %878 = vmatpush1.bf16.msra.mxu0 0
        %879 = vmatprep.subr.bf16.mxu0 0
        %880 = vmatpush1.bf16.msra.mxu0 0
        %881 = vmatprep.subr.bf16.mxu0 0
        %882 = vmatpush1.bf16.msra.mxu0 0
        %883 = vmatprep.subr.bf16.mxu0 0
        %884 = vmatpush1.bf16.msra.mxu0 0
        %885 = vmatprep.subr.bf16.mxu0 0
        %886 = vmatpush1.bf16.msra.mxu0 0
        %887 = vmatprep.mubr.bf16.mxu0 0
        %888 = vmatmul.mubr.bf16.gmra.mrb[0].mxu0 %v853
        %v889 = vpop.f32.mrb[0].mxu0
        %v890 = vadd.f32 0.0, %v889
        %v891 = vpop.f32.mrb[0].mxu0
        %v892 = vpop.f32.mrb[0].mxu0
        %v893 = vpop.f32.mrb[0].mxu0
        %894 = vdwg.mxu0
        %v895 = vadd.f32 %v850, %v890
        %v896 = vxor.u32 %v895, 2147483648
        %v897 = vmul.f32 %v896, 1.442695
        %v898 = vpow.pop %v897
        %v899 = vadd.f32 %v898, 1.0
        %v900 = vrcp.pop %v899
        %v901 = vmul.f32 1.0, %v900
        %v902 = vtanh.pop %v895
        %904 = vrot.lane.b32.xlu0 %v848, 32
        %v905 = vpop.permute.xlu0 %904
        %v907 = vmul.f32 %v901, %v905
        %909 = vrot.lane.b32.xlu0 %v902, 64
        %v910 = vpop.permute.xlu0 %909
        %v912 = vmul.f32 %v901, %v910
        %914 = vrot.lane.b32.xlu0 %v912, 32
        %v915 = vpop.permute.xlu0 %914
        %v917 = vadd.f32 %v907, %v915
        %v918 = vtanh.pop %v917
        %920 = vrot.lane.b32.xlu0 %v918, 64
        %v921 = vpop.permute.xlu0 %920
        %v923 = vmul.f32 %v901, %v921
        %925 = vrot.lane.b32.xlu0 %v923, 32
        %v926 = vpop.permute.xlu0 %925
        %928 = vst.msk [vmem:[#allocation2] sm:$0x3] %vm492, %v926
        %930 = vrot.lane.b32.xlu0 %v917, 96
        %v931 = vpop.permute.xlu0 %930
        %933 = vst.msk [vmem:[#allocation3] sm:$0x3] %vm492, %v931
        %v934 = vld [vmem:[#allocation2] sm:$0x3]
        %v935 = vld [vmem:[#allocation3] sm:$0x3]
        %s936 = scalar_lea.vmem [#allocation4], 12
        %v937 = vld [vmem:[%s936] sm:$0x3]
        %v938 = vpack.c.bf16 %v934, %v934
        %v940 = vsel %vm415, %v938, 0
        %942 = vmatprep.subr.bf16.mxu0 0
        %943 = vmatpush1.bf16.msra.mxu0 %v411
        %944 = vmatprep.subr.bf16.mxu0 0
        %945 = vmatpush1.bf16.msra.mxu0 %v412
        %946 = vmatprep.subr.bf16.mxu0 0
        %947 = vmatpush1.bf16.msra.mxu0 0
        %948 = vmatprep.subr.bf16.mxu0 0
        %949 = vmatpush1.bf16.msra.mxu0 0
        %950 = vmatprep.subr.bf16.mxu0 0
        %951 = vmatpush1.bf16.msra.mxu0 0
        %952 = vmatprep.subr.bf16.mxu0 0
        %953 = vmatpush1.bf16.msra.mxu0 0
        %954 = vmatprep.subr.bf16.mxu0 0
        %955 = vmatpush1.bf16.msra.mxu0 0
        %956 = vmatprep.subr.bf16.mxu0 0
        %957 = vmatpush1.bf16.msra.mxu0 0
        %958 = vmatprep.subr.bf16.mxu0 0
        %959 = vmatpush1.bf16.msra.mxu0 0
        %960 = vmatprep.subr.bf16.mxu0 0
        %961 = vmatpush1.bf16.msra.mxu0 0
        %962 = vmatprep.subr.bf16.mxu0 0
        %963 = vmatpush1.bf16.msra.mxu0 0
        %964 = vmatprep.subr.bf16.mxu0 0
        %965 = vmatpush1.bf16.msra.mxu0 0
        %966 = vmatprep.subr.bf16.mxu0 0
        %967 = vmatpush1.bf16.msra.mxu0 0
        %968 = vmatprep.subr.bf16.mxu0 0
        %969 = vmatpush1.bf16.msra.mxu0 0
        %970 = vmatprep.subr.bf16.mxu0 0
        %971 = vmatpush1.bf16.msra.mxu0 0
        %972 = vmatprep.subr.bf16.mxu0 0
        %973 = vmatpush1.bf16.msra.mxu0 0
        %974 = vmatprep.mubr.bf16.mxu0 0
        %975 = vmatmul.mubr.bf16.gmra.mrb[0].mxu0 %v940
        %v976 = vpop.f32.mrb[0].mxu0
        %v977 = vadd.f32 0.0, %v976
        %v978 = vpop.f32.mrb[0].mxu0
        %v979 = vpop.f32.mrb[0].mxu0
        %v980 = vpop.f32.mrb[0].mxu0
        %981 = vdwg.mxu0
        %v982 = vadd.f32 %v937, %v977
        %v983 = vxor.u32 %v982, 2147483648
        %v984 = vmul.f32 %v983, 1.442695
        %v985 = vpow.pop %v984
        %v986 = vadd.f32 %v985, 1.0
        %v987 = vrcp.pop %v986
        %v988 = vmul.f32 1.0, %v987
        %v989 = vtanh.pop %v982
        %991 = vrot.lane.b32.xlu0 %v935, 32
        %v992 = vpop.permute.xlu0 %991
        %v994 = vmul.f32 %v988, %v992
        %996 = vrot.lane.b32.xlu0 %v989, 64
        %v997 = vpop.permute.xlu0 %996
        %v999 = vmul.f32 %v988, %v997
        %1001 = vrot.lane.b32.xlu0 %v999, 32
        %v1002 = vpop.permute.xlu0 %1001
        %v1004 = vadd.f32 %v994, %v1002
        %v1005 = vtanh.pop %v1004
        %1007 = vrot.lane.b32.xlu0 %v1005, 64
        %v1008 = vpop.permute.xlu0 %1007
        %v1010 = vmul.f32 %v988, %v1008
        %1012 = vrot.lane.b32.xlu0 %v1010, 32
        %v1013 = vpop.permute.xlu0 %1012
        %1015 = vst.msk [vmem:[#allocation2] sm:$0x3] %vm492, %v1013
        %1017 = vrot.lane.b32.xlu0 %v1004, 96
        %v1018 = vpop.permute.xlu0 %1017
        %1020 = vst.msk [vmem:[#allocation3] sm:$0x3] %vm492, %v1018
        %v1021 = vld [vmem:[#allocation2] sm:$0x3]
        %v1022 = vld [vmem:[#allocation3] sm:$0x3]
        %s1023 = scalar_lea.vmem [#allocation4], 14
        %v1024 = vld [vmem:[%s1023] sm:$0x3]
        %v1025 = vpack.c.bf16 %v1021, %v1021
        %v1027 = vsel %vm415, %v1025, 0
        %1029 = vmatprep.subr.bf16.mxu0 0
        %1030 = vmatpush1.bf16.msra.mxu0 %v411
        %1031 = vmatprep.subr.bf16.mxu0 0
        %1032 = vmatpush1.bf16.msra.mxu0 %v412
        %1033 = vmatprep.subr.bf16.mxu0 0
        %1034 = vmatpush1.bf16.msra.mxu0 0
        %1035 = vmatprep.subr.bf16.mxu0 0
        %1036 = vmatpush1.bf16.msra.mxu0 0
        %1037 = vmatprep.subr.bf16.mxu0 0
        %1038 = vmatpush1.bf16.msra.mxu0 0
        %1039 = vmatprep.subr.bf16.mxu0 0
        %1040 = vmatpush1.bf16.msra.mxu0 0
        %1041 = vmatprep.subr.bf16.mxu0 0
        %1042 = vmatpush1.bf16.msra.mxu0 0
        %1043 = vmatprep.subr.bf16.mxu0 0
        %1044 = vmatpush1.bf16.msra.mxu0 0
        %1045 = vmatprep.subr.bf16.mxu0 0
        %1046 = vmatpush1.bf16.msra.mxu0 0
        %1047 = vmatprep.subr.bf16.mxu0 0
        %1048 = vmatpush1.bf16.msra.mxu0 0
        %1049 = vmatprep.subr.bf16.mxu0 0
        %1050 = vmatpush1.bf16.msra.mxu0 0
        %1051 = vmatprep.subr.bf16.mxu0 0
        %1052 = vmatpush1.bf16.msra.mxu0 0
        %1053 = vmatprep.subr.bf16.mxu0 0
        %1054 = vmatpush1.bf16.msra.mxu0 0
        %1055 = vmatprep.subr.bf16.mxu0 0
        %1056 = vmatpush1.bf16.msra.mxu0 0
        %1057 = vmatprep.subr.bf16.mxu0 0
        %1058 = vmatpush1.bf16.msra.mxu0 0
        %1059 = vmatprep.subr.bf16.mxu0 0
        %1060 = vmatpush1.bf16.msra.mxu0 0
        %1061 = vmatprep.mubr.bf16.mxu0 0
        %1062 = vmatmul.mubr.bf16.gmra.mrb[0].mxu0 %v1027
        %v1063 = vpop.f32.mrb[0].mxu0
        %v1064 = vadd.f32 0.0, %v1063
        %v1065 = vpop.f32.mrb[0].mxu0
        %v1066 = vpop.f32.mrb[0].mxu0
        %v1067 = vpop.f32.mrb[0].mxu0
        %1068 = vdwg.mxu0
        %v1069 = vadd.f32 %v1024, %v1064
        %v1070 = vxor.u32 %v1069, 2147483648
        %v1071 = vmul.f32 %v1070, 1.442695
        %v1072 = vpow.pop %v1071
        %v1073 = vadd.f32 %v1072, 1.0
        %v1074 = vrcp.pop %v1073
        %v1075 = vmul.f32 1.0, %v1074
        %v1076 = vtanh.pop %v1069
        %1078 = vrot.lane.b32.xlu0 %v1022, 32
        %v1079 = vpop.permute.xlu0 %1078
        %v1081 = vmul.f32 %v1075, %v1079
        %1083 = vrot.lane.b32.xlu0 %v1076, 64
        %v1084 = vpop.permute.xlu0 %1083
        %v1086 = vmul.f32 %v1075, %v1084
        %1088 = vrot.lane.b32.xlu0 %v1086, 32
        %v1089 = vpop.permute.xlu0 %1088
        %v1091 = vadd.f32 %v1081, %v1089
        %v1092 = vtanh.pop %v1091
        %1094 = vrot.lane.b32.xlu0 %v1092, 64
        %v1095 = vpop.permute.xlu0 %1094
        %v1097 = vmul.f32 %v1075, %v1095
        %1099 = vrot.lane.b32.xlu0 %v1097, 32
        %v1100 = vpop.permute.xlu0 %1099
        %1102 = vst.msk [vmem:[#allocation2] sm:$0x3] %vm492, %v1100
        %1104 = vrot.lane.b32.xlu0 %v1091, 96
        %v1105 = vpop.permute.xlu0 %1104
        %1107 = vst.msk [vmem:[#allocation3] sm:$0x3] %vm492, %v1105
        %p1108 = scmp.eq.s32.totalorder %s17, 1
        // Predicated region
        $region45: #{lstm_speaker_encoder_forward.7} parent=39 // pred_check
          %p1109 = pneg %p1108
        $region46: #{lstm_speaker_encoder_forward.7} parent=39 // pred_check_branch
          %1111 = sbr.rel (%p1109) target = $region48
        $region47: #{lstm_speaker_encoder_forward.7} parent=39 // pred_region
          %v1112 = vld [vmem:[#allocation2] sm:$0x3]
          %v1113 = vpack.c.bf16 %v1112, %v1112
          %v1114 = vld [vmem:[%s4] sm:$0xf]
          %v1115 = vld [vmem:[%s4 + $0x4] sm:$0xf]
          %v1116 = vld [vmem:[%s4 + $0x8] sm:$0xf]
          %v1117 = vld [vmem:[%s4 + $0xc] sm:$0xf]
          %v1122 = vunpack.c.l.b16 %v1114
          %v1123 = vunpack.c.l.b16 %v1115
          %v1124 = vunpack.c.l.b16 %v1116
          %v1125 = vunpack.c.l.b16 %v1117
          %v1126 = vpack.c.b16 %v1123, %v1122
          %v1127 = vpack.c.b16 %v1125, %v1124
          %v1131 = vsel %vm415, %v1113, 0
          %1133 = vmatprep.subr.bf16.mxu0 0
          %1134 = vmatpush1.bf16.msra.mxu0 %v1126
          %1135 = vmatprep.subr.bf16.mxu0 0
          %1136 = vmatpush1.bf16.msra.mxu0 %v1127
          %1137 = vmatprep.subr.bf16.mxu0 0
          %1138 = vmatpush1.bf16.msra.mxu0 0
          %1139 = vmatprep.subr.bf16.mxu0 0
          %1140 = vmatpush1.bf16.msra.mxu0 0
          %1141 = vmatprep.subr.bf16.mxu0 0
          %1142 = vmatpush1.bf16.msra.mxu0 0
          %1143 = vmatprep.subr.bf16.mxu0 0
          %1144 = vmatpush1.bf16.msra.mxu0 0
          %1145 = vmatprep.subr.bf16.mxu0 0
          %1146 = vmatpush1.bf16.msra.mxu0 0
          %1147 = vmatprep.subr.bf16.mxu0 0
          %1148 = vmatpush1.bf16.msra.mxu0 0
          %1149 = vmatprep.subr.bf16.mxu0 0
          %1150 = vmatpush1.bf16.msra.mxu0 0
          %1151 = vmatprep.subr.bf16.mxu0 0
          %1152 = vmatpush1.bf16.msra.mxu0 0
          %1153 = vmatprep.subr.bf16.mxu0 0
          %1154 = vmatpush1.bf16.msra.mxu0 0
          %1155 = vmatprep.subr.bf16.mxu0 0
          %1156 = vmatpush1.bf16.msra.mxu0 0
          %1157 = vmatprep.subr.bf16.mxu0 0
          %1158 = vmatpush1.bf16.msra.mxu0 0
          %1159 = vmatprep.subr.bf16.mxu0 0
          %1160 = vmatpush1.bf16.msra.mxu0 0
          %1161 = vmatprep.subr.bf16.mxu0 0
          %1162 = vmatpush1.bf16.msra.mxu0 0
          %1163 = vmatprep.subr.bf16.mxu0 0
          %1164 = vmatpush1.bf16.msra.mxu0 0
          %1165 = vmatprep.mubr.bf16.mxu0 0
          %1166 = vmatmul.mubr.bf16.gmra.mrb[0].mxu0 %v1131
          %v1167 = vpop.f32.mrb[0].mxu0
          %v1168 = vadd.f32 0.0, %v1167
          %v1169 = vpop.f32.mrb[0].mxu0
          %v1170 = vpop.f32.mrb[0].mxu0
          %v1171 = vpop.f32.mrb[0].mxu0
          %1172 = vdwg.mxu0
          %v1173 = vmul.f32 %v1168, %v1168
          %vm1174 = vcmask 123904
          %v1175 = vsel %vm1174, %v1173, 0.0
          %1176 = vadd.xlane.f32.xlu0 %v1175
          %v1177 = vpop.xlane.xlu0 %1176
          %v1178 = vmax.f32 %v1177, 1e-24
          %v1179 = vrsqrt.pop %v1178
          %v1180 = vmul.f32 %v1168, %v1179
          %1181 = vst.msk [vmem:[#allocation5] sm:$0x3] %vm1174, %v1180
        $region48: #{lstm_speaker_encoder_forward.7} parent=39 // pred_fallthru
          _
        // Predicated region
        $region49: #{lstm_speaker_encoder_forward.7} parent=39 // pred_check
          %p1182 = pneg %p140
        $region50: #{lstm_speaker_encoder_forward.7} parent=39 // pred_check_branch
          %1184 = sbr.rel (%p1182) target = $region52
        $region51: #{lstm_speaker_encoder_forward.7} parent=39 // pred_region
          %s1186 = ssub.s32 32, 32
          %1187 = vsyncadd [#allocation6], %s1186
          %s1189 = sshll.u32 [#allocation5], 4
          %s1190 = int_to_ptr.vmem [resolvable:$true] %s1189
          %1192 = dma.vmem_to_hbm [thread:$0]  %s1190, 32, %s5, [#allocation6]
        $region52: #{lstm_speaker_encoder_forward.7} parent=39 // pred_fallthru
          _
        // Predicated region
        $region53: #{lstm_speaker_encoder_forward.7} parent=39 // pred_check
          %p1193 = pneg %p140
        $region54: #{lstm_speaker_encoder_forward.7} parent=39 // pred_check_branch
          %1195 = sbr.rel (%p1193) target = $region56
        $region55: #{lstm_speaker_encoder_forward.7} parent=39 // pred_region
          %1196 = dma.done [#allocation6], 32
        $region56: #{lstm_speaker_encoder_forward.7} parent=39 // pred_fallthru
          _
      $region40: #{lstm_speaker_encoder_forward.7} parent=5 // pred_fallthru
        _
      %p1197 = scmp.le.s32.totalorder 2, %s12
      // Predicated region
      $region57: #{lstm_speaker_encoder_forward.7} parent=5 // pred_check
        %p1198 = pneg %p1197
      $region58: #{lstm_speaker_encoder_forward.7} parent=5 // pred_check_branch
        %1200 = sbr.rel (%p1198) target = $region60
      $region59: #{lstm_speaker_encoder_forward.7} parent=5 // pred_region
        %s1201 = ssub.s32 %s12, 2
      $region60: #{lstm_speaker_encoder_forward.7} parent=5 // pred_fallthru
        _
    $region6: #{lstm_speaker_encoder_forward.7} parent=1 // loop_footer
      %s16 = sadd.s32 1, %s12
    $region7: #{lstm_speaker_encoder_forward.7} parent=1 // loop_footer_branch
      %11 = sbr.rel target = $region3
    $region8: #{lstm_speaker_encoder_forward.7} parent=1 // loop_exit
      _
    %1202 = vsyncpa [#allocation6], 1
    %s1203 = scalar_lea.sflag [#allocation6], 1
    %1204 = vsyncpa %s1203, 1

</llo_original>
